<compile_context>
chip_gen: v7x
topology: tpu7x:2x2x1
jax: 0.10.0
libtpu: 0.0.40
codegen_flags: <defaults>
</compile_context>

<pallas_src>
import functools

import jax
import jax.numpy as jnp
from jax.experimental import pallas as pl
from jax.experimental.pallas import tpu as pltpu

# ----------------------- scaled configuration ------------------------------
B = 2
N_PTS = 64          # number of input points
D_FEAT = 32         # point-feature channels (analog of 640)
E_DIM = 24          # trailing dim of embedding_hidden_state19/29 (analog of 1000)
NUM_LABELS = 5

SA1 = dict(npoint=16, radius=0.2, nsample=8, mlp=(32, 64, 32))
SA2 = dict(npoint=8,  radius=0.4, nsample=8, mlp=(32, 64, 32))
SA3_MLP = (32, 64, 32)

BF16 = jnp.bfloat16
F32 = jnp.float32
VMEM = pltpu.MemorySpace.VMEM


# ----------------------- small helpers --------------------------------------
def _const_full_spec(a):
    """Whole-array VMEM block with a constant index_map (resident across grid)."""
    nd = a.ndim
    return pl.BlockSpec(a.shape, lambda i: (0,) * nd, memory_space=VMEM)


def _mm_flops(m, k, n):
    return 2 * int(m) * int(k) * int(n)


def _nbytes(*arrays):
    return int(sum(int(a.size) * a.dtype.itemsize for a in arrays))


# ----------------------- Pallas kernel 1: SA1 stage -------------------------
def _sa1_kernel(S, K, C3,
                gxyz_ref, gfeat_ref, embt_ref,
                w1a, w1b, b1, w2, b2, w3, b3,
                a1, m2, bfu,
                o_ref):
    """One batch element per grid step (grid=(B,), "parallel" -> v7x megacore).

    gxyz_ref : (S*K, 3)   f32  grouped, centroid-normalized xyz deltas
    gfeat_ref: (S*K, C3)  f32  grouped point features
    embt_ref : (E, C3)    bf16 per-batch transposed embedding_hidden_state19
    w*/b*    : conv1x1 weights with eval-BN folded in (bf16) / biases (1,C) f32
               (w1 is split into xyz rows w1a and feature rows w1b -> no concat/pad)
    a1/m2/bfu: sa1_linear1 composed with the halves of sa1_linear2
    o_ref    : (S, C3)    f32  l1_points row-block for this batch element
    """
    gx = gxyz_ref[...].astype(BF16)
    gf = gfeat_ref[...].astype(BF16)
    # conv1x1 + folded eval-BN + ReLU (x3).
    h = jnp.maximum(jnp.dot(gx, w1a[...], preferred_element_type=F32)
                    + jnp.dot(gf, w1b[...], preferred_element_type=F32) + b1[...], 0.0)
    h = jnp.maximum(jnp.dot(h.astype(BF16), w2[...], preferred_element_type=F32) + b2[...], 0.0)
    h = jnp.maximum(jnp.dot(h.astype(BF16), w3[...], preferred_element_type=F32) + b3[...], 0.0)
    # Per-group max over the K samples (K == 8 == f32 sublane granularity, so the
    # reshape is layout-preserving; see production note at top for K=32).
    feat = jnp.max(h.reshape(S, K, C3), axis=1)                       # (S, C3) f32
    # sa1_linear1 / concat-over-points / sa1_linear2, pre-composed at init.
    out = (jnp.dot(a1[...], feat.astype(BF16), preferred_element_type=F32)
           + jnp.dot(m2[...], embt_ref[...], preferred_element_type=F32)
           + bfu[...])                                                 # (S, C3)
    o_ref[...] = out


def sa1_stage(g_xyz, g_feat, emb, p):
    """g_xyz [B,S,K,3], g_feat [B,S,K,D], emb [B,C3,E]  ->  l1 [B,S,C3] f32."""
    b, s, k, _ = g_xyz.shape
    d = g_feat.shape[-1]
    e = emb.shape[2]
    c1 = p['w1b'].shape[1]
    c2 = p['w2'].shape[1]
    c3 = p['w3'].shape[1]

    gx = g_xyz.reshape(b * s * k, 3)
    gf = g_feat.reshape(b * s * k, d)
    # Layout plumbing only: transpose+cast fuse into one XLA op; this is the
    # storage layout the composed (linear1 o linear2-bottom) weight expects.
    embt = jnp.transpose(emb, (0, 2, 1)).astype(BF16).reshape(b * e, c3)

    weights = [p['w1a'], p['w1b'], p['b1'], p['w2'], p['b2'], p['w3'], p['b3'],
               p['a1'], p['m2'], p['bfu']]

    data_specs = [
        pl.BlockSpec((s * k, 3), lambda i: (i, 0), memory_space=VMEM),
        pl.BlockSpec((s * k, d), lambda i: (i, 0), memory_space=VMEM),
        pl.BlockSpec((e, c3), lambda i: (i, 0), memory_space=VMEM),
    ]
    weight_specs = [_const_full_spec(a) for a in weights]

    r = s * k
    flops = b * (_mm_flops(r, 3, c1) + _mm_flops(r, d, c1)
                 + _mm_flops(r, c1, c2) + _mm_flops(r, c2, c3)
                 + _mm_flops(s, s, c3) + _mm_flops(s, e, c3))
    bytes_accessed = _nbytes(gx, gf, embt, *weights) + b * s * c3 * 4

    out = pl.pallas_call(
        functools.partial(_sa1_kernel, s, k, c3),
        grid=(b,),
        in_specs=data_specs + weight_specs,
        out_specs=pl.BlockSpec((s, c3), lambda i: (i, 0), memory_space=VMEM),
        out_shape=jax.ShapeDtypeStruct((b * s, c3), jnp.float32),
        compiler_params=pltpu.CompilerParams(
            dimension_semantics=("parallel",),
            vmem_limit_bytes=16 * 1024 * 1024),
        cost_estimate=pl.CostEstimate(flops=flops, transcendentals=0,
                                      bytes_accessed=bytes_accessed),
    )(gx, gf, embt, *weights)
    return out.reshape(b, s, c3)


# ------------- Pallas kernel 2: SA2 + fusion linears + SA3 + head -----------
def _sa2_sa3_head_kernel(S2, K2, C3,
                         xyz2_ref, gxyz_ref, gfeat_ref, embt_ref,
                         s2w1a, s2w1b, s2b1, s2w2, s2b2, s2w3, s2b3,
                         a1, m2, bfu,
                         s3w1a, s3w1b, s3b1, s3w2, s3b2, s3w3, s3b3,
                         fw1, fb1, fw2, fb2, fw3, fb3,
                         o_ref):
    """Fully fused SA2 stage -> l2 (VMEM) -> SA3 group_all -> classifier head."""
    gx = gxyz_ref[...].astype(BF16)                                   # (S2*K2, 3)
    gf = gfeat_ref[...].astype(BF16)                                  # (S2*K2, C3)
    h = jnp.maximum(jnp.dot(gx, s2w1a[...], preferred_element_type=F32)
                    + jnp.dot(gf, s2w1b[...], preferred_element_type=F32) + s2b1[...], 0.0)
    h = jnp.maximum(jnp.dot(h.astype(BF16), s2w2[...], preferred_element_type=F32) + s2b2[...], 0.0)
    h = jnp.maximum(jnp.dot(h.astype(BF16), s2w3[...], preferred_element_type=F32) + s2b3[...], 0.0)
    feat2 = jnp.max(h.reshape(S2, K2, C3), axis=1)                    # (S2, C3)
    # sa2_linear1 / concat-over-points / sa2_linear2 (pre-composed) -> l2 stays in VMEM.
    l2 = (jnp.dot(a1[...], feat2.astype(BF16), preferred_element_type=F32)
          + jnp.dot(m2[...], embt_ref[...], preferred_element_type=F32)
          + bfu[...])                                                 # (S2, C3) f32
    # SA3 (group_all): concat(xyz2, l2) along channels is folded into the split
    # first-layer weight, so no in-kernel concat / channel pad is needed.
    x3 = xyz2_ref[...].astype(BF16)                                   # (S2, 3)
    g = jnp.maximum(jnp.dot(x3, s3w1a[...], preferred_element_type=F32)
                    + jnp.dot(l2.astype(BF16), s3w1b[...], preferred_element_type=F32)
                    + s3b1[...], 0.0)
    g = jnp.maximum(jnp.dot(g.astype(BF16), s3w2[...], preferred_element_type=F32) + s3b2[...], 0.0)
    g = jnp.maximum(jnp.dot(g.astype(BF16), s3w3[...], preferred_element_type=F32) + s3b3[...], 0.0)
    pooled = jnp.max(g, axis=0, keepdims=True)                        # (1, C3) global max pool
    # TODO(synk): Dropout is treated as eval-mode identity (no RNG mask).
    # M=1 row here -> fc matmuls are latency-bound by construction; accepted.
    z = jnp.maximum(jnp.dot(pooled.astype(BF16), fw1[...], preferred_element_type=F32) + fb1[...], 0.0)
    z = jnp.maximum(jnp.dot(z.astype(BF16), fw2[...], preferred_element_type=F32) + fb2[...], 0.0)
    logits = jnp.dot(z.astype(BF16), fw3[...], preferred_element_type=F32) + fb3[...]
    o_ref[0] = logits                                                 # (1, num_labels)


def sa2_sa3_head(xyz2, g_xyz, g_feat, emb, p_sa2, p_sa3, p_head):
    """xyz2 [B,S2,3], g_xyz [B,S2,K2,3], g_feat [B,S2,K2,C3], emb [B,C3,E]
       -> logits [B, num_labels] f32."""
    b, s2, k2, _ = g_xyz.shape
    d = g_feat.shape[-1]
    e = emb.shape[2]
    c1 = p_sa2['w1b'].shape[1]
    c2 = p_sa2['w2'].shape[1]
    c3 = p_sa2['w3'].shape[1]
    h1 = p_head['fw1'].shape[1]
    h2 = p_head['fw2'].shape[1]
    num_labels = p_head['fw3'].shape[1]

    xyz2f = xyz2.reshape(b * s2, 3)
    gx = g_xyz.reshape(b * s2 * k2, 3)
    gf = g_feat.reshape(b * s2 * k2, d)
    embt = jnp.transpose(emb, (0, 2, 1)).astype(BF16).reshape(b * e, c3)

    weights = [p_sa2['w1a'], p_sa2['w1b'], p_sa2['b1'], p_sa2['w2'], p_sa2['b2'],
               p_sa2['w3'], p_sa2['b3'],
               p_sa2['a1'], p_sa2['m2'], p_sa2['bfu'],
               p_sa3['w1a'], p_sa3['w1b'], p_sa3['b1'], p_sa3['w2'], p_sa3['b2'],
               p_sa3['w3'], p_sa3['b3'],
               p_head['fw1'], p_head['fb1'], p_head['fw2'], p_head['fb2'],
               p_head['fw3'], p_head['fb3']]

    data_specs = [
        pl.BlockSpec((s2, 3), lambda i: (i, 0), memory_space=VMEM),
        pl.BlockSpec((s2 * k2, 3), lambda i: (i, 0), memory_space=VMEM),
        pl.BlockSpec((s2 * k2, d), lambda i: (i, 0), memory_space=VMEM),
        pl.BlockSpec((e, c3), lambda i: (i, 0), memory_space=VMEM),
    ]
    weight_specs = [_const_full_spec(a) for a in weights]

    r2 = s2 * k2
    flops = b * (_mm_flops(r2, 3, c1) + _mm_flops(r2, d, c1)
                 + _mm_flops(r2, c1, c2) + _mm_flops(r2, c2, c3)
                 + _mm_flops(s2, s2, c3) + _mm_flops(s2, e, c3)
                 + _mm_flops(s2, 3, c1) + _mm_flops(s2, c3, c1)
                 + _mm_flops(s2, c1, c2) + _mm_flops(s2, c2, c3)
                 + _mm_flops(1, c3, h1) + _mm_flops(1, h1, h2)
                 + _mm_flops(1, h2, num_labels))
    bytes_accessed = _nbytes(xyz2f, gx, gf, embt, *weights) + b * num_labels * 4

    out = pl.pallas_call(
        functools.partial(_sa2_sa3_head_kernel, s2, k2, c3),
        grid=(b,),
        in_specs=data_specs + weight_specs,
        out_specs=pl.BlockSpec((1, 1, num_labels), lambda i: (i, 0, 0),
                               memory_space=VMEM),
        out_shape=jax.ShapeDtypeStruct((b, 1, num_labels), jnp.float32),
        compiler_params=pltpu.CompilerParams(
            dimension_semantics=("parallel",),
            vmem_limit_bytes=16 * 1024 * 1024),
        cost_estimate=pl.CostEstimate(flops=flops, transcendentals=0,
                                      bytes_accessed=bytes_accessed),
    )(xyz2f, gx, gf, embt, *weights)
    return out.reshape(b, num_labels)


# ----------------------- PointNet++ grouping (plain JAX glue) ---------------
def square_distance(src, dst):
    return jnp.sum((src[:, :, None, :] - dst[:, None, :, :]) ** 2, axis=-1)


def index_points(points, idx):
    return jax.vmap(lambda p, i: p[i])(points, idx)


def farthest_point_sample(xyz, npoint):
    # TODO(synk): torch uses a random start point; we start deterministically at 0.
    b, n, _ = xyz.shape

    def body(carry, _):
        distance, farthest = carry
        centroid = jax.vmap(lambda p, f: p[f])(xyz, farthest)[:, None, :]
        dist = jnp.sum((xyz - centroid) ** 2, axis=-1)
        distance = jnp.minimum(distance, dist)
        new_far = jnp.argmax(distance, axis=-1).astype(jnp.int32)
        return (distance, new_far), farthest

    init = (jnp.full((b, n), 1e10, jnp.float32), jnp.zeros((b,), jnp.int32))
    _, idxs = jax.lax.scan(body, init, None, length=npoint)
    return jnp.transpose(idxs, (1, 0))


def query_ball_point(radius, nsample, xyz, new_xyz):
    b, n, _ = xyz.shape
    s = new_xyz.shape[1]
    sqrdists = square_distance(new_xyz, xyz)
    group_idx = jnp.broadcast_to(jnp.arange(n, dtype=jnp.int32), (b, s, n))
    group_idx = jnp.where(sqrdists > radius ** 2, n, group_idx)
    group_idx = jnp.sort(group_idx, axis=-1)[:, :, :nsample]
    group_first = group_idx[:, :, :1]
    group_idx = jnp.where(group_idx == n, group_first, group_idx)
    return group_idx


def sample_and_group(npoint, radius, nsample, xyz, points):
    """Returns xyz/feature groups SEPARATELY (no channel concat materialized)."""
    fps_idx = farthest_point_sample(xyz, npoint)
    new_xyz = index_points(xyz, fps_idx)                              # [B, S, 3]
    idx = query_ball_point(radius, nsample, xyz, new_xyz)             # [B, S, K]
    grouped_xyz_norm = index_points(xyz, idx) - new_xyz[:, :, None, :]
    grouped_points = index_points(points, idx)                        # [B, S, K, D]
    return new_xyz, grouped_xyz_norm, grouped_points


# ----------------------- full forward pass ----------------------------------
def pointnet_forward(params, structures, emb9, emb19, emb29):
    xyz = jnp.transpose(structures[:, :3, :], (0, 2, 1))              # [B, N, 3]
    pts = jnp.transpose(emb9, (0, 2, 1))                              # [B, N, D_FEAT]

    # SA1 fused with sa1_linear1 + concat(point axis) + sa1_linear2 (kernel 1).
    xyz1, g1_xyz, g1_feat = sample_and_group(
        SA1['npoint'], SA1['radius'], SA1['nsample'], xyz, pts)
    l1 = sa1_stage(g1_xyz, g1_feat, emb19, params['sa1'])             # [B, S1, D_FEAT]

    # SA2 + sa2_linear1/2 + SA3(group_all) + classifier head (kernel 2, fused).
    xyz2, g2_xyz, g2_feat = sample_and_group(
        SA2['npoint'], SA2['radius'], SA2['nsample'], xyz1, l1)
    return sa2_sa3_head(xyz2, g2_xyz, g2_feat, emb29,
                        params['sa2'], params['sa3'], params['head'])


# ----------------------- deterministic parameter init -----------------------
def init_params(key):
    key_holder = [key]

    def nxt():
        key_holder[0], sub = jax.random.split(key_holder[0])
        return sub

    def dense(cin, cout):
        w = (jax.random.normal(nxt(), (cin, cout)) * (cin ** -0.5)).astype(F32)
        b = (jax.random.normal(nxt(), (cout,)) * 0.05).astype(F32)
        return w, b

    def folded_conv_bn(cin, cout):
        # linear / conv1x1 followed by eval-mode BatchNorm, folded into (w', b').
        w, b = dense(cin, cout)
        gamma = 1.0 + 0.1 * jax.random.normal(nxt(), (cout,), F32)
        beta = 0.05 * jax.random.normal(nxt(), (cout,), F32)
        mean = 0.05 * jax.random.normal(nxt(), (cout,), F32)
        var = jnp.ones((cout,), F32)
        scale = gamma / jnp.sqrt(var + 1e-5)
        shift = beta + scale * (b - mean)
        wf = (w * scale[None, :]).astype(BF16)
        return wf, shift.reshape(1, cout).astype(F32)

    def sa_mlp(cin_feat, mlp):
        c1, c2, c3 = mlp
        w1, b1 = folded_conv_bn(3 + cin_feat, c1)
        w2, b2 = folded_conv_bn(c1, c2)
        w3, b3 = folded_conv_bn(c2, c3)
        # First layer split into xyz rows / feature rows -> kernels never need a
        # channel concat or a 35->128 zero-pad.
        return dict(w1a=w1[:3], w1b=w1[3:], b1=b1, w2=w2, b2=b2, w3=w3, b3=b3)

    def fusion_linears(npoint):
        # sa*_linear1 (E_DIM -> npoint) and sa*_linear2 (2*npoint -> npoint).
        # The reference concatenates along the point axis and applies linear2 with
        # no nonlinearity in between, so linear1 is composed with the bottom half
        # of linear2 at init; its bias folds into the fused bias.
        wl1, bl1 = dense(E_DIM, npoint)              # (E, S)
        wl2, bl2 = dense(2 * npoint, npoint)         # (2S, S)
        wl2_top, wl2_bot = wl2[:npoint], wl2[npoint:]
        a1 = wl2_top.T.astype(BF16)                              # (S, S)
        m2 = (wl1 @ wl2_bot).T.astype(BF16)                      # (S, E)
        bfu = (bl2 + wl2_bot.T @ bl1).reshape(npoint, 1).astype(F32)
        return dict(a1=a1, m2=m2, bfu=bfu)

    fw1, fb1 = folded_conv_bn(D_FEAT, 16)            # fc1 + bn1 (scaled 640->512)
    fw2, fb2 = folded_conv_bn(16, 8)                 # fc2 + bn2 (scaled 512->256)
    w3, b3 = dense(8, NUM_LABELS)                    # fc3

    return {
        'sa1': {**sa_mlp(D_FEAT, SA1['mlp']), **fusion_linears(SA1['npoint'])},
        'sa2': {**sa_mlp(D_FEAT, SA2['mlp']), **fusion_linears(SA2['npoint'])},
        'sa3': sa_mlp(D_FEAT, SA3_MLP),
        'head': dict(fw1=fw1, fb1=fb1, fw2=fw2, fb2=fb2,
                     fw3=w3.astype(BF16), fb3=b3.reshape(1, NUM_LABELS)),
    }


# ----------------------- main ------------------------------------------------
if __name__ == "__main__":
    key = jax.random.PRNGKey(0)
    kp, k1, k2, k3, k4 = jax.random.split(key, 5)
    params = init_params(kp)

    structures = jax.random.uniform(k1, (B, 3, N_PTS), jnp.float32)
    emb9 = jax.random.normal(k2, (B, D_FEAT, N_PTS), jnp.float32)
    emb19 = jax.random.normal(k3, (B, D_FEAT, E_DIM), jnp.float32)
    emb29 = jax.random.normal(k4, (B, D_FEAT, E_DIM), jnp.float32)

    logits = jax.jit(pointnet_forward)(params, structures, emb9, emb19, emb29)
    jax.block_until_ready(logits)
    assert logits.shape == (B, NUM_LABELS), logits.shape
    print("KERNEL_OK")
</pallas_src>

<mosaic_0001>
module attributes {stable_mosaic.version = 11 : i64} {
  func.func @_sa1_kernel(%arg0: i32, %arg1: memref<128x3xf32, #tpu.memory_space<vmem>>, %arg2: memref<128x32xf32, #tpu.memory_space<vmem>>, %arg3: memref<24x32xbf16, #tpu.memory_space<vmem>>, %arg4: memref<3x32xbf16, #tpu.memory_space<vmem>>, %arg5: memref<32x32xbf16, #tpu.memory_space<vmem>>, %arg6: memref<1x32xf32, #tpu.memory_space<vmem>>, %arg7: memref<32x64xbf16, #tpu.memory_space<vmem>>, %arg8: memref<1x64xf32, #tpu.memory_space<vmem>>, %arg9: memref<64x32xbf16, #tpu.memory_space<vmem>>, %arg10: memref<1x32xf32, #tpu.memory_space<vmem>>, %arg11: memref<16x16xbf16, #tpu.memory_space<vmem>>, %arg12: memref<16x24xbf16, #tpu.memory_space<vmem>>, %arg13: memref<16x1xf32, #tpu.memory_space<vmem>>, %arg14: memref<16x32xf32, #tpu.memory_space<vmem>>) attributes {dimension_semantics = [#tpu.dimension_semantics<parallel>], iteration_bounds = array<i64: 2>, scalar_prefetch = 0 : i64, scratch_operands = 0 : i64, tpu.core_type = #tpu.core_type<tc>, window_params = [{transform_indices = @transform_0, window_bounds = array<i64: 128, 3>}, {transform_indices = @transform_1, window_bounds = array<i64: 128, 32>}, {transform_indices = @transform_2, window_bounds = array<i64: 24, 32>}, {pipeline_mode = #tpu.pipeline_mode<synchronous>, transform_indices = @transform_3, window_bounds = array<i64: 3, 32>}, {pipeline_mode = #tpu.pipeline_mode<synchronous>, transform_indices = @transform_4, window_bounds = array<i64: 32, 32>}, {pipeline_mode = #tpu.pipeline_mode<synchronous>, transform_indices = @transform_5, window_bounds = array<i64: 1, 32>}, {pipeline_mode = #tpu.pipeline_mode<synchronous>, transform_indices = @transform_6, window_bounds = array<i64: 32, 64>}, {pipeline_mode = #tpu.pipeline_mode<synchronous>, transform_indices = @transform_7, window_bounds = array<i64: 1, 64>}, {pipeline_mode = #tpu.pipeline_mode<synchronous>, transform_indices = @transform_8, window_bounds = array<i64: 64, 32>}, {pipeline_mode = #tpu.pipeline_mode<synchronous>, transform_indices = @transform_9, window_bounds = array<i64: 1, 32>}, {pipeline_mode = #tpu.pipeline_mode<synchronous>, transform_indices = @transform_10, window_bounds = array<i64: 16, 16>}, {pipeline_mode = #tpu.pipeline_mode<synchronous>, transform_indices = @transform_11, window_bounds = array<i64: 16, 24>}, {pipeline_mode = #tpu.pipeline_mode<synchronous>, transform_indices = @transform_12, window_bounds = array<i64: 16, 1>}, {transform_indices = @transform_13, window_bounds = array<i64: 16, 32>}]} {
    %c0 = arith.constant 0 : index
    %c0_0 = arith.constant 0 : index
    %0 = vector.load %arg1[%c0, %c0_0] : memref<128x3xf32, #tpu.memory_space<vmem>>, vector<128x3xf32>
    %1 = arith.truncf %0 : vector<128x3xf32> to vector<128x3xbf16>
    %c0_1 = arith.constant 0 : index
    %c0_2 = arith.constant 0 : index
    %2 = vector.load %arg2[%c0_1, %c0_2] : memref<128x32xf32, #tpu.memory_space<vmem>>, vector<128x32xf32>
    %3 = arith.truncf %2 : vector<128x32xf32> to vector<128x32xbf16>
    %c0_3 = arith.constant 0 : index
    %c0_4 = arith.constant 0 : index
    %4 = vector.load %arg4[%c0_3, %c0_4] : memref<3x32xbf16, #tpu.memory_space<vmem>>, vector<3x32xbf16>
    %cst = arith.constant dense<0.000000e+00> : vector<128x32xf32>
    %5 = tpu.matmul %1, %4, %cst {dimension_numbers = #tpu.dot_dimension_numbers<[1], [0], [0], [1], [0, 0, 1, 1], [], []>} : vector<128x3xbf16>, vector<3x32xbf16>, vector<128x32xf32> -> vector<128x32xf32>
    %c0_5 = arith.constant 0 : index
    %c0_6 = arith.constant 0 : index
    %6 = vector.load %arg5[%c0_5, %c0_6] : memref<32x32xbf16, #tpu.memory_space<vmem>>, vector<32x32xbf16>
    %cst_7 = arith.constant dense<0.000000e+00> : vector<128x32xf32>
    %7 = tpu.matmul %3, %6, %cst_7 {dimension_numbers = #tpu.dot_dimension_numbers<[1], [0], [0], [1], [0, 0, 1, 1], [], []>} : vector<128x32xbf16>, vector<32x32xbf16>, vector<128x32xf32> -> vector<128x32xf32>
    %8 = arith.addf %5, %7 : vector<128x32xf32>
    %c0_8 = arith.constant 0 : index
    %c0_9 = arith.constant 0 : index
    %9 = vector.load %arg6[%c0_8, %c0_9] : memref<1x32xf32, #tpu.memory_space<vmem>>, vector<1x32xf32>
    %10 = vector.broadcast %9 : vector<1x32xf32> to vector<128x32xf32>
    %11 = arith.addf %8, %10 : vector<128x32xf32>
    %cst_10 = arith.constant 0.000000e+00 : f32
    %12 = vector.broadcast %cst_10 : f32 to vector<128x32xf32>
    %13 = arith.maximumf %11, %12 : vector<128x32xf32>
    %14 = arith.truncf %13 : vector<128x32xf32> to vector<128x32xbf16>
    %c0_11 = arith.constant 0 : index
    %c0_12 = arith.constant 0 : index
    %15 = vector.load %arg7[%c0_11, %c0_12] : memref<32x64xbf16, #tpu.memory_space<vmem>>, vector<32x64xbf16>
    %cst_13 = arith.constant dense<0.000000e+00> : vector<128x64xf32>
    %16 = tpu.matmul %14, %15, %cst_13 {dimension_numbers = #tpu.dot_dimension_numbers<[1], [0], [0], [1], [0, 0, 1, 1], [], []>} : vector<128x32xbf16>, vector<32x64xbf16>, vector<128x64xf32> -> vector<128x64xf32>
    %c0_14 = arith.constant 0 : index
    %c0_15 = arith.constant 0 : index
    %17 = vector.load %arg8[%c0_14, %c0_15] : memref<1x64xf32, #tpu.memory_space<vmem>>, vector<1x64xf32>
    %18 = vector.broadcast %17 : vector<1x64xf32> to vector<128x64xf32>
    %19 = arith.addf %16, %18 : vector<128x64xf32>
    %cst_16 = arith.constant 0.000000e+00 : f32
    %20 = vector.broadcast %cst_16 : f32 to vector<128x64xf32>
    %21 = arith.maximumf %19, %20 : vector<128x64xf32>
    %22 = arith.truncf %21 : vector<128x64xf32> to vector<128x64xbf16>
    %c0_17 = arith.constant 0 : index
    %c0_18 = arith.constant 0 : index
    %23 = vector.load %arg9[%c0_17, %c0_18] : memref<64x32xbf16, #tpu.memory_space<vmem>>, vector<64x32xbf16>
    %cst_19 = arith.constant dense<0.000000e+00> : vector<128x32xf32>
    %24 = tpu.matmul %22, %23, %cst_19 {dimension_numbers = #tpu.dot_dimension_numbers<[1], [0], [0], [1], [0, 0, 1, 1], [], []>} : vector<128x64xbf16>, vector<64x32xbf16>, vector<128x32xf32> -> vector<128x32xf32>
    %c0_20 = arith.constant 0 : index
    %c0_21 = arith.constant 0 : index
    %25 = vector.load %arg10[%c0_20, %c0_21] : memref<1x32xf32, #tpu.memory_space<vmem>>, vector<1x32xf32>
    %26 = vector.broadcast %25 : vector<1x32xf32> to vector<128x32xf32>
    %27 = arith.addf %24, %26 : vector<128x32xf32>
    %cst_22 = arith.constant 0.000000e+00 : f32
    %28 = vector.broadcast %cst_22 : f32 to vector<128x32xf32>
    %29 = arith.maximumf %27, %28 : vector<128x32xf32>
    %30 = vector.shape_cast %29 : vector<128x32xf32> to vector<16x8x32xf32>
    %cst_23 = arith.constant dense<0xFF800000> : vector<16x32xf32>
    %31 = vector.multi_reduction <maximumf>, %30, %cst_23 [1] : vector<16x8x32xf32> to vector<16x32xf32>
    %c0_24 = arith.constant 0 : index
    %c0_25 = arith.constant 0 : index
    %32 = vector.load %arg11[%c0_24, %c0_25] : memref<16x16xbf16, #tpu.memory_space<vmem>>, vector<16x16xbf16>
    %33 = arith.truncf %31 : vector<16x32xf32> to vector<16x32xbf16>
    %cst_26 = arith.constant dense<0.000000e+00> : vector<16x32xf32>
    %34 = tpu.matmul %32, %33, %cst_26 {dimension_numbers = #tpu.dot_dimension_numbers<[1], [0], [0], [1], [0, 0, 1, 1], [], []>} : vector<16x16xbf16>, vector<16x32xbf16>, vector<16x32xf32> -> vector<16x32xf32>
    %c0_27 = arith.constant 0 : index
    %c0_28 = arith.constant 0 : index
    %35 = vector.load %arg12[%c0_27, %c0_28] : memref<16x24xbf16, #tpu.memory_space<vmem>>, vector<16x24xbf16>
    %c0_29 = arith.constant 0 : index
    %c0_30 = arith.constant 0 : index
    %36 = vector.load %arg3[%c0_29, %c0_30] : memref<24x32xbf16, #tpu.memory_space<vmem>>, vector<24x32xbf16>
    %cst_31 = arith.constant dense<0.000000e+00> : vector<16x32xf32>
    %37 = tpu.matmul %35, %36, %cst_31 {dimension_numbers = #tpu.dot_dimension_numbers<[1], [0], [0], [1], [0, 0, 1, 1], [], []>} : vector<16x24xbf16>, vector<24x32xbf16>, vector<16x32xf32> -> vector<16x32xf32>
    %38 = arith.addf %34, %37 : vector<16x32xf32>
    %c0_32 = arith.constant 0 : index
    %c0_33 = arith.constant 0 : index
    %39 = vector.load %arg13[%c0_32, %c0_33] : memref<16x1xf32, #tpu.memory_space<vmem>>, vector<16x1xf32>
    %40 = vector.broadcast %39 : vector<16x1xf32> to vector<16x32xf32>
    %41 = arith.addf %38, %40 : vector<16x32xf32>
    %c0_34 = arith.constant 0 : index
    %c0_35 = arith.constant 0 : index
    %42 = vector.load %arg14[%c0_34, %c0_35] : memref<16x32xf32, #tpu.memory_space<vmem>>, vector<16x32xf32>
    tpu.vector_store %arg14[%c0_34, %c0_35], %41 {strides = array<i32>} : memref<16x32xf32, #tpu.memory_space<vmem>>, vector<16x32xf32>,
    return
  }
  func.func @transform_0(%arg0: i32) -> (i32, i32) {
    %c0_i32 = arith.constant 0 : i32
    %c0_i32_0 = arith.constant 0 : i32
    return %arg0, %c0_i32 : i32, i32
  }
  func.func @transform_1(%arg0: i32) -> (i32, i32) {
    %c0_i32 = arith.constant 0 : i32
    %c0_i32_0 = arith.constant 0 : i32
    return %arg0, %c0_i32 : i32, i32
  }
  func.func @transform_2(%arg0: i32) -> (i32, i32) {
    %c0_i32 = arith.constant 0 : i32
    %c0_i32_0 = arith.constant 0 : i32
    return %arg0, %c0_i32 : i32, i32
  }
  func.func @transform_3(%arg0: i32) -> (i32, i32) {
    %c0_i32 = arith.constant 0 : i32
    %c0_i32_0 = arith.constant 0 : i32
    %c0_i32_1 = arith.constant 0 : i32
    return %c0_i32, %c0_i32_0 : i32, i32
  }
  func.func @transform_4(%arg0: i32) -> (i32, i32) {
    %c0_i32 = arith.constant 0 : i32
    %c0_i32_0 = arith.constant 0 : i32
    %c0_i32_1 = arith.constant 0 : i32
    return %c0_i32, %c0_i32_0 : i32, i32
  }
  func.func @transform_5(%arg0: i32) -> (i32, i32) {
    %c0_i32 = arith.constant 0 : i32
    %c0_i32_0 = arith.constant 0 : i32
    %c0_i32_1 = arith.constant 0 : i32
    return %c0_i32, %c0_i32_0 : i32, i32
  }
  func.func @transform_6(%arg0: i32) -> (i32, i32) {
    %c0_i32 = arith.constant 0 : i32
    %c0_i32_0 = arith.constant 0 : i32
    %c0_i32_1 = arith.constant 0 : i32
    return %c0_i32, %c0_i32_0 : i32, i32
  }
  func.func @transform_7(%arg0: i32) -> (i32, i32) {
    %c0_i32 = arith.constant 0 : i32
    %c0_i32_0 = arith.constant 0 : i32
    %c0_i32_1 = arith.constant 0 : i32
    return %c0_i32, %c0_i32_0 : i32, i32
  }
  func.func @transform_8(%arg0: i32) -> (i32, i32) {
    %c0_i32 = arith.constant 0 : i32
    %c0_i32_0 = arith.constant 0 : i32
    %c0_i32_1 = arith.constant 0 : i32
    return %c0_i32, %c0_i32_0 : i32, i32
  }
  func.func @transform_9(%arg0: i32) -> (i32, i32) {
    %c0_i32 = arith.constant 0 : i32
    %c0_i32_0 = arith.constant 0 : i32
    %c0_i32_1 = arith.constant 0 : i32
    return %c0_i32, %c0_i32_0 : i32, i32
  }
  func.func @transform_10(%arg0: i32) -> (i32, i32) {
    %c0_i32 = arith.constant 0 : i32
    %c0_i32_0 = arith.constant 0 : i32
    %c0_i32_1 = arith.constant 0 : i32
    return %c0_i32, %c0_i32_0 : i32, i32
  }
  func.func @transform_11(%arg0: i32) -> (i32, i32) {
    %c0_i32 = arith.constant 0 : i32
    %c0_i32_0 = arith.constant 0 : i32
    %c0_i32_1 = arith.constant 0 : i32
    return %c0_i32, %c0_i32_0 : i32, i32
  }
  func.func @transform_12(%arg0: i32) -> (i32, i32) {
    %c0_i32 = arith.constant 0 : i32
    %c0_i32_0 = arith.constant 0 : i32
    %c0_i32_1 = arith.constant 0 : i32
    return %c0_i32, %c0_i32_0 : i32, i32
  }
  func.func @transform_13(%arg0: i32) -> (i32, i32) {
    %c0_i32 = arith.constant 0 : i32
    %c0_i32_0 = arith.constant 0 : i32
    return %arg0, %c0_i32 : i32, i32
  }
}

module attributes {stable_mosaic.version = 11 : i64} {
  func.func @_sa2_sa3_head_kernel(%arg0: i32, %arg1: memref<8x3xf32, #tpu.memory_space<vmem>>, %arg2: memref<64x3xf32, #tpu.memory_space<vmem>>, %arg3: memref<64x32xf32, #tpu.memory_space<vmem>>, %arg4: memref<24x32xbf16, #tpu.memory_space<vmem>>, %arg5: memref<3x32xbf16, #tpu.memory_space<vmem>>, %arg6: memref<32x32xbf16, #tpu.memory_space<vmem>>, %arg7: memref<1x32xf32, #tpu.memory_space<vmem>>, %arg8: memref<32x64xbf16, #tpu.memory_space<vmem>>, %arg9: memref<1x64xf32, #tpu.memory_space<vmem>>, %arg10: memref<64x32xbf16, #tpu.memory_space<vmem>>, %arg11: memref<1x32xf32, #tpu.memory_space<vmem>>, %arg12: memref<8x8xbf16, #tpu.memory_space<vmem>>, %arg13: memref<8x24xbf16, #tpu.memory_space<vmem>>, %arg14: memref<8x1xf32, #tpu.memory_space<vmem>>, %arg15: memref<3x32xbf16, #tpu.memory_space<vmem>>, %arg16: memref<32x32xbf16, #tpu.memory_space<vmem>>, %arg17: memref<1x32xf32, #tpu.memory_space<vmem>>, %arg18: memref<32x64xbf16, #tpu.memory_space<vmem>>, %arg19: memref<1x64xf32, #tpu.memory_space<vmem>>, %arg20: memref<64x32xbf16, #tpu.memory_space<vmem>>, %arg21: memref<1x32xf32, #tpu.memory_space<vmem>>, %arg22: memref<32x16xbf16, #tpu.memory_space<vmem>>, %arg23: memref<1x16xf32, #tpu.memory_space<vmem>>, %arg24: memref<16x8xbf16, #tpu.memory_space<vmem>>, %arg25: memref<1x8xf32, #tpu.memory_space<vmem>>, %arg26: memref<8x5xbf16, #tpu.memory_space<vmem>>, %arg27: memref<1x5xf32, #tpu.memory_space<vmem>>, %arg28: memref<1x1x5xf32, #tpu.memory_space<vmem>>) attributes {dimension_semantics = [#tpu.dimension_semantics<parallel>], iteration_bounds = array<i64: 2>, scalar_prefetch = 0 : i64, scratch_operands = 0 : i64, tpu.core_type = #tpu.core_type<tc>, window_params = [{transform_indices = @transform_0, window_bounds = array<i64: 8, 3>}, {transform_indices = @transform_1, window_bounds = array<i64: 64, 3>}, {transform_indices = @transform_2, window_bounds = array<i64: 64, 32>}, {transform_indices = @transform_3, window_bounds = array<i64: 24, 32>}, {pipeline_mode = #tpu.pipeline_mode<synchronous>, transform_indices = @transform_4, window_bounds = array<i64: 3, 32>}, {pipeline_mode = #tpu.pipeline_mode<synchronous>, transform_indices = @transform_5, window_bounds = array<i64: 32, 32>}, {pipeline_mode = #tpu.pipeline_mode<synchronous>, transform_indices = @transform_6, window_bounds = array<i64: 1, 32>}, {pipeline_mode = #tpu.pipeline_mode<synchronous>, transform_indices = @transform_7, window_bounds = array<i64: 32, 64>}, {pipeline_mode = #tpu.pipeline_mode<synchronous>, transform_indices = @transform_8, window_bounds = array<i64: 1, 64>}, {pipeline_mode = #tpu.pipeline_mode<synchronous>, transform_indices = @transform_9, window_bounds = array<i64: 64, 32>}, {pipeline_mode = #tpu.pipeline_mode<synchronous>, transform_indices = @transform_10, window_bounds = array<i64: 1, 32>}, {pipeline_mode = #tpu.pipeline_mode<synchronous>, transform_indices = @transform_11, window_bounds = array<i64: 8, 8>}, {pipeline_mode = #tpu.pipeline_mode<synchronous>, transform_indices = @transform_12, window_bounds = array<i64: 8, 24>}, {pipeline_mode = #tpu.pipeline_mode<synchronous>, transform_indices = @transform_13, window_bounds = array<i64: 8, 1>}, {pipeline_mode = #tpu.pipeline_mode<synchronous>, transform_indices = @transform_14, window_bounds = array<i64: 3, 32>}, {pipeline_mode = #tpu.pipeline_mode<synchronous>, transform_indices = @transform_15, window_bounds = array<i64: 32, 32>}, {pipeline_mode = #tpu.pipeline_mode<synchronous>, transform_indices = @transform_16, window_bounds = array<i64: 1, 32>}, {pipeline_mode = #tpu.pipeline_mode<synchronous>, transform_indices = @transform_17, window_bounds = array<i64: 32, 64>}, {pipeline_mode = #tpu.pipeline_mode<synchronous>, transform_indices = @transform_18, window_bounds = array<i64: 1, 64>}, {pipeline_mode = #tpu.pipeline_mode<synchronous>, transform_indices = @transform_19, window_bounds = array<i64: 64, 32>}, {pipeline_mode = #tpu.pipeline_mode<synchronous>, transform_indices = @transform_20, window_bounds = array<i64: 1, 32>}, {pipeline_mode = #tpu.pipeline_mode<synchronous>, transform_indices = @transform_21, window_bounds = array<i64: 32, 16>}, {pipeline_mode = #tpu.pipeline_mode<synchronous>, transform_indices = @transform_22, window_bounds = array<i64: 1, 16>}, {pipeline_mode = #tpu.pipeline_mode<synchronous>, transform_indices = @transform_23, window_bounds = array<i64: 16, 8>}, {pipeline_mode = #tpu.pipeline_mode<synchronous>, transform_indices = @transform_24, window_bounds = array<i64: 1, 8>}, {pipeline_mode = #tpu.pipeline_mode<synchronous>, transform_indices = @transform_25, window_bounds = array<i64: 8, 5>}, {pipeline_mode = #tpu.pipeline_mode<synchronous>, transform_indices = @transform_26, window_bounds = array<i64: 1, 5>}, {transform_indices = @transform_27, window_bounds = array<i64: 1, 1, 5>}]} {
    %c0 = arith.constant 0 : index
    %c0_0 = arith.constant 0 : index
    %0 = vector.load %arg2[%c0, %c0_0] : memref<64x3xf32, #tpu.memory_space<vmem>>, vector<64x3xf32>
    %1 = arith.truncf %0 : vector<64x3xf32> to vector<64x3xbf16>
    %c0_1 = arith.constant 0 : index
    %c0_2 = arith.constant 0 : index
    %2 = vector.load %arg3[%c0_1, %c0_2] : memref<64x32xf32, #tpu.memory_space<vmem>>, vector<64x32xf32>
    %3 = arith.truncf %2 : vector<64x32xf32> to vector<64x32xbf16>
    %c0_3 = arith.constant 0 : index
    %c0_4 = arith.constant 0 : index
    %4 = vector.load %arg5[%c0_3, %c0_4] : memref<3x32xbf16, #tpu.memory_space<vmem>>, vector<3x32xbf16>
    %cst = arith.constant dense<0.000000e+00> : vector<64x32xf32>
    %5 = tpu.matmul %1, %4, %cst {dimension_numbers = #tpu.dot_dimension_numbers<[1], [0], [0], [1], [0, 0, 1, 1], [], []>} : vector<64x3xbf16>, vector<3x32xbf16>, vector<64x32xf32> -> vector<64x32xf32>
    %c0_5 = arith.constant 0 : index
    %c0_6 = arith.constant 0 : index
    %6 = vector.load %arg6[%c0_5, %c0_6] : memref<32x32xbf16, #tpu.memory_space<vmem>>, vector<32x32xbf16>
    %cst_7 = arith.constant dense<0.000000e+00> : vector<64x32xf32>
    %7 = tpu.matmul %3, %6, %cst_7 {dimension_numbers = #tpu.dot_dimension_numbers<[1], [0], [0], [1], [0, 0, 1, 1], [], []>} : vector<64x32xbf16>, vector<32x32xbf16>, vector<64x32xf32> -> vector<64x32xf32>
    %8 = arith.addf %5, %7 : vector<64x32xf32>
    %c0_8 = arith.constant 0 : index
    %c0_9 = arith.constant 0 : index
    %9 = vector.load %arg7[%c0_8, %c0_9] : memref<1x32xf32, #tpu.memory_space<vmem>>, vector<1x32xf32>
    %10 = vector.broadcast %9 : vector<1x32xf32> to vector<64x32xf32>
    %11 = arith.addf %8, %10 : vector<64x32xf32>
    %cst_10 = arith.constant 0.000000e+00 : f32
    %12 = vector.broadcast %cst_10 : f32 to vector<64x32xf32>
    %13 = arith.maximumf %11, %12 : vector<64x32xf32>
    %14 = arith.truncf %13 : vector<64x32xf32> to vector<64x32xbf16>
    %c0_11 = arith.constant 0 : index
    %c0_12 = arith.constant 0 : index
    %15 = vector.load %arg8[%c0_11, %c0_12] : memref<32x64xbf16, #tpu.memory_space<vmem>>, vector<32x64xbf16>
    %cst_13 = arith.constant dense<0.000000e+00> : vector<64x64xf32>
    %16 = tpu.matmul %14, %15, %cst_13 {dimension_numbers = #tpu.dot_dimension_numbers<[1], [0], [0], [1], [0, 0, 1, 1], [], []>} : vector<64x32xbf16>, vector<32x64xbf16>, vector<64x64xf32> -> vector<64x64xf32>
    %c0_14 = arith.constant 0 : index
    %c0_15 = arith.constant 0 : index
    %17 = vector.load %arg9[%c0_14, %c0_15] : memref<1x64xf32, #tpu.memory_space<vmem>>, vector<1x64xf32>
    %18 = vector.broadcast %17 : vector<1x64xf32> to vector<64x64xf32>
    %19 = arith.addf %16, %18 : vector<64x64xf32>
    %cst_16 = arith.constant 0.000000e+00 : f32
    %20 = vector.broadcast %cst_16 : f32 to vector<64x64xf32>
    %21 = arith.maximumf %19, %20 : vector<64x64xf32>
    %22 = arith.truncf %21 : vector<64x64xf32> to vector<64x64xbf16>
    %c0_17 = arith.constant 0 : index
    %c0_18 = arith.constant 0 : index
    %23 = vector.load %arg10[%c0_17, %c0_18] : memref<64x32xbf16, #tpu.memory_space<vmem>>, vector<64x32xbf16>
    %cst_19 = arith.constant dense<0.000000e+00> : vector<64x32xf32>
    %24 = tpu.matmul %22, %23, %cst_19 {dimension_numbers = #tpu.dot_dimension_numbers<[1], [0], [0], [1], [0, 0, 1, 1], [], []>} : vector<64x64xbf16>, vector<64x32xbf16>, vector<64x32xf32> -> vector<64x32xf32>
    %c0_20 = arith.constant 0 : index
    %c0_21 = arith.constant 0 : index
    %25 = vector.load %arg11[%c0_20, %c0_21] : memref<1x32xf32, #tpu.memory_space<vmem>>, vector<1x32xf32>
    %26 = vector.broadcast %25 : vector<1x32xf32> to vector<64x32xf32>
    %27 = arith.addf %24, %26 : vector<64x32xf32>
    %cst_22 = arith.constant 0.000000e+00 : f32
    %28 = vector.broadcast %cst_22 : f32 to vector<64x32xf32>
    %29 = arith.maximumf %27, %28 : vector<64x32xf32>
    %30 = vector.shape_cast %29 : vector<64x32xf32> to vector<8x8x32xf32>
    %cst_23 = arith.constant dense<0xFF800000> : vector<8x32xf32>
    %31 = vector.multi_reduction <maximumf>, %30, %cst_23 [1] : vector<8x8x32xf32> to vector<8x32xf32>
    %c0_24 = arith.constant 0 : index
    %c0_25 = arith.constant 0 : index
    %32 = vector.load %arg12[%c0_24, %c0_25] : memref<8x8xbf16, #tpu.memory_space<vmem>>, vector<8x8xbf16>
    %33 = arith.truncf %31 : vector<8x32xf32> to vector<8x32xbf16>
    %cst_26 = arith.constant dense<0.000000e+00> : vector<8x32xf32>
    %34 = tpu.matmul %32, %33, %cst_26 {dimension_numbers = #tpu.dot_dimension_numbers<[1], [0], [0], [1], [0, 0, 1, 1], [], []>} : vector<8x8xbf16>, vector<8x32xbf16>, vector<8x32xf32> -> vector<8x32xf32>
    %c0_27 = arith.constant 0 : index
    %c0_28 = arith.constant 0 : index
    %35 = vector.load %arg13[%c0_27, %c0_28] : memref<8x24xbf16, #tpu.memory_space<vmem>>, vector<8x24xbf16>
    %c0_29 = arith.constant 0 : index
    %c0_30 = arith.constant 0 : index
    %36 = vector.load %arg4[%c0_29, %c0_30] : memref<24x32xbf16, #tpu.memory_space<vmem>>, vector<24x32xbf16>
    %cst_31 = arith.constant dense<0.000000e+00> : vector<8x32xf32>
    %37 = tpu.matmul %35, %36, %cst_31 {dimension_numbers = #tpu.dot_dimension_numbers<[1], [0], [0], [1], [0, 0, 1, 1], [], []>} : vector<8x24xbf16>, vector<24x32xbf16>, vector<8x32xf32> -> vector<8x32xf32>
    %38 = arith.addf %34, %37 : vector<8x32xf32>
    %c0_32 = arith.constant 0 : index
    %c0_33 = arith.constant 0 : index
    %39 = vector.load %arg14[%c0_32, %c0_33] : memref<8x1xf32, #tpu.memory_space<vmem>>, vector<8x1xf32>
    %40 = vector.broadcast %39 : vector<8x1xf32> to vector<8x32xf32>
    %41 = arith.addf %38, %40 : vector<8x32xf32>
    %c0_34 = arith.constant 0 : index
    %c0_35 = arith.constant 0 : index
    %42 = vector.load %arg1[%c0_34, %c0_35] : memref<8x3xf32, #tpu.memory_space<vmem>>, vector<8x3xf32>
    %43 = arith.truncf %42 : vector<8x3xf32> to vector<8x3xbf16>
    %c0_36 = arith.constant 0 : index
    %c0_37 = arith.constant 0 : index
    %44 = vector.load %arg15[%c0_36, %c0_37] : memref<3x32xbf16, #tpu.memory_space<vmem>>, vector<3x32xbf16>
    %cst_38 = arith.constant dense<0.000000e+00> : vector<8x32xf32>
    %45 = tpu.matmul %43, %44, %cst_38 {dimension_numbers = #tpu.dot_dimension_numbers<[1], [0], [0], [1], [0, 0, 1, 1], [], []>} : vector<8x3xbf16>, vector<3x32xbf16>, vector<8x32xf32> -> vector<8x32xf32>
    %46 = arith.truncf %41 : vector<8x32xf32> to vector<8x32xbf16>
    %c0_39 = arith.constant 0 : index
    %c0_40 = arith.constant 0 : index
    %47 = vector.load %arg16[%c0_39, %c0_40] : memref<32x32xbf16, #tpu.memory_space<vmem>>, vector<32x32xbf16>
    %cst_41 = arith.constant dense<0.000000e+00> : vector<8x32xf32>
    %48 = tpu.matmul %46, %47, %cst_41 {dimension_numbers = #tpu.dot_dimension_numbers<[1], [0], [0], [1], [0, 0, 1, 1], [], []>} : vector<8x32xbf16>, vector<32x32xbf16>, vector<8x32xf32> -> vector<8x32xf32>
    %49 = arith.addf %45, %48 : vector<8x32xf32>
    %c0_42 = arith.constant 0 : index
    %c0_43 = arith.constant 0 : index
    %50 = vector.load %arg17[%c0_42, %c0_43] : memref<1x32xf32, #tpu.memory_space<vmem>>, vector<1x32xf32>
    %51 = vector.broadcast %50 : vector<1x32xf32> to vector<8x32xf32>
    %52 = arith.addf %49, %51 : vector<8x32xf32>
    %cst_44 = arith.constant 0.000000e+00 : f32
    %53 = vector.broadcast %cst_44 : f32 to vector<8x32xf32>
    %54 = arith.maximumf %52, %53 : vector<8x32xf32>
    %55 = arith.truncf %54 : vector<8x32xf32> to vector<8x32xbf16>
    %c0_45 = arith.constant 0 : index
    %c0_46 = arith.constant 0 : index
    %56 = vector.load %arg18[%c0_45, %c0_46] : memref<32x64xbf16, #tpu.memory_space<vmem>>, vector<32x64xbf16>
    %cst_47 = arith.constant dense<0.000000e+00> : vector<8x64xf32>
    %57 = tpu.matmul %55, %56, %cst_47 {dimension_numbers = #tpu.dot_dimension_numbers<[1], [0], [0], [1], [0, 0, 1, 1], [], []>} : vector<8x32xbf16>, vector<32x64xbf16>, vector<8x64xf32> -> vector<8x64xf32>
    %c0_48 = arith.constant 0 : index
    %c0_49 = arith.constant 0 : index
    %58 = vector.load %arg19[%c0_48, %c0_49] : memref<1x64xf32, #tpu.memory_space<vmem>>, vector<1x64xf32>
    %59 = vector.broadcast %58 : vector<1x64xf32> to vector<8x64xf32>
    %60 = arith.addf %57, %59 : vector<8x64xf32>
    %cst_50 = arith.constant 0.000000e+00 : f32
    %61 = vector.broadcast %cst_50 : f32 to vector<8x64xf32>
    %62 = arith.maximumf %60, %61 : vector<8x64xf32>
    %63 = arith.truncf %62 : vector<8x64xf32> to vector<8x64xbf16>
    %c0_51 = arith.constant 0 : index
    %c0_52 = arith.constant 0 : index
    %64 = vector.load %arg20[%c0_51, %c0_52] : memref<64x32xbf16, #tpu.memory_space<vmem>>, vector<64x32xbf16>
    %cst_53 = arith.constant dense<0.000000e+00> : vector<8x32xf32>
    %65 = tpu.matmul %63, %64, %cst_53 {dimension_numbers = #tpu.dot_dimension_numbers<[1], [0], [0], [1], [0, 0, 1, 1], [], []>} : vector<8x64xbf16>, vector<64x32xbf16>, vector<8x32xf32> -> vector<8x32xf32>
    %c0_54 = arith.constant 0 : index
    %c0_55 = arith.constant 0 : index
    %66 = vector.load %arg21[%c0_54, %c0_55] : memref<1x32xf32, #tpu.memory_space<vmem>>, vector<1x32xf32>
    %67 = vector.broadcast %66 : vector<1x32xf32> to vector<8x32xf32>
    %68 = arith.addf %65, %67 : vector<8x32xf32>
    %cst_56 = arith.constant 0.000000e+00 : f32
    %69 = vector.broadcast %cst_56 : f32 to vector<8x32xf32>
    %70 = arith.maximumf %68, %69 : vector<8x32xf32>
    %cst_57 = arith.constant dense<0xFF800000> : vector<32xf32>
    %71 = vector.multi_reduction <maximumf>, %70, %cst_57 [0] : vector<8x32xf32> to vector<32xf32>
    %72 = vector.shape_cast %71 : vector<32xf32> to vector<1x32xf32>
    %73 = arith.truncf %72 : vector<1x32xf32> to vector<1x32xbf16>
    %c0_58 = arith.constant 0 : index
    %c0_59 = arith.constant 0 : index
    %74 = vector.load %arg22[%c0_58, %c0_59] : memref<32x16xbf16, #tpu.memory_space<vmem>>, vector<32x16xbf16>
    %cst_60 = arith.constant dense<0.000000e+00> : vector<1x16xf32>
    %75 = tpu.matmul %73, %74, %cst_60 {dimension_numbers = #tpu.dot_dimension_numbers<[1], [0], [0], [1], [0, 0, 1, 1], [], []>} : vector<1x32xbf16>, vector<32x16xbf16>, vector<1x16xf32> -> vector<1x16xf32>
    %c0_61 = arith.constant 0 : index
    %c0_62 = arith.constant 0 : index
    %76 = vector.load %arg23[%c0_61, %c0_62] : memref<1x16xf32, #tpu.memory_space<vmem>>, vector<1x16xf32>
    %77 = arith.addf %75, %76 : vector<1x16xf32>
    %cst_63 = arith.constant 0.000000e+00 : f32
    %78 = vector.broadcast %cst_63 : f32 to vector<1x16xf32>
    %79 = arith.maximumf %77, %78 : vector<1x16xf32>
    %80 = arith.truncf %79 : vector<1x16xf32> to vector<1x16xbf16>
    %c0_64 = arith.constant 0 : index
    %c0_65 = arith.constant 0 : index
    %81 = vector.load %arg24[%c0_64, %c0_65] : memref<16x8xbf16, #tpu.memory_space<vmem>>, vector<16x8xbf16>
    %cst_66 = arith.constant dense<0.000000e+00> : vector<1x8xf32>
    %82 = tpu.matmul %80, %81, %cst_66 {dimension_numbers = #tpu.dot_dimension_numbers<[1], [0], [0], [1], [0, 0, 1, 1], [], []>} : vector<1x16xbf16>, vector<16x8xbf16>, vector<1x8xf32> -> vector<1x8xf32>
    %c0_67 = arith.constant 0 : index
    %c0_68 = arith.constant 0 : index
    %83 = vector.load %arg25[%c0_67, %c0_68] : memref<1x8xf32, #tpu.memory_space<vmem>>, vector<1x8xf32>
    %84 = arith.addf %82, %83 : vector<1x8xf32>
    %cst_69 = arith.constant 0.000000e+00 : f32
    %85 = vector.broadcast %cst_69 : f32 to vector<1x8xf32>
    %86 = arith.maximumf %84, %85 : vector<1x8xf32>
    %87 = arith.truncf %86 : vector<1x8xf32> to vector<1x8xbf16>
    %c0_70 = arith.constant 0 : index
    %c0_71 = arith.constant 0 : index
    %88 = vector.load %arg26[%c0_70, %c0_71] : memref<8x5xbf16, #tpu.memory_space<vmem>>, vector<8x5xbf16>
    %cst_72 = arith.constant dense<0.000000e+00> : vector<1x5xf32>
    %89 = tpu.matmul %87, %88, %cst_72 {dimension_numbers = #tpu.dot_dimension_numbers<[1], [0], [0], [1], [0, 0, 1, 1], [], []>} : vector<1x8xbf16>, vector<8x5xbf16>, vector<1x5xf32> -> vector<1x5xf32>
    %c0_73 = arith.constant 0 : index
    %c0_74 = arith.constant 0 : index
    %90 = vector.load %arg27[%c0_73, %c0_74] : memref<1x5xf32, #tpu.memory_space<vmem>>, vector<1x5xf32>
    %91 = arith.addf %89, %90 : vector<1x5xf32>
    %c0_75 = arith.constant 0 : index
    %c0_76 = arith.constant 0 : index
    %c0_77 = arith.constant 0 : index
    %92 = vector.load %arg28[%c0_75, %c0_76, %c0_77] : memref<1x1x5xf32, #tpu.memory_space<vmem>>, vector<1x1x5xf32>
    %93 = vector.shape_cast %92 : vector<1x1x5xf32> to vector<1x5xf32>
    %94 = vector.shape_cast %91 : vector<1x5xf32> to vector<1x1x5xf32>
    tpu.vector_store %arg28[%c0_75, %c0_76, %c0_77], %94 {strides = array<i32>} : memref<1x1x5xf32, #tpu.memory_space<vmem>>, vector<1x1x5xf32>,
    return
  }
  func.func @transform_0(%arg0: i32) -> (i32, i32) {
    %c0_i32 = arith.constant 0 : i32
    %c0_i32_0 = arith.constant 0 : i32
    return %arg0, %c0_i32 : i32, i32
  }
  func.func @transform_1(%arg0: i32) -> (i32, i32) {
    %c0_i32 = arith.constant 0 : i32
    %c0_i32_0 = arith.constant 0 : i32
    return %arg0, %c0_i32 : i32, i32
  }
  func.func @transform_2(%arg0: i32) -> (i32, i32) {
    %c0_i32 = arith.constant 0 : i32
    %c0_i32_0 = arith.constant 0 : i32
    return %arg0, %c0_i32 : i32, i32
  }
  func.func @transform_3(%arg0: i32) -> (i32, i32) {
    %c0_i32 = arith.constant 0 : i32
    %c0_i32_0 = arith.constant 0 : i32
    return %arg0, %c0_i32 : i32, i32
  }
  func.func @transform_4(%arg0: i32) -> (i32, i32) {
    %c0_i32 = arith.constant 0 : i32
    %c0_i32_0 = arith.constant 0 : i32
    %c0_i32_1 = arith.constant 0 : i32
    return %c0_i32, %c0_i32_0 : i32, i32
  }
  func.func @transform_5(%arg0: i32) -> (i32, i32) {
    %c0_i32 = arith.constant 0 : i32
    %c0_i32_0 = arith.constant 0 : i32
    %c0_i32_1 = arith.constant 0 : i32
    return %c0_i32, %c0_i32_0 : i32, i32
  }
  func.func @transform_6(%arg0: i32) -> (i32, i32) {
    %c0_i32 = arith.constant 0 : i32
    %c0_i32_0 = arith.constant 0 : i32
    %c0_i32_1 = arith.constant 0 : i32
    return %c0_i32, %c0_i32_0 : i32, i32
  }
  func.func @transform_7(%arg0: i32) -> (i32, i32) {
    %c0_i32 = arith.constant 0 : i32
    %c0_i32_0 = arith.constant 0 : i32
    %c0_i32_1 = arith.constant 0 : i32
    return %c0_i32, %c0_i32_0 : i32, i32
  }
  func.func @transform_8(%arg0: i32) -> (i32, i32) {
    %c0_i32 = arith.constant 0 : i32
    %c0_i32_0 = arith.constant 0 : i32
    %c0_i32_1 = arith.constant 0 : i32
    return %c0_i32, %c0_i32_0 : i32, i32
  }
  func.func @transform_9(%arg0: i32) -> (i32, i32) {
    %c0_i32 = arith.constant 0 : i32
    %c0_i32_0 = arith.constant 0 : i32
    %c0_i32_1 = arith.constant 0 : i32
    return %c0_i32, %c0_i32_0 : i32, i32
  }
  func.func @transform_10(%arg0: i32) -> (i32, i32) {
    %c0_i32 = arith.constant 0 : i32
    %c0_i32_0 = arith.constant 0 : i32
    %c0_i32_1 = arith.constant 0 : i32
    return %c0_i32, %c0_i32_0 : i32, i32
  }
  func.func @transform_11(%arg0: i32) -> (i32, i32) {
    %c0_i32 = arith.constant 0 : i32
    %c0_i32_0 = arith.constant 0 : i32
    %c0_i32_1 = arith.constant 0 : i32
    return %c0_i32, %c0_i32_0 : i32, i32
  }
  func.func @transform_12(%arg0: i32) -> (i32, i32) {
    %c0_i32 = arith.constant 0 : i32
    %c0_i32_0 = arith.constant 0 : i32
    %c0_i32_1 = arith.constant 0 : i32
    return %c0_i32, %c0_i32_0 : i32, i32
  }
  func.func @transform_13(%arg0: i32) -> (i32, i32) {
    %c0_i32 = arith.constant 0 : i32
    %c0_i32_0 = arith.constant 0 : i32
    %c0_i32_1 = arith.constant 0 : i32
    return %c0_i32, %c0_i32_0 : i32, i32
  }
  func.func @transform_14(%arg0: i32) -> (i32, i32) {
    %c0_i32 = arith.constant 0 : i32
    %c0_i32_0 = arith.constant 0 : i32
    %c0_i32_1 = arith.constant 0 : i32
    return %c0_i32, %c0_i32_0 : i32, i32
  }
  func.func @transform_15(%arg0: i32) -> (i32, i32) {
    %c0_i32 = arith.constant 0 : i32
    %c0_i32_0 = arith.constant 0 : i32
    %c0_i32_1 = arith.constant 0 : i32
    return %c0_i32, %c0_i32_0 : i32, i32
  }
  func.func @transform_16(%arg0: i32) -> (i32, i32) {
    %c0_i32 = arith.constant 0 : i32
    %c0_i32_0 = arith.constant 0 : i32
    %c0_i32_1 = arith.constant 0 : i32
    return %c0_i32, %c0_i32_0 : i32, i32
  }
  func.func @transform_17(%arg0: i32) -> (i32, i32) {
    %c0_i32 = arith.constant 0 : i32
    %c0_i32_0 = arith.constant 0 : i32
    %c0_i32_1 = arith.constant 0 : i32
    return %c0_i32, %c0_i32_0 : i32, i32
  }
  func.func @transform_18(%arg0: i32) -> (i32, i32) {
    %c0_i32 = arith.constant 0 : i32
    %c0_i32_0 = arith.constant 0 : i32
    %c0_i32_1 = arith.constant 0 : i32
    return %c0_i32, %c0_i32_0 : i32, i32
  }
  func.func @transform_19(%arg0: i32) -> (i32, i32) {
    %c0_i32 = arith.constant 0 : i32
    %c0_i32_0 = arith.constant 0 : i32
    %c0_i32_1 = arith.constant 0 : i32
    return %c0_i32, %c0_i32_0 : i32, i32
  }
  func.func @transform_20(%arg0: i32) -> (i32, i32) {
    %c0_i32 = arith.constant 0 : i32
    %c0_i32_0 = arith.constant 0 : i32
    %c0_i32_1 = arith.constant 0 : i32
    return %c0_i32, %c0_i32_0 : i32, i32
  }
  func.func @transform_21(%arg0: i32) -> (i32, i32) {
    %c0_i32 = arith.constant 0 : i32
    %c0_i32_0 = arith.constant 0 : i32
    %c0_i32_1 = arith.constant 0 : i32
    return %c0_i32, %c0_i32_0 : i32, i32
  }
  func.func @transform_22(%arg0: i32) -> (i32, i32) {
    %c0_i32 = arith.constant 0 : i32
    %c0_i32_0 = arith.constant 0 : i32
    %c0_i32_1 = arith.constant 0 : i32
    return %c0_i32, %c0_i32_0 : i32, i32
  }
  func.func @transform_23(%arg0: i32) -> (i32, i32) {
    %c0_i32 = arith.constant 0 : i32
    %c0_i32_0 = arith.constant 0 : i32
    %c0_i32_1 = arith.constant 0 : i32
    return %c0_i32, %c0_i32_0 : i32, i32
  }
  func.func @transform_24(%arg0: i32) -> (i32, i32) {
    %c0_i32 = arith.constant 0 : i32
    %c0_i32_0 = arith.constant 0 : i32
    %c0_i32_1 = arith.constant 0 : i32
    return %c0_i32, %c0_i32_0 : i32, i32
  }
  func.func @transform_25(%arg0: i32) -> (i32, i32) {
    %c0_i32 = arith.constant 0 : i32
    %c0_i32_0 = arith.constant 0 : i32
    %c0_i32_1 = arith.constant 0 : i32
    return %c0_i32, %c0_i32_0 : i32, i32
  }
  func.func @transform_26(%arg0: i32) -> (i32, i32) {
    %c0_i32 = arith.constant 0 : i32
    %c0_i32_0 = arith.constant 0 : i32
    %c0_i32_1 = arith.constant 0 : i32
    return %c0_i32, %c0_i32_0 : i32, i32
  }
  func.func @transform_27(%arg0: i32) -> (i32, i32, i32) {
    %c0_i32 = arith.constant 0 : i32
    %c0_i32_0 = arith.constant 0 : i32
    %c0_i32_1 = arith.constant 0 : i32
    return %arg0, %c0_i32, %c0_i32_0 : i32, i32, i32
  }
}

</mosaic_0001>

<llo_original>
// kernel: custom-call.20
$region0: #{custom-call.20}
  %s0 = inlined_call_operand.vmem [shape: s32[16,2], index: 0, kind: output, shape index: {}]

// kernel: custom-call.16
$region0: #{custom-call.16}
  %s0 = inlined_call_operand.vmem [shape: f32[2,64], index: 0, kind: output, shape index: {}]

// kernel: pointnet_forward.2
$region0: #{pointnet_forward.2}
  #allocation0 [shape = 'u32[]', space=smem, size = 0x4, offset = 0x4, fixed_abs, tag = 'smem constant byte address 0x4 - core index']
  #allocation1 [shape = 'u32[144,128]{1,0:T(1,128)}', space=vmem, size = 0x12000, scoped, tag = 'internal scratch']
  %s0 = inlined_call_operand.vmem [shape: f32[256,3], index: 0, kind: input, shape index: {}]
  %s1 = inlined_call_operand.vmem [shape: f32[256,32], index: 1, kind: input, shape index: {}]
  %s2 = inlined_call_operand.vmem [shape: bf16[48,32], index: 2, kind: input, shape index: {}]
  %s3 = inlined_call_operand.vmem [shape: bf16[3,32], index: 3, kind: input, shape index: {}]
  %s4 = inlined_call_operand.vmem [shape: bf16[32,32], index: 4, kind: input, shape index: {}]
  %s5 = inlined_call_operand.vmem [shape: f32[1,32], index: 5, kind: input, shape index: {}]
  %s6 = inlined_call_operand.vmem [shape: bf16[32,64], index: 6, kind: input, shape index: {}]
  %s7 = inlined_call_operand.vmem [shape: f32[1,64], index: 7, kind: input, shape index: {}]
  %s8 = inlined_call_operand.vmem [shape: bf16[64,32], index: 8, kind: input, shape index: {}]
  %s9 = inlined_call_operand.vmem [shape: f32[1,32], index: 9, kind: input, shape index: {}]
  %s10 = inlined_call_operand.vmem [shape: bf16[16,16], index: 10, kind: input, shape index: {}]
  %s11 = inlined_call_operand.vmem [shape: bf16[16,24], index: 11, kind: input, shape index: {}]
  %s12 = inlined_call_operand.vmem [shape: f32[16,1], index: 12, kind: input, shape index: {}]
  %s13 = inlined_call_operand.vmem [shape: f32[32,32], index: 13, kind: output, shape index: {}]
  %s14 = sld [smem:[#allocation0]]
  $region85: #{pointnet_forward.2} parent=0
    _
  %s16 = ssub.s32 1, %s14
  %s17 = scalar_select 0, %s16, %s14
  loop: start=0, step=1, limit=4
  $region2: #{pointnet_forward.2} parent=0 // loop_pre_header
    _
  $region3: #{pointnet_forward.2} parent=0 // loop_header
    %s19 = sphi 0, %s23
    %p20 = scmp.ge.s32.totalorder %s19, 4
    %s29 = sphi 0, %s31
    %s32 = sphi 0, %s29
    %s33 = sphi 0, %s32
    %s49 = sphi 0, %s33
    %s55 = sphi 0, %s57
    %s58 = sphi 0, %s55
    %s59 = sphi 0, %s58
    %s75 = sphi 0, %s59
    %s81 = sphi 0, %s83
    %s84 = sphi 0, %s81
    %s85 = sphi 0, %s84
    %s101 = sphi 0, %s85
    %s105 = sphi 0, %s105
    %s107 = sphi 0, %s105
    %s108 = sphi 0, %s107
    %s122 = sphi 0, %s108
    %s126 = sphi 0, %s126
    %s128 = sphi 0, %s126
    %s129 = sphi 0, %s128
    %s143 = sphi 0, %s129
    %s147 = sphi 0, %s147
    %s149 = sphi 0, %s147
    %s150 = sphi 0, %s149
    %s164 = sphi 0, %s150
    %s168 = sphi 0, %s168
    %s170 = sphi 0, %s168
    %s171 = sphi 0, %s170
    %s185 = sphi 0, %s171
    %s189 = sphi 0, %s189
    %s191 = sphi 0, %s189
    %s192 = sphi 0, %s191
    %s206 = sphi 0, %s192
    %s210 = sphi 0, %s210
    %s212 = sphi 0, %s210
    %s213 = sphi 0, %s212
    %s227 = sphi 0, %s213
    %s231 = sphi 0, %s231
    %s233 = sphi 0, %s231
    %s234 = sphi 0, %s233
    %s248 = sphi 0, %s234
    %s252 = sphi 0, %s252
    %s254 = sphi 0, %s252
    %s255 = sphi 0, %s254
    %s269 = sphi 0, %s255
    %s273 = sphi 0, %s273
    %s275 = sphi 0, %s273
    %s276 = sphi 0, %s275
    %s290 = sphi 0, %s276
    %s294 = sphi 0, %s294
    %s296 = sphi 0, %s294
    %s297 = sphi 0, %s296
    %s311 = sphi 0, %s297
    %s317 = sphi 0, %s319
    %s320 = sphi 0, %s317
    %s321 = sphi 0, %s320
    %s337 = sphi 0, %s321
  $region4: #{pointnet_forward.2} parent=0 // loop_header_branch
    %22 = sbr.rel (%p20) target = $region8
  $region5: #{pointnet_forward.2} parent=0 // loop_body
    %s24 = ssub.s32 %s19, 1
    %s25 = ssub.s32 %s19, 2
    %s26 = sadd.s32 %s19, 1
    %s27 = ssub.s32 %s19, %s26
    %p28 = scmp.eq.s32.totalorder %s27, 0
    %s30 = sadd.s32 %s29, 1
    %s31 = scalar_select %p28, %s29, %s30
    %p34 = pneg %p28
    %p35 = scmp.eq.s32.totalorder %s19, 1
    %p36 = por %p34, %p35
    %p37 = scmp.ne.s32.totalorder %s29, %s32
    %p38 = scmp.eq.s32.totalorder %s19, 0
    %p39 = por %p37, %p38
    %p40 = scmp.ne.s32.totalorder %s29, %s32
    %p41 = scmp.eq.s32.totalorder %s24, 1
    %p42 = por %p40, %p41
    %p43 = scmp.ne.s32.totalorder %s32, %s33
    %p44 = scmp.eq.s32.totalorder %s24, 0
    %p45 = por %p43, %p44
    %p46 = scmp.ne.s32.totalorder %s32, %s33
    %p47 = scmp.eq.s32.totalorder %s25, 1
    %p48 = por %p46, %p47
    %p50 = scmp.ne.s32.totalorder %s33, %s49
    %p51 = scmp.eq.s32.totalorder %s25, 0
    %p52 = por %p50, %p51
    %s53 = ssub.s32 %s19, %s26
    %p54 = scmp.eq.s32.totalorder %s53, 0
    %s56 = sadd.s32 %s55, 1
    %s57 = scalar_select %p54, %s55, %s56
    %p60 = pneg %p54
    %p61 = scmp.eq.s32.totalorder %s19, 1
    %p62 = por %p60, %p61
    %p63 = scmp.ne.s32.totalorder %s55, %s58
    %p64 = scmp.eq.s32.totalorder %s19, 0
    %p65 = por %p63, %p64
    %p66 = scmp.ne.s32.totalorder %s55, %s58
    %p67 = scmp.eq.s32.totalorder %s24, 1
    %p68 = por %p66, %p67
    %p69 = scmp.ne.s32.totalorder %s58, %s59
    %p70 = scmp.eq.s32.totalorder %s24, 0
    %p71 = por %p69, %p70
    %p72 = scmp.ne.s32.totalorder %s58, %s59
    %p73 = scmp.eq.s32.totalorder %s25, 1
    %p74 = por %p72, %p73
    %p76 = scmp.ne.s32.totalorder %s59, %s75
    %p77 = scmp.eq.s32.totalorder %s25, 0
    %p78 = por %p76, %p77
    %s79 = ssub.s32 %s19, %s26
    %p80 = scmp.eq.s32.totalorder %s79, 0
    %s82 = sadd.s32 %s81, 1
    %s83 = scalar_select %p80, %s81, %s82
    %p86 = pneg %p80
    %p87 = scmp.eq.s32.totalorder %s19, 1
    %p88 = por %p86, %p87
    %p89 = scmp.ne.s32.totalorder %s81, %s84
    %p90 = scmp.eq.s32.totalorder %s19, 0
    %p91 = por %p89, %p90
    %p92 = scmp.ne.s32.totalorder %s81, %s84
    %p93 = scmp.eq.s32.totalorder %s24, 1
    %p94 = por %p92, %p93
    %p95 = scmp.ne.s32.totalorder %s84, %s85
    %p96 = scmp.eq.s32.totalorder %s24, 0
    %p97 = por %p95, %p96
    %p98 = scmp.ne.s32.totalorder %s84, %s85
    %p99 = scmp.eq.s32.totalorder %s25, 1
    %p100 = por %p98, %p99
    %p102 = scmp.ne.s32.totalorder %s85, %s101
    %p103 = scmp.eq.s32.totalorder %s25, 0
    %p104 = por %p102, %p103
    %s106 = sadd.s32 %s105, 1
    %p109 = scmp.eq.s32.totalorder %s19, 1
    %p110 = scmp.ne.s32.totalorder %s105, %s107
    %p111 = scmp.eq.s32.totalorder %s19, 0
    %p112 = por %p110, %p111
    %p113 = scmp.ne.s32.totalorder %s105, %s107
    %p114 = scmp.eq.s32.totalorder %s24, 1
    %p115 = por %p113, %p114
    %p116 = scmp.ne.s32.totalorder %s107, %s108
    %p117 = scmp.eq.s32.totalorder %s24, 0
    %p118 = por %p116, %p117
    %p119 = scmp.ne.s32.totalorder %s107, %s108
    %p120 = scmp.eq.s32.totalorder %s25, 1
    %p121 = por %p119, %p120
    %p123 = scmp.ne.s32.totalorder %s108, %s122
    %p124 = scmp.eq.s32.totalorder %s25, 0
    %p125 = por %p123, %p124
    %s127 = sadd.s32 %s126, 1
    %p130 = scmp.eq.s32.totalorder %s19, 1
    %p131 = scmp.ne.s32.totalorder %s126, %s128
    %p132 = scmp.eq.s32.totalorder %s19, 0
    %p133 = por %p131, %p132
    %p134 = scmp.ne.s32.totalorder %s126, %s128
    %p135 = scmp.eq.s32.totalorder %s24, 1
    %p136 = por %p134, %p135
    %p137 = scmp.ne.s32.totalorder %s128, %s129
    %p138 = scmp.eq.s32.totalorder %s24, 0
    %p139 = por %p137, %p138
    %p140 = scmp.ne.s32.totalorder %s128, %s129
    %p141 = scmp.eq.s32.totalorder %s25, 1
    %p142 = por %p140, %p141
    %p144 = scmp.ne.s32.totalorder %s129, %s143
    %p145 = scmp.eq.s32.totalorder %s25, 0
    %p146 = por %p144, %p145
    %s148 = sadd.s32 %s147, 1
    %p151 = scmp.eq.s32.totalorder %s19, 1
    %p152 = scmp.ne.s32.totalorder %s147, %s149
    %p153 = scmp.eq.s32.totalorder %s19, 0
    %p154 = por %p152, %p153
    %p155 = scmp.ne.s32.totalorder %s147, %s149
    %p156 = scmp.eq.s32.totalorder %s24, 1
    %p157 = por %p155, %p156
    %p158 = scmp.ne.s32.totalorder %s149, %s150
    %p159 = scmp.eq.s32.totalorder %s24, 0
    %p160 = por %p158, %p159
    %p161 = scmp.ne.s32.totalorder %s149, %s150
    %p162 = scmp.eq.s32.totalorder %s25, 1
    %p163 = por %p161, %p162
    %p165 = scmp.ne.s32.totalorder %s150, %s164
    %p166 = scmp.eq.s32.totalorder %s25, 0
    %p167 = por %p165, %p166
    %s169 = sadd.s32 %s168, 1
    %p172 = scmp.eq.s32.totalorder %s19, 1
    %p173 = scmp.ne.s32.totalorder %s168, %s170
    %p174 = scmp.eq.s32.totalorder %s19, 0
    %p175 = por %p173, %p174
    %p176 = scmp.ne.s32.totalorder %s168, %s170
    %p177 = scmp.eq.s32.totalorder %s24, 1
    %p178 = por %p176, %p177
    %p179 = scmp.ne.s32.totalorder %s170, %s171
    %p180 = scmp.eq.s32.totalorder %s24, 0
    %p181 = por %p179, %p180
    %p182 = scmp.ne.s32.totalorder %s170, %s171
    %p183 = scmp.eq.s32.totalorder %s25, 1
    %p184 = por %p182, %p183
    %p186 = scmp.ne.s32.totalorder %s171, %s185
    %p187 = scmp.eq.s32.totalorder %s25, 0
    %p188 = por %p186, %p187
    %s190 = sadd.s32 %s189, 1
    %p193 = scmp.eq.s32.totalorder %s19, 1
    %p194 = scmp.ne.s32.totalorder %s189, %s191
    %p195 = scmp.eq.s32.totalorder %s19, 0
    %p196 = por %p194, %p195
    %p197 = scmp.ne.s32.totalorder %s189, %s191
    %p198 = scmp.eq.s32.totalorder %s24, 1
    %p199 = por %p197, %p198
    %p200 = scmp.ne.s32.totalorder %s191, %s192
    %p201 = scmp.eq.s32.totalorder %s24, 0
    %p202 = por %p200, %p201
    %p203 = scmp.ne.s32.totalorder %s191, %s192
    %p204 = scmp.eq.s32.totalorder %s25, 1
    %p205 = por %p203, %p204
    %p207 = scmp.ne.s32.totalorder %s192, %s206
    %p208 = scmp.eq.s32.totalorder %s25, 0
    %p209 = por %p207, %p208
    %s211 = sadd.s32 %s210, 1
    %p214 = scmp.eq.s32.totalorder %s19, 1
    %p215 = scmp.ne.s32.totalorder %s210, %s212
    %p216 = scmp.eq.s32.totalorder %s19, 0
    %p217 = por %p215, %p216
    %p218 = scmp.ne.s32.totalorder %s210, %s212
    %p219 = scmp.eq.s32.totalorder %s24, 1
    %p220 = por %p218, %p219
    %p221 = scmp.ne.s32.totalorder %s212, %s213
    %p222 = scmp.eq.s32.totalorder %s24, 0
    %p223 = por %p221, %p222
    %p224 = scmp.ne.s32.totalorder %s212, %s213
    %p225 = scmp.eq.s32.totalorder %s25, 1
    %p226 = por %p224, %p225
    %p228 = scmp.ne.s32.totalorder %s213, %s227
    %p229 = scmp.eq.s32.totalorder %s25, 0
    %p230 = por %p228, %p229
    %s232 = sadd.s32 %s231, 1
    %p235 = scmp.eq.s32.totalorder %s19, 1
    %p236 = scmp.ne.s32.totalorder %s231, %s233
    %p237 = scmp.eq.s32.totalorder %s19, 0
    %p238 = por %p236, %p237
    %p239 = scmp.ne.s32.totalorder %s231, %s233
    %p240 = scmp.eq.s32.totalorder %s24, 1
    %p241 = por %p239, %p240
    %p242 = scmp.ne.s32.totalorder %s233, %s234
    %p243 = scmp.eq.s32.totalorder %s24, 0
    %p244 = por %p242, %p243
    %p245 = scmp.ne.s32.totalorder %s233, %s234
    %p246 = scmp.eq.s32.totalorder %s25, 1
    %p247 = por %p245, %p246
    %p249 = scmp.ne.s32.totalorder %s234, %s248
    %p250 = scmp.eq.s32.totalorder %s25, 0
    %p251 = por %p249, %p250
    %s253 = sadd.s32 %s252, 1
    %p256 = scmp.eq.s32.totalorder %s19, 1
    %p257 = scmp.ne.s32.totalorder %s252, %s254
    %p258 = scmp.eq.s32.totalorder %s19, 0
    %p259 = por %p257, %p258
    %p260 = scmp.ne.s32.totalorder %s252, %s254
    %p261 = scmp.eq.s32.totalorder %s24, 1
    %p262 = por %p260, %p261
    %p263 = scmp.ne.s32.totalorder %s254, %s255
    %p264 = scmp.eq.s32.totalorder %s24, 0
    %p265 = por %p263, %p264
    %p266 = scmp.ne.s32.totalorder %s254, %s255
    %p267 = scmp.eq.s32.totalorder %s25, 1
    %p268 = por %p266, %p267
    %p270 = scmp.ne.s32.totalorder %s255, %s269
    %p271 = scmp.eq.s32.totalorder %s25, 0
    %p272 = por %p270, %p271
    %s274 = sadd.s32 %s273, 1
    %p277 = scmp.eq.s32.totalorder %s19, 1
    %p278 = scmp.ne.s32.totalorder %s273, %s275
    %p279 = scmp.eq.s32.totalorder %s19, 0
    %p280 = por %p278, %p279
    %p281 = scmp.ne.s32.totalorder %s273, %s275
    %p282 = scmp.eq.s32.totalorder %s24, 1
    %p283 = por %p281, %p282
    %p284 = scmp.ne.s32.totalorder %s275, %s276
    %p285 = scmp.eq.s32.totalorder %s24, 0
    %p286 = por %p284, %p285
    %p287 = scmp.ne.s32.totalorder %s275, %s276
    %p288 = scmp.eq.s32.totalorder %s25, 1
    %p289 = por %p287, %p288
    %p291 = scmp.ne.s32.totalorder %s276, %s290
    %p292 = scmp.eq.s32.totalorder %s25, 0
    %p293 = por %p291, %p292
    %s295 = sadd.s32 %s294, 1
    %p298 = scmp.eq.s32.totalorder %s19, 1
    %p299 = scmp.ne.s32.totalorder %s294, %s296
    %p300 = scmp.eq.s32.totalorder %s19, 0
    %p301 = por %p299, %p300
    %p302 = scmp.ne.s32.totalorder %s294, %s296
    %p303 = scmp.eq.s32.totalorder %s24, 1
    %p304 = por %p302, %p303
    %p305 = scmp.ne.s32.totalorder %s296, %s297
    %p306 = scmp.eq.s32.totalorder %s24, 0
    %p307 = por %p305, %p306
    %p308 = scmp.ne.s32.totalorder %s296, %s297
    %p309 = scmp.eq.s32.totalorder %s25, 1
    %p310 = por %p308, %p309
    %p312 = scmp.ne.s32.totalorder %s297, %s311
    %p313 = scmp.eq.s32.totalorder %s25, 0
    %p314 = por %p312, %p313
    %s315 = ssub.s32 %s19, %s26
    %p316 = scmp.eq.s32.totalorder %s315, 0
    %s318 = sadd.s32 %s317, 1
    %s319 = scalar_select %p316, %s317, %s318
    %p322 = pneg %p316
    %p323 = scmp.eq.s32.totalorder %s19, 1
    %p324 = por %p322, %p323
    %p325 = scmp.ne.s32.totalorder %s317, %s320
    %p326 = scmp.eq.s32.totalorder %s19, 0
    %p327 = por %p325, %p326
    %p328 = scmp.ne.s32.totalorder %s317, %s320
    %p329 = scmp.eq.s32.totalorder %s24, 1
    %p330 = por %p328, %p329
    %p331 = scmp.ne.s32.totalorder %s320, %s321
    %p332 = scmp.eq.s32.totalorder %s24, 0
    %p333 = por %p331, %p332
    %p334 = scmp.ne.s32.totalorder %s320, %s321
    %p335 = scmp.eq.s32.totalorder %s25, 1
    %p336 = por %p334, %p335
    %p338 = scmp.ne.s32.totalorder %s321, %s337
    %p339 = scmp.eq.s32.totalorder %s25, 0
    %p340 = por %p338, %p339
    %p341 = scmp.le.s32.totalorder 1, %s19
    %p342 = scmp.lt.s32.totalorder %s19, 3
    %p343 = pnand %p341, %p342
    %p344 = pneg %p343
    // Predicated region
    $region9: #{pointnet_forward.2} parent=5 // pred_check
      _
    $region10: #{pointnet_forward.2} parent=5 // pred_check_branch
      %346 = sbr.rel (%p343) target = $region12
    $region11: #{pointnet_forward.2} parent=5 // pred_region
      %s347 = ssub.s32 %s19, 1
      // Predicated region
      $region13: #{pointnet_forward.2} parent=11 // pred_check
        %p348 = pneg %p118
      $region14: #{pointnet_forward.2} parent=11 // pred_check_branch
        %350 = sbr.rel (%p348) target = $region16
      $region15: #{pointnet_forward.2} parent=11 // pred_region
        _
      $region16: #{pointnet_forward.2} parent=11 // pred_fallthru
        _
      // Predicated region
      $region17: #{pointnet_forward.2} parent=11 // pred_check
        %p351 = pneg %p139
      $region18: #{pointnet_forward.2} parent=11 // pred_check_branch
        %353 = sbr.rel (%p351) target = $region20
      $region19: #{pointnet_forward.2} parent=11 // pred_region
        _
      $region20: #{pointnet_forward.2} parent=11 // pred_fallthru
        _
      // Predicated region
      $region21: #{pointnet_forward.2} parent=11 // pred_check
        %p354 = pneg %p160
      $region22: #{pointnet_forward.2} parent=11 // pred_check_branch
        %356 = sbr.rel (%p354) target = $region24
      $region23: #{pointnet_forward.2} parent=11 // pred_region
        _
      $region24: #{pointnet_forward.2} parent=11 // pred_fallthru
        _
      // Predicated region
      $region25: #{pointnet_forward.2} parent=11 // pred_check
        %p357 = pneg %p181
      $region26: #{pointnet_forward.2} parent=11 // pred_check_branch
        %359 = sbr.rel (%p357) target = $region28
      $region27: #{pointnet_forward.2} parent=11 // pred_region
        _
      $region28: #{pointnet_forward.2} parent=11 // pred_fallthru
        _
      // Predicated region
      $region29: #{pointnet_forward.2} parent=11 // pred_check
        %p360 = pneg %p202
      $region30: #{pointnet_forward.2} parent=11 // pred_check_branch
        %362 = sbr.rel (%p360) target = $region32
      $region31: #{pointnet_forward.2} parent=11 // pred_region
        _
      $region32: #{pointnet_forward.2} parent=11 // pred_fallthru
        _
      // Predicated region
      $region33: #{pointnet_forward.2} parent=11 // pred_check
        %p363 = pneg %p223
      $region34: #{pointnet_forward.2} parent=11 // pred_check_branch
        %365 = sbr.rel (%p363) target = $region36
      $region35: #{pointnet_forward.2} parent=11 // pred_region
        _
      $region36: #{pointnet_forward.2} parent=11 // pred_fallthru
        _
      // Predicated region
      $region37: #{pointnet_forward.2} parent=11 // pred_check
        %p366 = pneg %p244
      $region38: #{pointnet_forward.2} parent=11 // pred_check_branch
        %368 = sbr.rel (%p366) target = $region40
      $region39: #{pointnet_forward.2} parent=11 // pred_region
        _
      $region40: #{pointnet_forward.2} parent=11 // pred_fallthru
        _
      // Predicated region
      $region41: #{pointnet_forward.2} parent=11 // pred_check
        %p369 = pneg %p265
      $region42: #{pointnet_forward.2} parent=11 // pred_check_branch
        %371 = sbr.rel (%p369) target = $region44
      $region43: #{pointnet_forward.2} parent=11 // pred_region
        _
      $region44: #{pointnet_forward.2} parent=11 // pred_fallthru
        _
      // Predicated region
      $region45: #{pointnet_forward.2} parent=11 // pred_check
        %p372 = pneg %p286
      $region46: #{pointnet_forward.2} parent=11 // pred_check_branch
        %374 = sbr.rel (%p372) target = $region48
      $region47: #{pointnet_forward.2} parent=11 // pred_region
        _
      $region48: #{pointnet_forward.2} parent=11 // pred_fallthru
        _
      // Predicated region
      $region49: #{pointnet_forward.2} parent=11 // pred_check
        %p375 = pneg %p307
      $region50: #{pointnet_forward.2} parent=11 // pred_check_branch
        %377 = sbr.rel (%p375) target = $region52
      $region51: #{pointnet_forward.2} parent=11 // pred_region
        _
      $region52: #{pointnet_forward.2} parent=11 // pred_fallthru
        _
    $region12: #{pointnet_forward.2} parent=5 // pred_fallthru
      _
    %p378 = scmp.lt.s32.totalorder %s19, 2
    // Predicated region
    $region53: #{pointnet_forward.2} parent=5 // pred_check
      %p379 = pneg %p378
    $region54: #{pointnet_forward.2} parent=5 // pred_check_branch
      %381 = sbr.rel (%p379) target = $region56
    $region55: #{pointnet_forward.2} parent=5 // pred_region
      // Predicated region
      $region57: #{pointnet_forward.2} parent=55 // pred_check
        %p382 = pneg %p39
      $region58: #{pointnet_forward.2} parent=55 // pred_check_branch
        %384 = sbr.rel (%p382) target = $region60
      $region59: #{pointnet_forward.2} parent=55 // pred_region
        %s385 = smul.u32 16, %s19
        %p386 = scmp.lt.s32.totalorder %s385, 31
        %s387 = scalar_select %p386, %s385, 31
        %s388 = smul.addr %s387, 8
        %s389 = scalar_lea.vmem %s0, %s388
        %s390 = smul.u32 16, %s19
      $region60: #{pointnet_forward.2} parent=55 // pred_fallthru
        _
      // Predicated region
      $region61: #{pointnet_forward.2} parent=55 // pred_check
        %p391 = pneg %p65
      $region62: #{pointnet_forward.2} parent=55 // pred_check_branch
        %393 = sbr.rel (%p391) target = $region64
      $region63: #{pointnet_forward.2} parent=55 // pred_region
        %s394 = smul.u32 16, %s19
        %p395 = scmp.lt.s32.totalorder %s394, 31
        %s396 = scalar_select %p395, %s394, 31
        %s397 = smul.addr %s396, 8
        %s398 = scalar_lea.vmem %s1, %s397
        %s399 = smul.u32 16, %s19
      $region64: #{pointnet_forward.2} parent=55 // pred_fallthru
        _
      // Predicated region
      $region65: #{pointnet_forward.2} parent=55 // pred_check
        %p400 = pneg %p91
      $region66: #{pointnet_forward.2} parent=55 // pred_check_branch
        %402 = sbr.rel (%p400) target = $region68
      $region67: #{pointnet_forward.2} parent=55 // pred_region
        %s403 = smul.u32 3, %s19
        %p404 = scmp.lt.s32.totalorder %s403, 5
        %s405 = scalar_select %p404, %s403, 5
        %s406 = smul.addr %s405, 4
        %s407 = scalar_lea.vmem %s2, %s406
        %s408 = smul.u32 3, %s19
      $region68: #{pointnet_forward.2} parent=55 // pred_fallthru
        _
    $region56: #{pointnet_forward.2} parent=5 // pred_fallthru
      _
    %p409 = scmp.le.s32.totalorder 1, %s19
    %p410 = scmp.lt.s32.totalorder %s19, 3
    %p411 = pnand %p409, %p410
    %p412 = pneg %p411
    // Predicated region
    $region69: #{pointnet_forward.2} parent=5 // pred_check
      _
    $region70: #{pointnet_forward.2} parent=5 // pred_check_branch
      %414 = sbr.rel (%p411) target = $region72
    $region71: #{pointnet_forward.2} parent=5 // pred_region
      %s415 = ssub.s32 %s19, 1
      %s416 = smul.u32 16, %s24
      %p417 = scmp.lt.s32.totalorder %s416, 31
      %s418 = scalar_select %p417, %s416, 31
      %s419 = smul.addr %s418, 8
      %s420 = scalar_lea.vmem %s0, %s419
      %p421 = pneg %p45
      %p422 = pneg %p42
      %s423 = smul.u32 16, %s24
      %p424 = scmp.lt.s32.totalorder %s423, 31
      %s425 = scalar_select %p424, %s423, 31
      %s426 = smul.addr %s425, 8
      %s427 = scalar_lea.vmem %s1, %s426
      %p428 = pneg %p71
      %p429 = pneg %p68
      %s430 = smul.u32 3, %s24
      %p431 = scmp.lt.s32.totalorder %s430, 5
      %s432 = scalar_select %p431, %s430, 5
      %s433 = smul.addr %s432, 4
      %s434 = scalar_lea.vmem %s2, %s433
      %p435 = pneg %p97
      %p436 = pneg %p94
      %p437 = pneg %p118
      %p438 = pneg %p115
      %p439 = pneg %p139
      %p440 = pneg %p136
      %p441 = pneg %p160
      %p442 = pneg %p157
      %p443 = pneg %p181
      %p444 = pneg %p178
      %p445 = pneg %p202
      %p446 = pneg %p199
      %p447 = pneg %p223
      %p448 = pneg %p220
      %p449 = pneg %p244
      %p450 = pneg %p241
      %p451 = pneg %p265
      %p452 = pneg %p262
      %p453 = pneg %p286
      %p454 = pneg %p283
      %p455 = pneg %p307
      %p456 = pneg %p304
      %p457 = pneg %p333
      %p458 = pneg %p330
      %s459 = smul.u32 2, %s24
      %p460 = scmp.lt.s32.totalorder %s459, 3
      %s461 = scalar_select %p460, %s459, 3
      %s462 = smul.addr %s461, 8
      %s463 = scalar_lea.vmem %s13, %s462
      %s464 = smul.u32 16, %s24
      %p465 = scmp.lt.s32.totalorder %s464, 31
      %s466 = scalar_select %p465, %s464, 31
      %s467 = smul.addr %s466, 8
      %s468 = scalar_lea.vmem %s0, %s467
      %s469 = smul.u32 16, %s24
      %s470 = smul.u32 16, %s24
      %p471 = scmp.lt.s32.totalorder %s470, 31
      %s472 = scalar_select %p471, %s470, 31
      %s473 = smul.addr %s472, 8
      %s474 = scalar_lea.vmem %s1, %s473
      %s475 = smul.u32 16, %s24
      %s476 = smul.u32 3, %s24
      %p477 = scmp.lt.s32.totalorder %s476, 5
      %s478 = scalar_select %p477, %s476, 5
      %s479 = smul.addr %s478, 4
      %s480 = scalar_lea.vmem %s2, %s479
      %s481 = smul.u32 3, %s24
      %s482 = smul.u32 2, %s24
      %p483 = scmp.lt.s32.totalorder %s482, 3
      %s484 = scalar_select %p483, %s482, 3
      %s485 = smul.addr %s484, 8
      %s486 = scalar_lea.vmem %s13, %s485
      %s487 = smul.u32 2, %s24
      %v489 = vld [vmem:[%s468] sm:$0xff]
      %v490 = vld [vmem:[%s468 + $0x8] sm:$0xff]
      %v491 = vld [vmem:[%s468 + $0x10] sm:$0xff]
      %v492 = vld [vmem:[%s468 + $0x18] sm:$0xff]
      %v493 = vld [vmem:[%s468 + $0x20] sm:$0xff]
      %v494 = vld [vmem:[%s468 + $0x28] sm:$0xff]
      %v495 = vld [vmem:[%s468 + $0x30] sm:$0xff]
      %v496 = vld [vmem:[%s468 + $0x38] sm:$0xff]
      %v497 = vld [vmem:[%s468 + $0x40] sm:$0xff]
      %v498 = vld [vmem:[%s468 + $0x48] sm:$0xff]
      %v499 = vld [vmem:[%s468 + $0x50] sm:$0xff]
      %v500 = vld [vmem:[%s468 + $0x58] sm:$0xff]
      %v501 = vld [vmem:[%s468 + $0x60] sm:$0xff]
      %v502 = vld [vmem:[%s468 + $0x68] sm:$0xff]
      %v503 = vld [vmem:[%s468 + $0x70] sm:$0xff]
      %v504 = vld [vmem:[%s468 + $0x78] sm:$0xff]
      %v505 = vpack.c.bf16 %v490, %v489
      %v506 = vpack.c.bf16 %v492, %v491
      %v507 = vpack.c.bf16 %v494, %v493
      %v508 = vpack.c.bf16 %v496, %v495
      %v509 = vpack.c.bf16 %v498, %v497
      %v510 = vpack.c.bf16 %v500, %v499
      %v511 = vpack.c.bf16 %v502, %v501
      %v512 = vpack.c.bf16 %v504, %v503
      %v513 = vld [vmem:[%s474] sm:$0xff]
      %v514 = vld [vmem:[%s474 + $0x8] sm:$0xff]
      %v515 = vld [vmem:[%s474 + $0x10] sm:$0xff]
      %v516 = vld [vmem:[%s474 + $0x18] sm:$0xff]
      %v517 = vld [vmem:[%s474 + $0x20] sm:$0xff]
      %v518 = vld [vmem:[%s474 + $0x28] sm:$0xff]
      %v519 = vld [vmem:[%s474 + $0x30] sm:$0xff]
      %v520 = vld [vmem:[%s474 + $0x38] sm:$0xff]
      %v521 = vld [vmem:[%s474 + $0x40] sm:$0xff]
      %v522 = vld [vmem:[%s474 + $0x48] sm:$0xff]
      %v523 = vld [vmem:[%s474 + $0x50] sm:$0xff]
      %v524 = vld [vmem:[%s474 + $0x58] sm:$0xff]
      %v525 = vld [vmem:[%s474 + $0x60] sm:$0xff]
      %v526 = vld [vmem:[%s474 + $0x68] sm:$0xff]
      %v527 = vld [vmem:[%s474 + $0x70] sm:$0xff]
      %v528 = vld [vmem:[%s474 + $0x78] sm:$0xff]
      %v529 = vpack.c.bf16 %v514, %v513
      %v530 = vpack.c.bf16 %v516, %v515
      %v531 = vpack.c.bf16 %v518, %v517
      %v532 = vpack.c.bf16 %v520, %v519
      %v533 = vpack.c.bf16 %v522, %v521
      %v534 = vpack.c.bf16 %v524, %v523
      %v535 = vpack.c.bf16 %v526, %v525
      %v536 = vpack.c.bf16 %v528, %v527
      %v537 = vld [vmem:[%s3] sm:$0x3]
      %v538 = vld [vmem:[%s4] sm:$0xf]
      %v539 = vld [vmem:[%s4 + $0x4] sm:$0xf]
      %v540 = vld [vmem:[%s4 + $0x8] sm:$0xf]
      %v541 = vld [vmem:[%s4 + $0xc] sm:$0xf]
      %v546 = vunpack.c.l.b16 %v538
      %v547 = vunpack.c.l.b16 %v539
      %v548 = vunpack.c.l.b16 %v540
      %v549 = vunpack.c.l.b16 %v541
      %v550 = vpack.c.b16 %v547, %v546
      %v551 = vpack.c.b16 %v549, %v548
      %vm554 = vcmask 261120
      %v556 = vsel %vm554, %v529, 0
      %v559 = vsel %vm554, %v530, 0
      %v562 = vsel %vm554, %v531, 0
      %v565 = vsel %vm554, %v532, 0
      %v568 = vsel %vm554, %v533, 0
      %v571 = vsel %vm554, %v534, 0
      %v574 = vsel %vm554, %v535, 0
      %v577 = vsel %vm554, %v536, 0
      %579 = vmatprep.subr.bf16.mxu0 0
      %580 = vmatpush1.bf16.msra.mxu0 %v550
      %581 = vmatprep.subr.bf16.mxu0 0
      %582 = vmatpush1.bf16.msra.mxu0 %v551
      %583 = vmatprep.subr.bf16.mxu0 0
      %584 = vmatpush1.bf16.msra.mxu0 0
      %585 = vmatprep.subr.bf16.mxu0 0
      %586 = vmatpush1.bf16.msra.mxu0 0
      %587 = vmatprep.subr.bf16.mxu0 0
      %588 = vmatpush1.bf16.msra.mxu0 0
      %589 = vmatprep.subr.bf16.mxu0 0
      %590 = vmatpush1.bf16.msra.mxu0 0
      %591 = vmatprep.subr.bf16.mxu0 0
      %592 = vmatpush1.bf16.msra.mxu0 0
      %593 = vmatprep.subr.bf16.mxu0 0
      %594 = vmatpush1.bf16.msra.mxu0 0
      %595 = vmatprep.subr.bf16.mxu0 0
      %596 = vmatpush1.bf16.msra.mxu0 0
      %597 = vmatprep.subr.bf16.mxu0 0
      %598 = vmatpush1.bf16.msra.mxu0 0
      %599 = vmatprep.subr.bf16.mxu0 0
      %600 = vmatpush1.bf16.msra.mxu0 0
      %601 = vmatprep.subr.bf16.mxu0 0
      %602 = vmatpush1.bf16.msra.mxu0 0
      %603 = vmatprep.subr.bf16.mxu0 0
      %604 = vmatpush1.bf16.msra.mxu0 0
      %605 = vmatprep.subr.bf16.mxu0 0
      %606 = vmatpush1.bf16.msra.mxu0 0
      %607 = vmatprep.subr.bf16.mxu0 0
      %608 = vmatpush1.bf16.msra.mxu0 0
      %609 = vmatprep.subr.bf16.mxu0 0
      %610 = vmatpush1.bf16.msra.mxu0 0
      %611 = vmatprep.mubr.bf16.mxu0 0
      %612 = vmatmul.mubr.bf16.gmra.mrb[0].mxu0 %v556
      %v613 = vpop.f32.mrb[0].mxu0
      %v614 = vadd.f32 0.0, %v613
      %v615 = vpop.f32.mrb[0].mxu0
      %v616 = vpop.f32.mrb[0].mxu0
      %v617 = vadd.f32 0.0, %v616
      %v618 = vpop.f32.mrb[0].mxu0
      %619 = vmatprep.mubr.bf16.mxu0 0
      %620 = vmatmul.mubr.bf16.gmra.mrb[0].mxu0 %v559
      %v621 = vpop.f32.mrb[0].mxu0
      %v622 = vadd.f32 0.0, %v621
      %v623 = vpop.f32.mrb[0].mxu0
      %v624 = vpop.f32.mrb[0].mxu0
      %v625 = vadd.f32 0.0, %v624
      %v626 = vpop.f32.mrb[0].mxu0
      %627 = vmatprep.mubr.bf16.mxu0 0
      %628 = vmatmul.mubr.bf16.gmra.mrb[0].mxu0 %v562
      %v629 = vpop.f32.mrb[0].mxu0
      %v630 = vadd.f32 0.0, %v629
      %v631 = vpop.f32.mrb[0].mxu0
      %v632 = vpop.f32.mrb[0].mxu0
      %v633 = vadd.f32 0.0, %v632
      %v634 = vpop.f32.mrb[0].mxu0
      %635 = vmatprep.mubr.bf16.mxu0 0
      %636 = vmatmul.mubr.bf16.gmra.mrb[0].mxu0 %v565
      %v637 = vpop.f32.mrb[0].mxu0
      %v638 = vadd.f32 0.0, %v637
      %v639 = vpop.f32.mrb[0].mxu0
      %v640 = vpop.f32.mrb[0].mxu0
      %v641 = vadd.f32 0.0, %v640
      %v642 = vpop.f32.mrb[0].mxu0
      %643 = vmatprep.mubr.bf16.mxu0 0
      %644 = vmatmul.mubr.bf16.gmra.mrb[0].mxu0 %v568
      %v645 = vpop.f32.mrb[0].mxu0
      %v646 = vadd.f32 0.0, %v645
      %v647 = vpop.f32.mrb[0].mxu0
      %v648 = vpop.f32.mrb[0].mxu0
      %v649 = vadd.f32 0.0, %v648
      %v650 = vpop.f32.mrb[0].mxu0
      %651 = vmatprep.mubr.bf16.mxu0 0
      %652 = vmatmul.mubr.bf16.gmra.mrb[0].mxu0 %v571
      %v653 = vpop.f32.mrb[0].mxu0
      %v654 = vadd.f32 0.0, %v653
      %v655 = vpop.f32.mrb[0].mxu0
      %v656 = vpop.f32.mrb[0].mxu0
      %v657 = vadd.f32 0.0, %v656
      %v658 = vpop.f32.mrb[0].mxu0
      %659 = vmatprep.mubr.bf16.mxu0 0
      %660 = vmatmul.mubr.bf16.gmra.mrb[0].mxu0 %v574
      %v661 = vpop.f32.mrb[0].mxu0
      %v662 = vadd.f32 0.0, %v661
      %v663 = vpop.f32.mrb[0].mxu0
      %v664 = vpop.f32.mrb[0].mxu0
      %v665 = vadd.f32 0.0, %v664
      %v666 = vpop.f32.mrb[0].mxu0
      %667 = vmatprep.mubr.bf16.mxu0 0
      %668 = vmatmul.mubr.bf16.gmra.mrb[0].mxu0 %v577
      %v669 = vpop.f32.mrb[0].mxu0
      %v670 = vadd.f32 0.0, %v669
      %v671 = vpop.f32.mrb[0].mxu0
      %v672 = vpop.f32.mrb[0].mxu0
      %v673 = vadd.f32 0.0, %v672
      %v674 = vpop.f32.mrb[0].mxu0
      %675 = vdwg.mxu0
      %vm676 = vcmask 23552
      %v678 = vsel %vm676, %v505, 0
      %v681 = vsel %vm676, %v506, 0
      %v684 = vsel %vm676, %v507, 0
      %v687 = vsel %vm676, %v508, 0
      %v690 = vsel %vm676, %v509, 0
      %v693 = vsel %vm676, %v510, 0
      %v696 = vsel %vm676, %v511, 0
      %v699 = vsel %vm676, %v512, 0
      %vm701 = vcmask 1040384
      %vm702 = vcmask 1041408
      %v703 = vsel %vm701, 4294967295, 65535
      %v704 = vsel %vm702, %v703, 0
      %v706 = vand.u32 %v537, %v704
      %708 = vmatprep.subr.bf16.mxu0 0
      %709 = vmatpush1.bf16.msra.mxu0 %v706
      %710 = vmatprep.subr.bf16.mxu0 0
      %711 = vmatpush1.bf16.msra.mxu0 0
      %712 = vmatprep.subr.bf16.mxu0 0
      %713 = vmatpush1.bf16.msra.mxu0 0
      %714 = vmatprep.subr.bf16.mxu0 0
      %715 = vmatpush1.bf16.msra.mxu0 0
      %716 = vmatprep.subr.bf16.mxu0 0
      %717 = vmatpush1.bf16.msra.mxu0 0
      %718 = vmatprep.subr.bf16.mxu0 0
      %719 = vmatpush1.bf16.msra.mxu0 0
      %720 = vmatprep.subr.bf16.mxu0 0
      %721 = vmatpush1.bf16.msra.mxu0 0
      %722 = vmatprep.subr.bf16.mxu0 0
      %723 = vmatpush1.bf16.msra.mxu0 0
      %724 = vmatprep.subr.bf16.mxu0 0
      %725 = vmatpush1.bf16.msra.mxu0 0
      %726 = vmatprep.subr.bf16.mxu0 0
      %727 = vmatpush1.bf16.msra.mxu0 0
      %728 = vmatprep.subr.bf16.mxu0 0
      %729 = vmatpush1.bf16.msra.mxu0 0
      %730 = vmatprep.subr.bf16.mxu0 0
      %731 = vmatpush1.bf16.msra.mxu0 0
      %732 = vmatprep.subr.bf16.mxu0 0
      %733 = vmatpush1.bf16.msra.mxu0 0
      %734 = vmatprep.subr.bf16.mxu0 0
      %735 = vmatpush1.bf16.msra.mxu0 0
      %736 = vmatprep.subr.bf16.mxu0 0
      %737 = vmatpush1.bf16.msra.mxu0 0
      %738 = vmatprep.subr.bf16.mxu0 0
      %739 = vmatpush1.bf16.msra.mxu0 0
      %740 = vmatprep.mubr.bf16.mxu0 0
      %741 = vmatmul.mubr.bf16.gmra.mrb[0].mxu0 %v678
      %v742 = vpop.f32.mrb[0].mxu0
      %v743 = vadd.f32 %v614, %v742
      %v744 = vpop.f32.mrb[0].mxu0
      %v745 = vpop.f32.mrb[0].mxu0
      %v746 = vadd.f32 %v617, %v745
      %v747 = vpop.f32.mrb[0].mxu0
      %748 = vmatprep.mubr.bf16.mxu0 0
      %749 = vmatmul.mubr.bf16.gmra.mrb[0].mxu0 %v681
      %v750 = vpop.f32.mrb[0].mxu0
      %v751 = vadd.f32 %v622, %v750
      %v752 = vpop.f32.mrb[0].mxu0
      %v753 = vpop.f32.mrb[0].mxu0
      %v754 = vadd.f32 %v625, %v753
      %v755 = vpop.f32.mrb[0].mxu0
      %756 = vmatprep.mubr.bf16.mxu0 0
      %757 = vmatmul.mubr.bf16.gmra.mrb[0].mxu0 %v684
      %v758 = vpop.f32.mrb[0].mxu0
      %v759 = vadd.f32 %v630, %v758
      %v760 = vpop.f32.mrb[0].mxu0
      %v761 = vpop.f32.mrb[0].mxu0
      %v762 = vadd.f32 %v633, %v761
      %v763 = vpop.f32.mrb[0].mxu0
      %764 = vmatprep.mubr.bf16.mxu0 0
      %765 = vmatmul.mubr.bf16.gmra.mrb[0].mxu0 %v687
      %v766 = vpop.f32.mrb[0].mxu0
      %v767 = vadd.f32 %v638, %v766
      %v768 = vpop.f32.mrb[0].mxu0
      %v769 = vpop.f32.mrb[0].mxu0
      %v770 = vadd.f32 %v641, %v769
      %v771 = vpop.f32.mrb[0].mxu0
      %772 = vmatprep.mubr.bf16.mxu0 0
      %773 = vmatmul.mubr.bf16.gmra.mrb[0].mxu0 %v690
      %v774 = vpop.f32.mrb[0].mxu0
      %v775 = vadd.f32 %v646, %v774
      %v776 = vpop.f32.mrb[0].mxu0
      %v777 = vpop.f32.mrb[0].mxu0
      %v778 = vadd.f32 %v649, %v777
      %v779 = vpop.f32.mrb[0].mxu0
      %780 = vmatprep.mubr.bf16.mxu0 0
      %781 = vmatmul.mubr.bf16.gmra.mrb[0].mxu0 %v693
      %v782 = vpop.f32.mrb[0].mxu0
      %v783 = vadd.f32 %v654, %v782
      %v784 = vpop.f32.mrb[0].mxu0
      %v785 = vpop.f32.mrb[0].mxu0
      %v786 = vadd.f32 %v657, %v785
      %v787 = vpop.f32.mrb[0].mxu0
      %788 = vmatprep.mubr.bf16.mxu0 0
      %789 = vmatmul.mubr.bf16.gmra.mrb[0].mxu0 %v696
      %v790 = vpop.f32.mrb[0].mxu0
      %v791 = vadd.f32 %v662, %v790
      %v792 = vpop.f32.mrb[0].mxu0
      %v793 = vpop.f32.mrb[0].mxu0
      %v794 = vadd.f32 %v665, %v793
      %v795 = vpop.f32.mrb[0].mxu0
      %796 = vmatprep.mubr.bf16.mxu0 0
      %797 = vmatmul.mubr.bf16.gmra.mrb[0].mxu0 %v699
      %v798 = vpop.f32.mrb[0].mxu0
      %v799 = vadd.f32 %v670, %v798
      %v800 = vpop.f32.mrb[0].mxu0
      %v801 = vpop.f32.mrb[0].mxu0
      %v802 = vadd.f32 %v673, %v801
      %v803 = vpop.f32.mrb[0].mxu0
      %804 = vdwg.mxu0
      %v805 = vld [vmem:[%s5] sm:$0x1]
      %v807 = vlaneseq
      %v808 = vshrl.u32 %v807, 7
      %v809 = vsub.s32 0, %v808
      %v810 = vrot.slane %v805, %v809
      %v812 = vadd.f32 %v743, %v810
      %v813 = vadd.f32 %v746, %v810
      %v814 = vadd.f32 %v751, %v810
      %v815 = vadd.f32 %v754, %v810
      %v816 = vadd.f32 %v759, %v810
      %v817 = vadd.f32 %v762, %v810
      %v818 = vadd.f32 %v767, %v810
      %v819 = vadd.f32 %v770, %v810
      %v820 = vadd.f32 %v775, %v810
      %v821 = vadd.f32 %v778, %v810
      %v822 = vadd.f32 %v783, %v810
      %v823 = vadd.f32 %v786, %v810
      %v824 = vadd.f32 %v791, %v810
      %v825 = vadd.f32 %v794, %v810
      %v826 = vadd.f32 %v799, %v810
      %v827 = vadd.f32 %v802, %v810
      %v828 = vmax.f32 %v812, 0.0
      %v829 = vmax.f32 %v813, 0.0
      %v830 = vmax.f32 %v814, 0.0
      %v831 = vmax.f32 %v815, 0.0
      %v832 = vmax.f32 %v816, 0.0
      %v833 = vmax.f32 %v817, 0.0
      %v834 = vmax.f32 %v818, 0.0
      %v835 = vmax.f32 %v819, 0.0
      %v836 = vmax.f32 %v820, 0.0
      %v837 = vmax.f32 %v821, 0.0
      %v838 = vmax.f32 %v822, 0.0
      %v839 = vmax.f32 %v823, 0.0
      %v840 = vmax.f32 %v824, 0.0
      %v841 = vmax.f32 %v825, 0.0
      %v842 = vmax.f32 %v826, 0.0
      %v843 = vmax.f32 %v827, 0.0
      %v844 = vpack.c.bf16 %v829, %v828
      %v845 = vpack.c.bf16 %v831, %v830
      %v846 = vpack.c.bf16 %v833, %v832
      %v847 = vpack.c.bf16 %v835, %v834
      %v848 = vpack.c.bf16 %v837, %v836
      %v849 = vpack.c.bf16 %v839, %v838
      %v850 = vpack.c.bf16 %v841, %v840
      %v851 = vpack.c.bf16 %v843, %v842
      %v852 = vld [vmem:[%s6] sm:$0xf]
      %v853 = vld [vmem:[%s6 + $0x4] sm:$0xf]
      %v854 = vld [vmem:[%s6 + $0x8] sm:$0xf]
      %v855 = vld [vmem:[%s6 + $0xc] sm:$0xf]
      %v856 = vld [vmem:[%s7] sm:$0x1]
      %v858 = vlaneseq
      %v859 = vshrl.u32 %v858, 7
      %v860 = vsub.s32 0, %v859
      %v861 = vrot.slane %v856, %v860
      %v867 = vunpack.c.l.b16 %v852
      %v868 = vunpack.c.l.b16 %v853
      %v869 = vunpack.c.l.b16 %v854
      %v870 = vunpack.c.l.b16 %v855
      %v871 = vpack.c.b16 %v868, %v867
      %v872 = vpack.c.b16 %v870, %v869
      %v876 = vsel %vm554, %v844, 0
      %v879 = vsel %vm554, %v845, 0
      %v882 = vsel %vm554, %v846, 0
      %v885 = vsel %vm554, %v847, 0
      %v888 = vsel %vm554, %v848, 0
      %v891 = vsel %vm554, %v849, 0
      %v894 = vsel %vm554, %v850, 0
      %v897 = vsel %vm554, %v851, 0
      %899 = vmatprep.subr.bf16.mxu0 0
      %900 = vmatpush1.bf16.msra.mxu0 %v871
      %901 = vmatprep.subr.bf16.mxu0 0
      %902 = vmatpush1.bf16.msra.mxu0 %v872
      %903 = vmatprep.subr.bf16.mxu0 0
      %904 = vmatpush1.bf16.msra.mxu0 0
      %905 = vmatprep.subr.bf16.mxu0 0
      %906 = vmatpush1.bf16.msra.mxu0 0
      %907 = vmatprep.subr.bf16.mxu0 0
      %908 = vmatpush1.bf16.msra.mxu0 0
      %909 = vmatprep.subr.bf16.mxu0 0
      %910 = vmatpush1.bf16.msra.mxu0 0
      %911 = vmatprep.subr.bf16.mxu0 0
      %912 = vmatpush1.bf16.msra.mxu0 0
      %913 = vmatprep.subr.bf16.mxu0 0
      %914 = vmatpush1.bf16.msra.mxu0 0
      %915 = vmatprep.subr.bf16.mxu0 0
      %916 = vmatpush1.bf16.msra.mxu0 0
      %917 = vmatprep.subr.bf16.mxu0 0
      %918 = vmatpush1.bf16.msra.mxu0 0
      %919 = vmatprep.subr.bf16.mxu0 0
      %920 = vmatpush1.bf16.msra.mxu0 0
      %921 = vmatprep.subr.bf16.mxu0 0
      %922 = vmatpush1.bf16.msra.mxu0 0
      %923 = vmatprep.subr.bf16.mxu0 0
      %924 = vmatpush1.bf16.msra.mxu0 0
      %925 = vmatprep.subr.bf16.mxu0 0
      %926 = vmatpush1.bf16.msra.mxu0 0
      %927 = vmatprep.subr.bf16.mxu0 0
      %928 = vmatpush1.bf16.msra.mxu0 0
      %929 = vmatprep.subr.bf16.mxu0 0
      %930 = vmatpush1.bf16.msra.mxu0 0
      %931 = vmatprep.mubr.bf16.mxu0 0
      %932 = vmatmul.mubr.bf16.gmra.mrb[0].mxu0 %v876
      %v933 = vpop.f32.mrb[0].mxu0
      %v934 = vadd.f32 %v861, %v933
      %v935 = vpop.f32.mrb[0].mxu0
      %v936 = vpop.f32.mrb[0].mxu0
      %v937 = vadd.f32 %v861, %v936
      %v938 = vpop.f32.mrb[0].mxu0
      %939 = vmatprep.mubr.bf16.mxu0 0
      %940 = vmatmul.mubr.bf16.gmra.mrb[0].mxu0 %v879
      %v941 = vpop.f32.mrb[0].mxu0
      %v942 = vadd.f32 %v861, %v941
      %v943 = vpop.f32.mrb[0].mxu0
      %v944 = vpop.f32.mrb[0].mxu0
      %v945 = vadd.f32 %v861, %v944
      %v946 = vpop.f32.mrb[0].mxu0
      %947 = vmatprep.mubr.bf16.mxu0 0
      %948 = vmatmul.mubr.bf16.gmra.mrb[0].mxu0 %v882
      %v949 = vpop.f32.mrb[0].mxu0
      %v950 = vadd.f32 %v861, %v949
      %v951 = vpop.f32.mrb[0].mxu0
      %v952 = vpop.f32.mrb[0].mxu0
      %v953 = vadd.f32 %v861, %v952
      %v954 = vpop.f32.mrb[0].mxu0
      %955 = vmatprep.mubr.bf16.mxu0 0
      %956 = vmatmul.mubr.bf16.gmra.mrb[0].mxu0 %v885
      %v957 = vpop.f32.mrb[0].mxu0
      %v958 = vadd.f32 %v861, %v957
      %v959 = vpop.f32.mrb[0].mxu0
      %v960 = vpop.f32.mrb[0].mxu0
      %v961 = vadd.f32 %v861, %v960
      %v962 = vpop.f32.mrb[0].mxu0
      %963 = vmatprep.mubr.bf16.mxu0 0
      %964 = vmatmul.mubr.bf16.gmra.mrb[0].mxu0 %v888
      %v965 = vpop.f32.mrb[0].mxu0
      %v966 = vadd.f32 %v861, %v965
      %v967 = vpop.f32.mrb[0].mxu0
      %v968 = vpop.f32.mrb[0].mxu0
      %v969 = vadd.f32 %v861, %v968
      %v970 = vpop.f32.mrb[0].mxu0
      %971 = vmatprep.mubr.bf16.mxu0 0
      %972 = vmatmul.mubr.bf16.gmra.mrb[0].mxu0 %v891
      %v973 = vpop.f32.mrb[0].mxu0
      %v974 = vadd.f32 %v861, %v973
      %v975 = vpop.f32.mrb[0].mxu0
      %v976 = vpop.f32.mrb[0].mxu0
      %v977 = vadd.f32 %v861, %v976
      %v978 = vpop.f32.mrb[0].mxu0
      %979 = vmatprep.mubr.bf16.mxu0 0
      %980 = vmatmul.mubr.bf16.gmra.mrb[0].mxu0 %v894
      %v981 = vpop.f32.mrb[0].mxu0
      %v982 = vadd.f32 %v861, %v981
      %v983 = vpop.f32.mrb[0].mxu0
      %v984 = vpop.f32.mrb[0].mxu0
      %v985 = vadd.f32 %v861, %v984
      %v986 = vpop.f32.mrb[0].mxu0
      %987 = vmatprep.mubr.bf16.mxu0 0
      %988 = vmatmul.mubr.bf16.gmra.mrb[0].mxu0 %v897
      %v989 = vpop.f32.mrb[0].mxu0
      %v990 = vadd.f32 %v861, %v989
      %v991 = vpop.f32.mrb[0].mxu0
      %v992 = vpop.f32.mrb[0].mxu0
      %v993 = vadd.f32 %v861, %v992
      %v994 = vpop.f32.mrb[0].mxu0
      %995 = vdwg.mxu0
      %v996 = vmax.f32 %v934, 0.0
      %v997 = vmax.f32 %v937, 0.0
      %v998 = vmax.f32 %v942, 0.0
      %v999 = vmax.f32 %v945, 0.0
      %v1000 = vmax.f32 %v950, 0.0
      %v1001 = vmax.f32 %v953, 0.0
      %v1002 = vmax.f32 %v958, 0.0
      %v1003 = vmax.f32 %v961, 0.0
      %v1004 = vmax.f32 %v966, 0.0
      %v1005 = vmax.f32 %v969, 0.0
      %v1006 = vmax.f32 %v974, 0.0
      %v1007 = vmax.f32 %v977, 0.0
      %v1008 = vmax.f32 %v982, 0.0
      %v1009 = vmax.f32 %v985, 0.0
      %v1010 = vmax.f32 %v990, 0.0
      %v1011 = vmax.f32 %v993, 0.0
      %v1012 = vpack.c.bf16 %v997, %v996
      %v1013 = vpack.c.bf16 %v999, %v998
      %v1014 = vpack.c.bf16 %v1001, %v1000
      %v1015 = vpack.c.bf16 %v1003, %v1002
      %v1016 = vpack.c.bf16 %v1005, %v1004
      %v1017 = vpack.c.bf16 %v1007, %v1006
      %v1018 = vpack.c.bf16 %v1009, %v1008
      %v1019 = vpack.c.bf16 %v1011, %v1010
      %v1020 = vld [vmem:[%s8] sm:$0xf]
      %v1021 = vld [vmem:[%s8 + $0x4] sm:$0xf]
      %v1022 = vld [vmem:[%s8 + $0x8] sm:$0xf]
      %v1023 = vld [vmem:[%s8 + $0xc] sm:$0xf]
      %v1024 = vld [vmem:[%s8 + $0x10] sm:$0xf]
      %v1025 = vld [vmem:[%s8 + $0x14] sm:$0xf]
      %v1026 = vld [vmem:[%s8 + $0x18] sm:$0xf]
      %v1027 = vld [vmem:[%s8 + $0x1c] sm:$0xf]
      %v1028 = vld [vmem:[%s9] sm:$0x1]
      %v1030 = vlaneseq
      %v1031 = vshrl.u32 %v1030, 7
      %v1032 = vsub.s32 0, %v1031
      %v1033 = vrot.slane %v1028, %v1032
      %v1043 = vunpack.c.l.b16 %v1020
      %v1044 = vunpack.c.l.b16 %v1021
      %v1045 = vunpack.c.l.b16 %v1022
      %v1046 = vunpack.c.l.b16 %v1023
      %v1047 = vunpack.c.l.b16 %v1024
      %v1048 = vunpack.c.l.b16 %v1025
      %v1049 = vunpack.c.l.b16 %v1026
      %v1050 = vunpack.c.l.b16 %v1027
      %v1051 = vpack.c.b16 %v1044, %v1043
      %v1052 = vpack.c.b16 %v1046, %v1045
      %v1053 = vpack.c.b16 %v1048, %v1047
      %v1054 = vpack.c.b16 %v1050, %v1049
      %vm1059 = vcmask 523264
      %v1061 = vsel %vm1059, %v1012, 0
      %v1064 = vsel %vm1059, %v1013, 0
      %v1067 = vsel %vm1059, %v1014, 0
      %v1070 = vsel %vm1059, %v1015, 0
      %v1073 = vsel %vm1059, %v1016, 0
      %v1076 = vsel %vm1059, %v1017, 0
      %v1079 = vsel %vm1059, %v1018, 0
      %v1082 = vsel %vm1059, %v1019, 0
      %1084 = vmatprep.subr.bf16.mxu0 0
      %1085 = vmatpush1.bf16.msra.mxu0 %v1051
      %1086 = vmatprep.subr.bf16.mxu0 0
      %1087 = vmatpush1.bf16.msra.mxu0 %v1052
      %1088 = vmatprep.subr.bf16.mxu0 0
      %1089 = vmatpush1.bf16.msra.mxu0 %v1053
      %1090 = vmatprep.subr.bf16.mxu0 0
      %1091 = vmatpush1.bf16.msra.mxu0 %v1054
      %1092 = vmatprep.subr.bf16.mxu0 0
      %1093 = vmatpush1.bf16.msra.mxu0 0
      %1094 = vmatprep.subr.bf16.mxu0 0
      %1095 = vmatpush1.bf16.msra.mxu0 0
      %1096 = vmatprep.subr.bf16.mxu0 0
      %1097 = vmatpush1.bf16.msra.mxu0 0
      %1098 = vmatprep.subr.bf16.mxu0 0
      %1099 = vmatpush1.bf16.msra.mxu0 0
      %1100 = vmatprep.subr.bf16.mxu0 0
      %1101 = vmatpush1.bf16.msra.mxu0 0
      %1102 = vmatprep.subr.bf16.mxu0 0
      %1103 = vmatpush1.bf16.msra.mxu0 0
      %1104 = vmatprep.subr.bf16.mxu0 0
      %1105 = vmatpush1.bf16.msra.mxu0 0
      %1106 = vmatprep.subr.bf16.mxu0 0
      %1107 = vmatpush1.bf16.msra.mxu0 0
      %1108 = vmatprep.subr.bf16.mxu0 0
      %1109 = vmatpush1.bf16.msra.mxu0 0
      %1110 = vmatprep.subr.bf16.mxu0 0
      %1111 = vmatpush1.bf16.msra.mxu0 0
      %1112 = vmatprep.subr.bf16.mxu0 0
      %1113 = vmatpush1.bf16.msra.mxu0 0
      %1114 = vmatprep.subr.bf16.mxu0 0
      %1115 = vmatpush1.bf16.msra.mxu0 0
      %1116 = vmatprep.mubr.bf16.mxu0 0
      %1117 = vmatmul.mubr.bf16.gmra.mrb[0].mxu0 %v1061
      %v1118 = vpop.f32.mrb[0].mxu0
      %v1119 = vadd.f32 %v1033, %v1118
      %v1120 = vpop.f32.mrb[0].mxu0
      %v1121 = vpop.f32.mrb[0].mxu0
      %v1122 = vadd.f32 %v1033, %v1121
      %v1123 = vpop.f32.mrb[0].mxu0
      %1124 = vmatprep.mubr.bf16.mxu0 0
      %1125 = vmatmul.mubr.bf16.gmra.mrb[0].mxu0 %v1064
      %v1126 = vpop.f32.mrb[0].mxu0
      %v1127 = vadd.f32 %v1033, %v1126
      %v1128 = vpop.f32.mrb[0].mxu0
      %v1129 = vpop.f32.mrb[0].mxu0
      %v1130 = vadd.f32 %v1033, %v1129
      %v1131 = vpop.f32.mrb[0].mxu0
      %1132 = vmatprep.mubr.bf16.mxu0 0
      %1133 = vmatmul.mubr.bf16.gmra.mrb[0].mxu0 %v1067
      %v1134 = vpop.f32.mrb[0].mxu0
      %v1135 = vadd.f32 %v1033, %v1134
      %v1136 = vpop.f32.mrb[0].mxu0
      %v1137 = vpop.f32.mrb[0].mxu0
      %v1138 = vadd.f32 %v1033, %v1137
      %v1139 = vpop.f32.mrb[0].mxu0
      %1140 = vmatprep.mubr.bf16.mxu0 0
      %1141 = vmatmul.mubr.bf16.gmra.mrb[0].mxu0 %v1070
      %v1142 = vpop.f32.mrb[0].mxu0
      %v1143 = vadd.f32 %v1033, %v1142
      %v1144 = vpop.f32.mrb[0].mxu0
      %v1145 = vpop.f32.mrb[0].mxu0
      %v1146 = vadd.f32 %v1033, %v1145
      %v1147 = vpop.f32.mrb[0].mxu0
      %1148 = vmatprep.mubr.bf16.mxu0 0
      %1149 = vmatmul.mubr.bf16.gmra.mrb[0].mxu0 %v1073
      %v1150 = vpop.f32.mrb[0].mxu0
      %v1151 = vadd.f32 %v1033, %v1150
      %v1152 = vpop.f32.mrb[0].mxu0
      %v1153 = vpop.f32.mrb[0].mxu0
      %v1154 = vadd.f32 %v1033, %v1153
      %v1155 = vpop.f32.mrb[0].mxu0
      %1156 = vmatprep.mubr.bf16.mxu0 0
      %1157 = vmatmul.mubr.bf16.gmra.mrb[0].mxu0 %v1076
      %v1158 = vpop.f32.mrb[0].mxu0
      %v1159 = vadd.f32 %v1033, %v1158
      %v1160 = vpop.f32.mrb[0].mxu0
      %v1161 = vpop.f32.mrb[0].mxu0
      %v1162 = vadd.f32 %v1033, %v1161
      %v1163 = vpop.f32.mrb[0].mxu0
      %1164 = vmatprep.mubr.bf16.mxu0 0
      %1165 = vmatmul.mubr.bf16.gmra.mrb[0].mxu0 %v1079
      %v1166 = vpop.f32.mrb[0].mxu0
      %v1167 = vadd.f32 %v1033, %v1166
      %v1168 = vpop.f32.mrb[0].mxu0
      %v1169 = vpop.f32.mrb[0].mxu0
      %v1170 = vadd.f32 %v1033, %v1169
      %v1171 = vpop.f32.mrb[0].mxu0
      %1172 = vmatprep.mubr.bf16.mxu0 0
      %1173 = vmatmul.mubr.bf16.gmra.mrb[0].mxu0 %v1082
      %v1174 = vpop.f32.mrb[0].mxu0
      %v1175 = vadd.f32 %v1033, %v1174
      %v1176 = vpop.f32.mrb[0].mxu0
      %v1177 = vpop.f32.mrb[0].mxu0
      %v1178 = vadd.f32 %v1033, %v1177
      %v1179 = vpop.f32.mrb[0].mxu0
      %1180 = vdwg.mxu0
      %v1181 = vmax.f32 %v1119, 0.0
      %v1182 = vmax.f32 %v1122, 0.0
      %v1183 = vmax.f32 %v1127, 0.0
      %v1184 = vmax.f32 %v1130, 0.0
      %v1185 = vmax.f32 %v1135, 0.0
      %v1186 = vmax.f32 %v1138, 0.0
      %v1187 = vmax.f32 %v1143, 0.0
      %v1188 = vmax.f32 %v1146, 0.0
      %v1189 = vmax.f32 %v1151, 0.0
      %v1190 = vmax.f32 %v1154, 0.0
      %v1191 = vmax.f32 %v1159, 0.0
      %v1192 = vmax.f32 %v1162, 0.0
      %v1193 = vmax.f32 %v1167, 0.0
      %v1194 = vmax.f32 %v1170, 0.0
      %v1195 = vmax.f32 %v1175, 0.0
      %v1196 = vmax.f32 %v1178, 0.0
      %v1197 = vsel %vm554, %v1181, -inf
      %v1198 = vrot.slane %v1197, 4
      %v1199 = vmax.f32 %v1197, %v1198
      %v1200 = vrot.slane %v1199, 2
      %v1201 = vmax.f32 %v1199, %v1200
      %v1202 = vrot.slane %v1201, 1
      %v1203 = vmax.f32 %v1201, %v1202
      %v1204 = vsel %vm554, %v1182, -inf
      %v1205 = vrot.slane %v1204, 4
      %v1206 = vmax.f32 %v1204, %v1205
      %v1207 = vrot.slane %v1206, 2
      %v1208 = vmax.f32 %v1206, %v1207
      %v1209 = vrot.slane %v1208, 1
      %v1210 = vmax.f32 %v1208, %v1209
      %v1211 = vsel %vm554, %v1183, -inf
      %v1212 = vrot.slane %v1211, 4
      %v1213 = vmax.f32 %v1211, %v1212
      %v1214 = vrot.slane %v1213, 2
      %v1215 = vmax.f32 %v1213, %v1214
      %v1216 = vrot.slane %v1215, 1
      %v1217 = vmax.f32 %v1215, %v1216
      %v1218 = vsel %vm554, %v1184, -inf
      %v1219 = vrot.slane %v1218, 4
      %v1220 = vmax.f32 %v1218, %v1219
      %v1221 = vrot.slane %v1220, 2
      %v1222 = vmax.f32 %v1220, %v1221
      %v1223 = vrot.slane %v1222, 1
      %v1224 = vmax.f32 %v1222, %v1223
      %v1225 = vsel %vm554, %v1185, -inf
      %v1226 = vrot.slane %v1225, 4
      %v1227 = vmax.f32 %v1225, %v1226
      %v1228 = vrot.slane %v1227, 2
      %v1229 = vmax.f32 %v1227, %v1228
      %v1230 = vrot.slane %v1229, 1
      %v1231 = vmax.f32 %v1229, %v1230
      %v1232 = vsel %vm554, %v1186, -inf
      %v1233 = vrot.slane %v1232, 4
      %v1234 = vmax.f32 %v1232, %v1233
      %v1235 = vrot.slane %v1234, 2
      %v1236 = vmax.f32 %v1234, %v1235
      %v1237 = vrot.slane %v1236, 1
      %v1238 = vmax.f32 %v1236, %v1237
      %v1239 = vsel %vm554, %v1187, -inf
      %v1240 = vrot.slane %v1239, 4
      %v1241 = vmax.f32 %v1239, %v1240
      %v1242 = vrot.slane %v1241, 2
      %v1243 = vmax.f32 %v1241, %v1242
      %v1244 = vrot.slane %v1243, 1
      %v1245 = vmax.f32 %v1243, %v1244
      %v1246 = vsel %vm554, %v1188, -inf
      %v1247 = vrot.slane %v1246, 4
      %v1248 = vmax.f32 %v1246, %v1247
      %v1249 = vrot.slane %v1248, 2
      %v1250 = vmax.f32 %v1248, %v1249
      %v1251 = vrot.slane %v1250, 1
      %v1252 = vmax.f32 %v1250, %v1251
      %v1253 = vsel %vm554, %v1189, -inf
      %v1254 = vrot.slane %v1253, 4
      %v1255 = vmax.f32 %v1253, %v1254
      %v1256 = vrot.slane %v1255, 2
      %v1257 = vmax.f32 %v1255, %v1256
      %v1258 = vrot.slane %v1257, 1
      %v1259 = vmax.f32 %v1257, %v1258
      %v1260 = vsel %vm554, %v1190, -inf
      %v1261 = vrot.slane %v1260, 4
      %v1262 = vmax.f32 %v1260, %v1261
      %v1263 = vrot.slane %v1262, 2
      %v1264 = vmax.f32 %v1262, %v1263
      %v1265 = vrot.slane %v1264, 1
      %v1266 = vmax.f32 %v1264, %v1265
      %v1267 = vsel %vm554, %v1191, -inf
      %v1268 = vrot.slane %v1267, 4
      %v1269 = vmax.f32 %v1267, %v1268
      %v1270 = vrot.slane %v1269, 2
      %v1271 = vmax.f32 %v1269, %v1270
      %v1272 = vrot.slane %v1271, 1
      %v1273 = vmax.f32 %v1271, %v1272
      %v1274 = vsel %vm554, %v1192, -inf
      %v1275 = vrot.slane %v1274, 4
      %v1276 = vmax.f32 %v1274, %v1275
      %v1277 = vrot.slane %v1276, 2
      %v1278 = vmax.f32 %v1276, %v1277
      %v1279 = vrot.slane %v1278, 1
      %v1280 = vmax.f32 %v1278, %v1279
      %v1281 = vsel %vm554, %v1193, -inf
      %v1282 = vrot.slane %v1281, 4
      %v1283 = vmax.f32 %v1281, %v1282
      %v1284 = vrot.slane %v1283, 2
      %v1285 = vmax.f32 %v1283, %v1284
      %v1286 = vrot.slane %v1285, 1
      %v1287 = vmax.f32 %v1285, %v1286
      %v1288 = vsel %vm554, %v1194, -inf
      %v1289 = vrot.slane %v1288, 4
      %v1290 = vmax.f32 %v1288, %v1289
      %v1291 = vrot.slane %v1290, 2
      %v1292 = vmax.f32 %v1290, %v1291
      %v1293 = vrot.slane %v1292, 1
      %v1294 = vmax.f32 %v1292, %v1293
      %v1295 = vsel %vm554, %v1195, -inf
      %v1296 = vrot.slane %v1295, 4
      %v1297 = vmax.f32 %v1295, %v1296
      %v1298 = vrot.slane %v1297, 2
      %v1299 = vmax.f32 %v1297, %v1298
      %v1300 = vrot.slane %v1299, 1
      %v1301 = vmax.f32 %v1299, %v1300
      %v1302 = vsel %vm554, %v1196, -inf
      %v1303 = vrot.slane %v1302, 4
      %v1304 = vmax.f32 %v1302, %v1303
      %v1305 = vrot.slane %v1304, 2
      %v1306 = vmax.f32 %v1304, %v1305
      %v1307 = vrot.slane %v1306, 1
      %v1308 = vmax.f32 %v1306, %v1307
      %v1309 = vld [vmem:[%s10] sm:$0xf]
      %v1310 = vld [vmem:[%s10 + $0x4] sm:$0xf]
      %v1311 = vpack.c.bf16 %v1203, %v1203
      %v1312 = vpack.c.bf16 %v1210, %v1210
      %v1313 = vpack.c.bf16 %v1217, %v1217
      %v1314 = vpack.c.bf16 %v1224, %v1224
      %v1315 = vpack.c.bf16 %v1231, %v1231
      %v1316 = vpack.c.bf16 %v1238, %v1238
      %v1317 = vpack.c.bf16 %v1245, %v1245
      %v1318 = vpack.c.bf16 %v1252, %v1252
      %v1319 = vpack.c.bf16 %v1259, %v1259
      %v1320 = vpack.c.bf16 %v1266, %v1266
      %v1321 = vpack.c.bf16 %v1273, %v1273
      %v1322 = vpack.c.bf16 %v1280, %v1280
      %v1323 = vpack.c.bf16 %v1287, %v1287
      %v1324 = vpack.c.bf16 %v1294, %v1294
      %v1325 = vpack.c.bf16 %v1301, %v1301
      %v1326 = vpack.c.bf16 %v1308, %v1308
      %v1327 = vld [vmem:[%s11] sm:$0xf]
      %v1328 = vld [vmem:[%s11 + $0x4] sm:$0xf]
      %v1329 = vld [vmem:[%s480] sm:$0xf]
      %v1330 = vld [vmem:[%s480 + $0x4] sm:$0xf]
      %v1331 = vld [vmem:[%s480 + $0x8] sm:$0xf]
      %v1334 = vunpack.c.l.b16 %v1327
      %v1335 = vunpack.c.l.b16 %v1328
      %v1336 = vpack.c.b16 %v1335, %v1334
      %v1340 = vunpack.c.l.b16 %v1329
      %v1341 = vunpack.c.l.b16 %v1330
      %v1342 = vunpack.c.l.b16 %v1331
      %v1343 = vpack.c.b16 %v1341, %v1340
      %v1344 = vpack.c.b16 %v1342, %v1342
      %vm1346 = vcmask 195584
      %v1348 = vsel %vm1346, %v1336, 0
      %vm1350 = vcmask 1043456
      %v1352 = vsel %vm1350, %v1344, 0
      %1354 = vmatprep.subr.bf16.mxu0 0
      %1355 = vmatpush1.bf16.msra.mxu0 %v1343
      %1356 = vmatprep.subr.bf16.mxu0 0
      %1357 = vmatpush1.bf16.msra.mxu0 %v1352
      %1358 = vmatprep.subr.bf16.mxu0 0
      %1359 = vmatpush1.bf16.msra.mxu0 0
      %1360 = vmatprep.subr.bf16.mxu0 0
      %1361 = vmatpush1.bf16.msra.mxu0 0
      %1362 = vmatprep.subr.bf16.mxu0 0
      %1363 = vmatpush1.bf16.msra.mxu0 0
      %1364 = vmatprep.subr.bf16.mxu0 0
      %1365 = vmatpush1.bf16.msra.mxu0 0
      %1366 = vmatprep.subr.bf16.mxu0 0
      %1367 = vmatpush1.bf16.msra.mxu0 0
      %1368 = vmatprep.subr.bf16.mxu0 0
      %1369 = vmatpush1.bf16.msra.mxu0 0
      %1370 = vmatprep.subr.bf16.mxu0 0
      %1371 = vmatpush1.bf16.msra.mxu0 0
      %1372 = vmatprep.subr.bf16.mxu0 0
      %1373 = vmatpush1.bf16.msra.mxu0 0
      %1374 = vmatprep.subr.bf16.mxu0 0
      %1375 = vmatpush1.bf16.msra.mxu0 0
      %1376 = vmatprep.subr.bf16.mxu0 0
      %1377 = vmatpush1.bf16.msra.mxu0 0
      %1378 = vmatprep.subr.bf16.mxu0 0
      %1379 = vmatpush1.bf16.msra.mxu0 0
      %1380 = vmatprep.subr.bf16.mxu0 0
      %1381 = vmatpush1.bf16.msra.mxu0 0
      %1382 = vmatprep.subr.bf16.mxu0 0
      %1383 = vmatpush1.bf16.msra.mxu0 0
      %1384 = vmatprep.subr.bf16.mxu0 0
      %1385 = vmatpush1.bf16.msra.mxu0 0
      %1386 = vmatprep.mubr.bf16.mxu0 0
      %1387 = vmatmul.mubr.bf16.gmra.mrb[0].mxu0 %v1348
      %v1388 = vpop.f32.mrb[0].mxu0
      %v1389 = vadd.f32 0.0, %v1388
      %v1390 = vpop.f32.mrb[0].mxu0
      %v1391 = vpop.f32.mrb[0].mxu0
      %v1392 = vadd.f32 0.0, %v1391
      %v1393 = vpop.f32.mrb[0].mxu0
      %1394 = vdwg.mxu0
      %v1397 = vunpack.c.l.b16 %v1309
      %v1398 = vunpack.c.l.b16 %v1310
      %v1399 = vpack.c.b16 %v1398, %v1397
      %v1416 = vunpack.c.l.b16 %v1311
      %v1417 = vunpack.c.l.b16 %v1312
      %v1418 = vunpack.c.l.b16 %v1313
      %v1419 = vunpack.c.l.b16 %v1314
      %v1420 = vunpack.c.l.b16 %v1315
      %v1421 = vunpack.c.l.b16 %v1316
      %v1422 = vunpack.c.l.b16 %v1317
      %v1423 = vunpack.c.l.b16 %v1318
      %v1424 = vunpack.c.l.b16 %v1319
      %v1425 = vunpack.c.l.b16 %v1320
      %v1426 = vunpack.c.l.b16 %v1321
      %v1427 = vunpack.c.l.b16 %v1322
      %v1428 = vunpack.c.l.b16 %v1323
      %v1429 = vunpack.c.l.b16 %v1324
      %v1430 = vunpack.c.l.b16 %v1325
      %v1431 = vunpack.c.l.b16 %v1326
      %vm1432 = vcmask 1041409
      %v1433 = vsel %vm1432, %v1417, %v1416
      %vm1434 = vcmask 1042434
      %v1435 = vsel %vm1434, %v1418, %v1433
      %vm1436 = vcmask 1043459
      %v1437 = vsel %vm1436, %v1419, %v1435
      %vm1438 = vcmask 1044484
      %v1439 = vsel %vm1438, %v1420, %v1437
      %vm1440 = vcmask 1045509
      %v1441 = vsel %vm1440, %v1421, %v1439
      %vm1442 = vcmask 1046534
      %v1443 = vsel %vm1442, %v1422, %v1441
      %vm1444 = vcmask 1047559
      %v1445 = vsel %vm1444, %v1423, %v1443
      %v1446 = vsel %vm1432, %v1425, %v1424
      %v1447 = vsel %vm1434, %v1426, %v1446
      %v1448 = vsel %vm1436, %v1427, %v1447
      %v1449 = vsel %vm1438, %v1428, %v1448
      %v1450 = vsel %vm1440, %v1429, %v1449
      %v1451 = vsel %vm1442, %v1430, %v1450
      %v1452 = vsel %vm1444, %v1431, %v1451
      %v1453 = vpack.c.b16 %v1452, %v1445
      %vm1455 = vcmask 130048
      %v1457 = vsel %vm1455, %v1399, 0
      %1459 = vmatprep.subr.bf16.mxu0 0
      %1460 = vmatpush1.bf16.msra.mxu0 %v1453
      %1461 = vmatprep.subr.bf16.mxu0 0
      %1462 = vmatpush1.bf16.msra.mxu0 0
      %1463 = vmatprep.subr.bf16.mxu0 0
      %1464 = vmatpush1.bf16.msra.mxu0 0
      %1465 = vmatprep.subr.bf16.mxu0 0
      %1466 = vmatpush1.bf16.msra.mxu0 0
      %1467 = vmatprep.subr.bf16.mxu0 0
      %1468 = vmatpush1.bf16.msra.mxu0 0
      %1469 = vmatprep.subr.bf16.mxu0 0
      %1470 = vmatpush1.bf16.msra.mxu0 0
      %1471 = vmatprep.subr.bf16.mxu0 0
      %1472 = vmatpush1.bf16.msra.mxu0 0
      %1473 = vmatprep.subr.bf16.mxu0 0
      %1474 = vmatpush1.bf16.msra.mxu0 0
      %1475 = vmatprep.subr.bf16.mxu0 0
      %1476 = vmatpush1.bf16.msra.mxu0 0
      %1477 = vmatprep.subr.bf16.mxu0 0
      %1478 = vmatpush1.bf16.msra.mxu0 0
      %1479 = vmatprep.subr.bf16.mxu0 0
      %1480 = vmatpush1.bf16.msra.mxu0 0
      %1481 = vmatprep.subr.bf16.mxu0 0
      %1482 = vmatpush1.bf16.msra.mxu0 0
      %1483 = vmatprep.subr.bf16.mxu0 0
      %1484 = vmatpush1.bf16.msra.mxu0 0
      %1485 = vmatprep.subr.bf16.mxu0 0
      %1486 = vmatpush1.bf16.msra.mxu0 0
      %1487 = vmatprep.subr.bf16.mxu0 0
      %1488 = vmatpush1.bf16.msra.mxu0 0
      %1489 = vmatprep.subr.bf16.mxu0 0
      %1490 = vmatpush1.bf16.msra.mxu0 0
      %1491 = vmatprep.mubr.bf16.mxu0 0
      %1492 = vmatmul.mubr.bf16.gmra.mrb[0].mxu0 %v1457
      %v1493 = vpop.f32.mrb[0].mxu0
      %v1494 = vadd.f32 %v1389, %v1493
      %v1495 = vpop.f32.mrb[0].mxu0
      %v1496 = vpop.f32.mrb[0].mxu0
      %v1497 = vadd.f32 %v1392, %v1496
      %v1498 = vpop.f32.mrb[0].mxu0
      %1499 = vdwg.mxu0
      %v1500 = vld [vmem:[%s12] sm:$0xff]
      %v1501 = vld [vmem:[%s12 + $0x8] sm:$0xff]
      %1503 = vset.pattern.permute.xlu0 0
      %1504 = vperm.xlu0 %1503, %v1500
      %v1505 = vpop.permute.xlu0 %1504
      %1508 = vset.pattern.permute.xlu0 0
      %1509 = vperm.xlu0 %1508, %v1501
      %v1510 = vpop.permute.xlu0 %1509
      %v1512 = vadd.f32 %v1494, %v1505
      %v1513 = vadd.f32 %v1497, %v1510
      %1514 = vst.msk [vmem:[%s486] sm:$0xff] %vm554, %v1512
      %1515 = vst.msk [vmem:[%s486 + $0x8] sm:$0xff] %vm554, %v1513
      %s1516 = smul.u32 2, %s24
      %p1517 = scmp.lt.s32.totalorder %s1516, 3
      %s1518 = scalar_select %p1517, %s1516, 3
      %s1519 = smul.addr %s1518, 8
      %s1520 = scalar_lea.vmem %s13, %s1519
      // Predicated region
      $region73: #{pointnet_forward.2} parent=71 // pred_check
        %p1521 = pneg %p330
      $region74: #{pointnet_forward.2} parent=71 // pred_check_branch
        %1523 = sbr.rel (%p1521) target = $region76
      $region75: #{pointnet_forward.2} parent=71 // pred_region
        %s1524 = smul.u32 2, %s24
      $region76: #{pointnet_forward.2} parent=71 // pred_fallthru
        _
    $region72: #{pointnet_forward.2} parent=5 // pred_fallthru
      _
    %p1525 = scmp.le.s32.totalorder 2, %s19
    // Predicated region
    $region77: #{pointnet_forward.2} parent=5 // pred_check
      %p1526 = pneg %p1525
    $region78: #{pointnet_forward.2} parent=5 // pred_check_branch
      %1528 = sbr.rel (%p1526) target = $region80
    $region79: #{pointnet_forward.2} parent=5 // pred_region
      %s1529 = ssub.s32 %s19, 2
      // Predicated region
      $region81: #{pointnet_forward.2} parent=79 // pred_check
        %p1530 = pneg %p336
      $region82: #{pointnet_forward.2} parent=79 // pred_check_branch
        %1532 = sbr.rel (%p1530) target = $region84
      $region83: #{pointnet_forward.2} parent=79 // pred_region
        %s1533 = smul.u32 2, %s25
        %p1534 = scmp.lt.s32.totalorder %s1533, 3
        %s1535 = scalar_select %p1534, %s1533, 3
        %s1536 = smul.addr %s1535, 8
        %s1537 = scalar_lea.vmem %s13, %s1536
      $region84: #{pointnet_forward.2} parent=79 // pred_fallthru
        _
    $region80: #{pointnet_forward.2} parent=5 // pred_fallthru
      _
  $region6: #{pointnet_forward.2} parent=0 // loop_footer
    %s23 = sadd.s32 1, %s19
  $region7: #{pointnet_forward.2} parent=0 // loop_footer_branch
    %18 = sbr.rel target = $region3
  $region8: #{pointnet_forward.2} parent=0 // loop_exit
    _

// kernel: custom-call.21
$region0: #{custom-call.21}
  %s0 = inlined_call_operand.vmem [shape: s32[8,2], index: 0, kind: output, shape index: {}]

// kernel: custom-call.17
$region0: #{custom-call.17}
  %s0 = inlined_call_operand.vmem [shape: f32[2,16], index: 0, kind: output, shape index: {}]

// kernel: pointnet_forward.3
$region0: #{pointnet_forward.3}
  #allocation0 [shape = 'u32[]', space=smem, size = 0x4, offset = 0x4, fixed_abs, tag = 'smem constant byte address 0x4 - core index']
  #allocation1 [shape = 'u32[144,128]{1,0:T(1,128)}', space=vmem, size = 0x12000, scoped, tag = 'internal scratch']
  %s0 = inlined_call_operand.vmem [shape: f32[16,3], index: 0, kind: input, shape index: {}]
  %s1 = inlined_call_operand.vmem [shape: f32[128,3], index: 1, kind: input, shape index: {}]
  %s2 = inlined_call_operand.vmem [shape: f32[128,32], index: 2, kind: input, shape index: {}]
  %s3 = inlined_call_operand.vmem [shape: bf16[48,32], index: 3, kind: input, shape index: {}]
  %s4 = inlined_call_operand.vmem [shape: bf16[3,32], index: 4, kind: input, shape index: {}]
  %s5 = inlined_call_operand.vmem [shape: bf16[32,32], index: 5, kind: input, shape index: {}]
  %s6 = inlined_call_operand.vmem [shape: f32[1,32], index: 6, kind: input, shape index: {}]
  %s7 = inlined_call_operand.vmem [shape: bf16[32,64], index: 7, kind: input, shape index: {}]
  %s8 = inlined_call_operand.vmem [shape: f32[1,64], index: 8, kind: input, shape index: {}]
  %s9 = inlined_call_operand.vmem [shape: bf16[64,32], index: 9, kind: input, shape index: {}]
  %s10 = inlined_call_operand.vmem [shape: f32[1,32], index: 10, kind: input, shape index: {}]
  %s11 = inlined_call_operand.vmem [shape: bf16[8,8], index: 11, kind: input, shape index: {}]
  %s12 = inlined_call_operand.vmem [shape: bf16[8,24], index: 12, kind: input, shape index: {}]
  %s13 = inlined_call_operand.vmem [shape: f32[8,1], index: 13, kind: input, shape index: {}]
  %s14 = inlined_call_operand.vmem [shape: bf16[3,32], index: 14, kind: input, shape index: {}]
  %s15 = inlined_call_operand.vmem [shape: bf16[32,32], index: 15, kind: input, shape index: {}]
  %s16 = inlined_call_operand.vmem [shape: f32[1,32], index: 16, kind: input, shape index: {}]
  %s17 = inlined_call_operand.vmem [shape: bf16[32,64], index: 17, kind: input, shape index: {}]
  %s18 = inlined_call_operand.vmem [shape: f32[1,64], index: 18, kind: input, shape index: {}]
  %s19 = inlined_call_operand.vmem [shape: bf16[64,32], index: 19, kind: input, shape index: {}]
  %s20 = inlined_call_operand.vmem [shape: f32[1,32], index: 20, kind: input, shape index: {}]
  %s21 = inlined_call_operand.vmem [shape: bf16[32,16], index: 21, kind: input, shape index: {}]
  %s22 = inlined_call_operand.vmem [shape: f32[1,16], index: 22, kind: input, shape index: {}]
  %s23 = inlined_call_operand.vmem [shape: bf16[16,8], index: 23, kind: input, shape index: {}]
  %s24 = inlined_call_operand.vmem [shape: f32[1,8], index: 24, kind: input, shape index: {}]
  %s25 = inlined_call_operand.vmem [shape: bf16[8,5], index: 25, kind: input, shape index: {}]
  %s26 = inlined_call_operand.vmem [shape: f32[1,5], index: 26, kind: input, shape index: {}]
  %s27 = inlined_call_operand.hbm [shape: f32[2,1,5], index: 27, kind: output, shape index: {}]
  %s28 = sld [smem:[#allocation0]]
  $region141: #{pointnet_forward.3} parent=0
    _
  %s30 = ssub.s32 1, %s28
  %s31 = scalar_select 0, %s30, %s28
  $region1: #{pointnet_forward.3} parent=0
    #allocation2 [shape = 'u8[1024]{0}', space=vmem, size = 0x400, scoped, tag = 'output window, operand 0']
    #allocation3 [shape = 's32[2]{0}', space=sflag, size = 0x8, scoped, tag = 'scoped memory for pointnet_forward.3']
    %32 = vsyncpa [#allocation3], 0
    %s33 = scalar_lea.sflag [#allocation3], 1
    %34 = vsyncpa %s33, 0
    loop: start=0, step=1, limit=4
    $region2: #{pointnet_forward.3} parent=1 // loop_pre_header
      _
    $region3: #{pointnet_forward.3} parent=1 // loop_header
      %s36 = sphi 0, %s40
      %p37 = scmp.ge.s32.totalorder %s36, 4
      %s46 = sphi 0, %s48
      %s49 = sphi 0, %s46
      %s50 = sphi 0, %s49
      %s66 = sphi 0, %s50
      %s72 = sphi 0, %s74
      %s75 = sphi 0, %s72
      %s76 = sphi 0, %s75
      %s92 = sphi 0, %s76
      %s98 = sphi 0, %s100
      %s101 = sphi 0, %s98
      %s102 = sphi 0, %s101
      %s118 = sphi 0, %s102
      %s124 = sphi 0, %s126
      %s127 = sphi 0, %s124
      %s128 = sphi 0, %s127
      %s144 = sphi 0, %s128
      %s148 = sphi 0, %s148
      %s150 = sphi 0, %s148
      %s151 = sphi 0, %s150
      %s165 = sphi 0, %s151
      %s169 = sphi 0, %s169
      %s171 = sphi 0, %s169
      %s172 = sphi 0, %s171
      %s186 = sphi 0, %s172
      %s190 = sphi 0, %s190
      %s192 = sphi 0, %s190
      %s193 = sphi 0, %s192
      %s207 = sphi 0, %s193
      %s211 = sphi 0, %s211
      %s213 = sphi 0, %s211
      %s214 = sphi 0, %s213
      %s228 = sphi 0, %s214
      %s232 = sphi 0, %s232
      %s234 = sphi 0, %s232
      %s235 = sphi 0, %s234
      %s249 = sphi 0, %s235
      %s253 = sphi 0, %s253
      %s255 = sphi 0, %s253
      %s256 = sphi 0, %s255
      %s270 = sphi 0, %s256
      %s274 = sphi 0, %s274
      %s276 = sphi 0, %s274
      %s277 = sphi 0, %s276
      %s291 = sphi 0, %s277
      %s295 = sphi 0, %s295
      %s297 = sphi 0, %s295
      %s298 = sphi 0, %s297
      %s312 = sphi 0, %s298
      %s316 = sphi 0, %s316
      %s318 = sphi 0, %s316
      %s319 = sphi 0, %s318
      %s333 = sphi 0, %s319
      %s337 = sphi 0, %s337
      %s339 = sphi 0, %s337
      %s340 = sphi 0, %s339
      %s354 = sphi 0, %s340
      %s358 = sphi 0, %s358
      %s360 = sphi 0, %s358
      %s361 = sphi 0, %s360
      %s375 = sphi 0, %s361
      %s379 = sphi 0, %s379
      %s381 = sphi 0, %s379
      %s382 = sphi 0, %s381
      %s396 = sphi 0, %s382
      %s400 = sphi 0, %s400
      %s402 = sphi 0, %s400
      %s403 = sphi 0, %s402
      %s417 = sphi 0, %s403
      %s421 = sphi 0, %s421
      %s423 = sphi 0, %s421
      %s424 = sphi 0, %s423
      %s438 = sphi 0, %s424
      %s442 = sphi 0, %s442
      %s444 = sphi 0, %s442
      %s445 = sphi 0, %s444
      %s459 = sphi 0, %s445
      %s463 = sphi 0, %s463
      %s465 = sphi 0, %s463
      %s466 = sphi 0, %s465
      %s480 = sphi 0, %s466
      %s484 = sphi 0, %s484
      %s486 = sphi 0, %s484
      %s487 = sphi 0, %s486
      %s501 = sphi 0, %s487
      %s505 = sphi 0, %s505
      %s507 = sphi 0, %s505
      %s508 = sphi 0, %s507
      %s522 = sphi 0, %s508
      %s526 = sphi 0, %s526
      %s528 = sphi 0, %s526
      %s529 = sphi 0, %s528
      %s543 = sphi 0, %s529
      %s547 = sphi 0, %s547
      %s549 = sphi 0, %s547
      %s550 = sphi 0, %s549
      %s564 = sphi 0, %s550
      %s568 = sphi 0, %s568
      %s570 = sphi 0, %s568
      %s571 = sphi 0, %s570
      %s585 = sphi 0, %s571
      %s589 = sphi 0, %s589
      %s591 = sphi 0, %s589
      %s592 = sphi 0, %s591
      %s606 = sphi 0, %s592
      %s610 = sphi 0, %s610
      %s612 = sphi 0, %s610
      %s613 = sphi 0, %s612
      %s627 = sphi 0, %s613
      %s633 = sphi 0, %s635
      %s636 = sphi 0, %s633
      %s637 = sphi 0, %s636
      %s653 = sphi 0, %s637
    $region4: #{pointnet_forward.3} parent=1 // loop_header_branch
      %39 = sbr.rel (%p37) target = $region8
    $region5: #{pointnet_forward.3} parent=1 // loop_body
      %s41 = ssub.s32 %s36, 1
      %s42 = ssub.s32 %s36, 2
      %s43 = sadd.s32 %s36, 1
      %s44 = ssub.s32 %s36, %s43
      %p45 = scmp.eq.s32.totalorder %s44, 0
      %s47 = sadd.s32 %s46, 1
      %s48 = scalar_select %p45, %s46, %s47
      %p51 = pneg %p45
      %p52 = scmp.eq.s32.totalorder %s36, 1
      %p53 = por %p51, %p52
      %p54 = scmp.ne.s32.totalorder %s46, %s49
      %p55 = scmp.eq.s32.totalorder %s36, 0
      %p56 = por %p54, %p55
      %p57 = scmp.ne.s32.totalorder %s46, %s49
      %p58 = scmp.eq.s32.totalorder %s41, 1
      %p59 = por %p57, %p58
      %p60 = scmp.ne.s32.totalorder %s49, %s50
      %p61 = scmp.eq.s32.totalorder %s41, 0
      %p62 = por %p60, %p61
      %p63 = scmp.ne.s32.totalorder %s49, %s50
      %p64 = scmp.eq.s32.totalorder %s42, 1
      %p65 = por %p63, %p64
      %p67 = scmp.ne.s32.totalorder %s50, %s66
      %p68 = scmp.eq.s32.totalorder %s42, 0
      %p69 = por %p67, %p68
      %s70 = ssub.s32 %s36, %s43
      %p71 = scmp.eq.s32.totalorder %s70, 0
      %s73 = sadd.s32 %s72, 1
      %s74 = scalar_select %p71, %s72, %s73
      %p77 = pneg %p71
      %p78 = scmp.eq.s32.totalorder %s36, 1
      %p79 = por %p77, %p78
      %p80 = scmp.ne.s32.totalorder %s72, %s75
      %p81 = scmp.eq.s32.totalorder %s36, 0
      %p82 = por %p80, %p81
      %p83 = scmp.ne.s32.totalorder %s72, %s75
      %p84 = scmp.eq.s32.totalorder %s41, 1
      %p85 = por %p83, %p84
      %p86 = scmp.ne.s32.totalorder %s75, %s76
      %p87 = scmp.eq.s32.totalorder %s41, 0
      %p88 = por %p86, %p87
      %p89 = scmp.ne.s32.totalorder %s75, %s76
      %p90 = scmp.eq.s32.totalorder %s42, 1
      %p91 = por %p89, %p90
      %p93 = scmp.ne.s32.totalorder %s76, %s92
      %p94 = scmp.eq.s32.totalorder %s42, 0
      %p95 = por %p93, %p94
      %s96 = ssub.s32 %s36, %s43
      %p97 = scmp.eq.s32.totalorder %s96, 0
      %s99 = sadd.s32 %s98, 1
      %s100 = scalar_select %p97, %s98, %s99
      %p103 = pneg %p97
      %p104 = scmp.eq.s32.totalorder %s36, 1
      %p105 = por %p103, %p104
      %p106 = scmp.ne.s32.totalorder %s98, %s101
      %p107 = scmp.eq.s32.totalorder %s36, 0
      %p108 = por %p106, %p107
      %p109 = scmp.ne.s32.totalorder %s98, %s101
      %p110 = scmp.eq.s32.totalorder %s41, 1
      %p111 = por %p109, %p110
      %p112 = scmp.ne.s32.totalorder %s101, %s102
      %p113 = scmp.eq.s32.totalorder %s41, 0
      %p114 = por %p112, %p113
      %p115 = scmp.ne.s32.totalorder %s101, %s102
      %p116 = scmp.eq.s32.totalorder %s42, 1
      %p117 = por %p115, %p116
      %p119 = scmp.ne.s32.totalorder %s102, %s118
      %p120 = scmp.eq.s32.totalorder %s42, 0
      %p121 = por %p119, %p120
      %s122 = ssub.s32 %s36, %s43
      %p123 = scmp.eq.s32.totalorder %s122, 0
      %s125 = sadd.s32 %s124, 1
      %s126 = scalar_select %p123, %s124, %s125
      %p129 = pneg %p123
      %p130 = scmp.eq.s32.totalorder %s36, 1
      %p131 = por %p129, %p130
      %p132 = scmp.ne.s32.totalorder %s124, %s127
      %p133 = scmp.eq.s32.totalorder %s36, 0
      %p134 = por %p132, %p133
      %p135 = scmp.ne.s32.totalorder %s124, %s127
      %p136 = scmp.eq.s32.totalorder %s41, 1
      %p137 = por %p135, %p136
      %p138 = scmp.ne.s32.totalorder %s127, %s128
      %p139 = scmp.eq.s32.totalorder %s41, 0
      %p140 = por %p138, %p139
      %p141 = scmp.ne.s32.totalorder %s127, %s128
      %p142 = scmp.eq.s32.totalorder %s42, 1
      %p143 = por %p141, %p142
      %p145 = scmp.ne.s32.totalorder %s128, %s144
      %p146 = scmp.eq.s32.totalorder %s42, 0
      %p147 = por %p145, %p146
      %s149 = sadd.s32 %s148, 1
      %p152 = scmp.eq.s32.totalorder %s36, 1
      %p153 = scmp.ne.s32.totalorder %s148, %s150
      %p154 = scmp.eq.s32.totalorder %s36, 0
      %p155 = por %p153, %p154
      %p156 = scmp.ne.s32.totalorder %s148, %s150
      %p157 = scmp.eq.s32.totalorder %s41, 1
      %p158 = por %p156, %p157
      %p159 = scmp.ne.s32.totalorder %s150, %s151
      %p160 = scmp.eq.s32.totalorder %s41, 0
      %p161 = por %p159, %p160
      %p162 = scmp.ne.s32.totalorder %s150, %s151
      %p163 = scmp.eq.s32.totalorder %s42, 1
      %p164 = por %p162, %p163
      %p166 = scmp.ne.s32.totalorder %s151, %s165
      %p167 = scmp.eq.s32.totalorder %s42, 0
      %p168 = por %p166, %p167
      %s170 = sadd.s32 %s169, 1
      %p173 = scmp.eq.s32.totalorder %s36, 1
      %p174 = scmp.ne.s32.totalorder %s169, %s171
      %p175 = scmp.eq.s32.totalorder %s36, 0
      %p176 = por %p174, %p175
      %p177 = scmp.ne.s32.totalorder %s169, %s171
      %p178 = scmp.eq.s32.totalorder %s41, 1
      %p179 = por %p177, %p178
      %p180 = scmp.ne.s32.totalorder %s171, %s172
      %p181 = scmp.eq.s32.totalorder %s41, 0
      %p182 = por %p180, %p181
      %p183 = scmp.ne.s32.totalorder %s171, %s172
      %p184 = scmp.eq.s32.totalorder %s42, 1
      %p185 = por %p183, %p184
      %p187 = scmp.ne.s32.totalorder %s172, %s186
      %p188 = scmp.eq.s32.totalorder %s42, 0
      %p189 = por %p187, %p188
      %s191 = sadd.s32 %s190, 1
      %p194 = scmp.eq.s32.totalorder %s36, 1
      %p195 = scmp.ne.s32.totalorder %s190, %s192
      %p196 = scmp.eq.s32.totalorder %s36, 0
      %p197 = por %p195, %p196
      %p198 = scmp.ne.s32.totalorder %s190, %s192
      %p199 = scmp.eq.s32.totalorder %s41, 1
      %p200 = por %p198, %p199
      %p201 = scmp.ne.s32.totalorder %s192, %s193
      %p202 = scmp.eq.s32.totalorder %s41, 0
      %p203 = por %p201, %p202
      %p204 = scmp.ne.s32.totalorder %s192, %s193
      %p205 = scmp.eq.s32.totalorder %s42, 1
      %p206 = por %p204, %p205
      %p208 = scmp.ne.s32.totalorder %s193, %s207
      %p209 = scmp.eq.s32.totalorder %s42, 0
      %p210 = por %p208, %p209
      %s212 = sadd.s32 %s211, 1
      %p215 = scmp.eq.s32.totalorder %s36, 1
      %p216 = scmp.ne.s32.totalorder %s211, %s213
      %p217 = scmp.eq.s32.totalorder %s36, 0
      %p218 = por %p216, %p217
      %p219 = scmp.ne.s32.totalorder %s211, %s213
      %p220 = scmp.eq.s32.totalorder %s41, 1
      %p221 = por %p219, %p220
      %p222 = scmp.ne.s32.totalorder %s213, %s214
      %p223 = scmp.eq.s32.totalorder %s41, 0
      %p224 = por %p222, %p223
      %p225 = scmp.ne.s32.totalorder %s213, %s214
      %p226 = scmp.eq.s32.totalorder %s42, 1
      %p227 = por %p225, %p226
      %p229 = scmp.ne.s32.totalorder %s214, %s228
      %p230 = scmp.eq.s32.totalorder %s42, 0
      %p231 = por %p229, %p230
      %s233 = sadd.s32 %s232, 1
      %p236 = scmp.eq.s32.totalorder %s36, 1
      %p237 = scmp.ne.s32.totalorder %s232, %s234
      %p238 = scmp.eq.s32.totalorder %s36, 0
      %p239 = por %p237, %p238
      %p240 = scmp.ne.s32.totalorder %s232, %s234
      %p241 = scmp.eq.s32.totalorder %s41, 1
      %p242 = por %p240, %p241
      %p243 = scmp.ne.s32.totalorder %s234, %s235
      %p244 = scmp.eq.s32.totalorder %s41, 0
      %p245 = por %p243, %p244
      %p246 = scmp.ne.s32.totalorder %s234, %s235
      %p247 = scmp.eq.s32.totalorder %s42, 1
      %p248 = por %p246, %p247
      %p250 = scmp.ne.s32.totalorder %s235, %s249
      %p251 = scmp.eq.s32.totalorder %s42, 0
      %p252 = por %p250, %p251
      %s254 = sadd.s32 %s253, 1
      %p257 = scmp.eq.s32.totalorder %s36, 1
      %p258 = scmp.ne.s32.totalorder %s253, %s255
      %p259 = scmp.eq.s32.totalorder %s36, 0
      %p260 = por %p258, %p259
      %p261 = scmp.ne.s32.totalorder %s253, %s255
      %p262 = scmp.eq.s32.totalorder %s41, 1
      %p263 = por %p261, %p262
      %p264 = scmp.ne.s32.totalorder %s255, %s256
      %p265 = scmp.eq.s32.totalorder %s41, 0
      %p266 = por %p264, %p265
      %p267 = scmp.ne.s32.totalorder %s255, %s256
      %p268 = scmp.eq.s32.totalorder %s42, 1
      %p269 = por %p267, %p268
      %p271 = scmp.ne.s32.totalorder %s256, %s270
      %p272 = scmp.eq.s32.totalorder %s42, 0
      %p273 = por %p271, %p272
      %s275 = sadd.s32 %s274, 1
      %p278 = scmp.eq.s32.totalorder %s36, 1
      %p279 = scmp.ne.s32.totalorder %s274, %s276
      %p280 = scmp.eq.s32.totalorder %s36, 0
      %p281 = por %p279, %p280
      %p282 = scmp.ne.s32.totalorder %s274, %s276
      %p283 = scmp.eq.s32.totalorder %s41, 1
      %p284 = por %p282, %p283
      %p285 = scmp.ne.s32.totalorder %s276, %s277
      %p286 = scmp.eq.s32.totalorder %s41, 0
      %p287 = por %p285, %p286
      %p288 = scmp.ne.s32.totalorder %s276, %s277
      %p289 = scmp.eq.s32.totalorder %s42, 1
      %p290 = por %p288, %p289
      %p292 = scmp.ne.s32.totalorder %s277, %s291
      %p293 = scmp.eq.s32.totalorder %s42, 0
      %p294 = por %p292, %p293
      %s296 = sadd.s32 %s295, 1
      %p299 = scmp.eq.s32.totalorder %s36, 1
      %p300 = scmp.ne.s32.totalorder %s295, %s297
      %p301 = scmp.eq.s32.totalorder %s36, 0
      %p302 = por %p300, %p301
      %p303 = scmp.ne.s32.totalorder %s295, %s297
      %p304 = scmp.eq.s32.totalorder %s41, 1
      %p305 = por %p303, %p304
      %p306 = scmp.ne.s32.totalorder %s297, %s298
      %p307 = scmp.eq.s32.totalorder %s41, 0
      %p308 = por %p306, %p307
      %p309 = scmp.ne.s32.totalorder %s297, %s298
      %p310 = scmp.eq.s32.totalorder %s42, 1
      %p311 = por %p309, %p310
      %p313 = scmp.ne.s32.totalorder %s298, %s312
      %p314 = scmp.eq.s32.totalorder %s42, 0
      %p315 = por %p313, %p314
      %s317 = sadd.s32 %s316, 1
      %p320 = scmp.eq.s32.totalorder %s36, 1
      %p321 = scmp.ne.s32.totalorder %s316, %s318
      %p322 = scmp.eq.s32.totalorder %s36, 0
      %p323 = por %p321, %p322
      %p324 = scmp.ne.s32.totalorder %s316, %s318
      %p325 = scmp.eq.s32.totalorder %s41, 1
      %p326 = por %p324, %p325
      %p327 = scmp.ne.s32.totalorder %s318, %s319
      %p328 = scmp.eq.s32.totalorder %s41, 0
      %p329 = por %p327, %p328
      %p330 = scmp.ne.s32.totalorder %s318, %s319
      %p331 = scmp.eq.s32.totalorder %s42, 1
      %p332 = por %p330, %p331
      %p334 = scmp.ne.s32.totalorder %s319, %s333
      %p335 = scmp.eq.s32.totalorder %s42, 0
      %p336 = por %p334, %p335
      %s338 = sadd.s32 %s337, 1
      %p341 = scmp.eq.s32.totalorder %s36, 1
      %p342 = scmp.ne.s32.totalorder %s337, %s339
      %p343 = scmp.eq.s32.totalorder %s36, 0
      %p344 = por %p342, %p343
      %p345 = scmp.ne.s32.totalorder %s337, %s339
      %p346 = scmp.eq.s32.totalorder %s41, 1
      %p347 = por %p345, %p346
      %p348 = scmp.ne.s32.totalorder %s339, %s340
      %p349 = scmp.eq.s32.totalorder %s41, 0
      %p350 = por %p348, %p349
      %p351 = scmp.ne.s32.totalorder %s339, %s340
      %p352 = scmp.eq.s32.totalorder %s42, 1
      %p353 = por %p351, %p352
      %p355 = scmp.ne.s32.totalorder %s340, %s354
      %p356 = scmp.eq.s32.totalorder %s42, 0
      %p357 = por %p355, %p356
      %s359 = sadd.s32 %s358, 1
      %p362 = scmp.eq.s32.totalorder %s36, 1
      %p363 = scmp.ne.s32.totalorder %s358, %s360
      %p364 = scmp.eq.s32.totalorder %s36, 0
      %p365 = por %p363, %p364
      %p366 = scmp.ne.s32.totalorder %s358, %s360
      %p367 = scmp.eq.s32.totalorder %s41, 1
      %p368 = por %p366, %p367
      %p369 = scmp.ne.s32.totalorder %s360, %s361
      %p370 = scmp.eq.s32.totalorder %s41, 0
      %p371 = por %p369, %p370
      %p372 = scmp.ne.s32.totalorder %s360, %s361
      %p373 = scmp.eq.s32.totalorder %s42, 1
      %p374 = por %p372, %p373
      %p376 = scmp.ne.s32.totalorder %s361, %s375
      %p377 = scmp.eq.s32.totalorder %s42, 0
      %p378 = por %p376, %p377
      %s380 = sadd.s32 %s379, 1
      %p383 = scmp.eq.s32.totalorder %s36, 1
      %p384 = scmp.ne.s32.totalorder %s379, %s381
      %p385 = scmp.eq.s32.totalorder %s36, 0
      %p386 = por %p384, %p385
      %p387 = scmp.ne.s32.totalorder %s379, %s381
      %p388 = scmp.eq.s32.totalorder %s41, 1
      %p389 = por %p387, %p388
      %p390 = scmp.ne.s32.totalorder %s381, %s382
      %p391 = scmp.eq.s32.totalorder %s41, 0
      %p392 = por %p390, %p391
      %p393 = scmp.ne.s32.totalorder %s381, %s382
      %p394 = scmp.eq.s32.totalorder %s42, 1
      %p395 = por %p393, %p394
      %p397 = scmp.ne.s32.totalorder %s382, %s396
      %p398 = scmp.eq.s32.totalorder %s42, 0
      %p399 = por %p397, %p398
      %s401 = sadd.s32 %s400, 1
      %p404 = scmp.eq.s32.totalorder %s36, 1
      %p405 = scmp.ne.s32.totalorder %s400, %s402
      %p406 = scmp.eq.s32.totalorder %s36, 0
      %p407 = por %p405, %p406
      %p408 = scmp.ne.s32.totalorder %s400, %s402
      %p409 = scmp.eq.s32.totalorder %s41, 1
      %p410 = por %p408, %p409
      %p411 = scmp.ne.s32.totalorder %s402, %s403
      %p412 = scmp.eq.s32.totalorder %s41, 0
      %p413 = por %p411, %p412
      %p414 = scmp.ne.s32.totalorder %s402, %s403
      %p415 = scmp.eq.s32.totalorder %s42, 1
      %p416 = por %p414, %p415
      %p418 = scmp.ne.s32.totalorder %s403, %s417
      %p419 = scmp.eq.s32.totalorder %s42, 0
      %p420 = por %p418, %p419
      %s422 = sadd.s32 %s421, 1
      %p425 = scmp.eq.s32.totalorder %s36, 1
      %p426 = scmp.ne.s32.totalorder %s421, %s423
      %p427 = scmp.eq.s32.totalorder %s36, 0
      %p428 = por %p426, %p427
      %p429 = scmp.ne.s32.totalorder %s421, %s423
      %p430 = scmp.eq.s32.totalorder %s41, 1
      %p431 = por %p429, %p430
      %p432 = scmp.ne.s32.totalorder %s423, %s424
      %p433 = scmp.eq.s32.totalorder %s41, 0
      %p434 = por %p432, %p433
      %p435 = scmp.ne.s32.totalorder %s423, %s424
      %p436 = scmp.eq.s32.totalorder %s42, 1
      %p437 = por %p435, %p436
      %p439 = scmp.ne.s32.totalorder %s424, %s438
      %p440 = scmp.eq.s32.totalorder %s42, 0
      %p441 = por %p439, %p440
      %s443 = sadd.s32 %s442, 1
      %p446 = scmp.eq.s32.totalorder %s36, 1
      %p447 = scmp.ne.s32.totalorder %s442, %s444
      %p448 = scmp.eq.s32.totalorder %s36, 0
      %p449 = por %p447, %p448
      %p450 = scmp.ne.s32.totalorder %s442, %s444
      %p451 = scmp.eq.s32.totalorder %s41, 1
      %p452 = por %p450, %p451
      %p453 = scmp.ne.s32.totalorder %s444, %s445
      %p454 = scmp.eq.s32.totalorder %s41, 0
      %p455 = por %p453, %p454
      %p456 = scmp.ne.s32.totalorder %s444, %s445
      %p457 = scmp.eq.s32.totalorder %s42, 1
      %p458 = por %p456, %p457
      %p460 = scmp.ne.s32.totalorder %s445, %s459
      %p461 = scmp.eq.s32.totalorder %s42, 0
      %p462 = por %p460, %p461
      %s464 = sadd.s32 %s463, 1
      %p467 = scmp.eq.s32.totalorder %s36, 1
      %p468 = scmp.ne.s32.totalorder %s463, %s465
      %p469 = scmp.eq.s32.totalorder %s36, 0
      %p470 = por %p468, %p469
      %p471 = scmp.ne.s32.totalorder %s463, %s465
      %p472 = scmp.eq.s32.totalorder %s41, 1
      %p473 = por %p471, %p472
      %p474 = scmp.ne.s32.totalorder %s465, %s466
      %p475 = scmp.eq.s32.totalorder %s41, 0
      %p476 = por %p474, %p475
      %p477 = scmp.ne.s32.totalorder %s465, %s466
      %p478 = scmp.eq.s32.totalorder %s42, 1
      %p479 = por %p477, %p478
      %p481 = scmp.ne.s32.totalorder %s466, %s480
      %p482 = scmp.eq.s32.totalorder %s42, 0
      %p483 = por %p481, %p482
      %s485 = sadd.s32 %s484, 1
      %p488 = scmp.eq.s32.totalorder %s36, 1
      %p489 = scmp.ne.s32.totalorder %s484, %s486
      %p490 = scmp.eq.s32.totalorder %s36, 0
      %p491 = por %p489, %p490
      %p492 = scmp.ne.s32.totalorder %s484, %s486
      %p493 = scmp.eq.s32.totalorder %s41, 1
      %p494 = por %p492, %p493
      %p495 = scmp.ne.s32.totalorder %s486, %s487
      %p496 = scmp.eq.s32.totalorder %s41, 0
      %p497 = por %p495, %p496
      %p498 = scmp.ne.s32.totalorder %s486, %s487
      %p499 = scmp.eq.s32.totalorder %s42, 1
      %p500 = por %p498, %p499
      %p502 = scmp.ne.s32.totalorder %s487, %s501
      %p503 = scmp.eq.s32.totalorder %s42, 0
      %p504 = por %p502, %p503
      %s506 = sadd.s32 %s505, 1
      %p509 = scmp.eq.s32.totalorder %s36, 1
      %p510 = scmp.ne.s32.totalorder %s505, %s507
      %p511 = scmp.eq.s32.totalorder %s36, 0
      %p512 = por %p510, %p511
      %p513 = scmp.ne.s32.totalorder %s505, %s507
      %p514 = scmp.eq.s32.totalorder %s41, 1
      %p515 = por %p513, %p514
      %p516 = scmp.ne.s32.totalorder %s507, %s508
      %p517 = scmp.eq.s32.totalorder %s41, 0
      %p518 = por %p516, %p517
      %p519 = scmp.ne.s32.totalorder %s507, %s508
      %p520 = scmp.eq.s32.totalorder %s42, 1
      %p521 = por %p519, %p520
      %p523 = scmp.ne.s32.totalorder %s508, %s522
      %p524 = scmp.eq.s32.totalorder %s42, 0
      %p525 = por %p523, %p524
      %s527 = sadd.s32 %s526, 1
      %p530 = scmp.eq.s32.totalorder %s36, 1
      %p531 = scmp.ne.s32.totalorder %s526, %s528
      %p532 = scmp.eq.s32.totalorder %s36, 0
      %p533 = por %p531, %p532
      %p534 = scmp.ne.s32.totalorder %s526, %s528
      %p535 = scmp.eq.s32.totalorder %s41, 1
      %p536 = por %p534, %p535
      %p537 = scmp.ne.s32.totalorder %s528, %s529
      %p538 = scmp.eq.s32.totalorder %s41, 0
      %p539 = por %p537, %p538
      %p540 = scmp.ne.s32.totalorder %s528, %s529
      %p541 = scmp.eq.s32.totalorder %s42, 1
      %p542 = por %p540, %p541
      %p544 = scmp.ne.s32.totalorder %s529, %s543
      %p545 = scmp.eq.s32.totalorder %s42, 0
      %p546 = por %p544, %p545
      %s548 = sadd.s32 %s547, 1
      %p551 = scmp.eq.s32.totalorder %s36, 1
      %p552 = scmp.ne.s32.totalorder %s547, %s549
      %p553 = scmp.eq.s32.totalorder %s36, 0
      %p554 = por %p552, %p553
      %p555 = scmp.ne.s32.totalorder %s547, %s549
      %p556 = scmp.eq.s32.totalorder %s41, 1
      %p557 = por %p555, %p556
      %p558 = scmp.ne.s32.totalorder %s549, %s550
      %p559 = scmp.eq.s32.totalorder %s41, 0
      %p560 = por %p558, %p559
      %p561 = scmp.ne.s32.totalorder %s549, %s550
      %p562 = scmp.eq.s32.totalorder %s42, 1
      %p563 = por %p561, %p562
      %p565 = scmp.ne.s32.totalorder %s550, %s564
      %p566 = scmp.eq.s32.totalorder %s42, 0
      %p567 = por %p565, %p566
      %s569 = sadd.s32 %s568, 1
      %p572 = scmp.eq.s32.totalorder %s36, 1
      %p573 = scmp.ne.s32.totalorder %s568, %s570
      %p574 = scmp.eq.s32.totalorder %s36, 0
      %p575 = por %p573, %p574
      %p576 = scmp.ne.s32.totalorder %s568, %s570
      %p577 = scmp.eq.s32.totalorder %s41, 1
      %p578 = por %p576, %p577
      %p579 = scmp.ne.s32.totalorder %s570, %s571
      %p580 = scmp.eq.s32.totalorder %s41, 0
      %p581 = por %p579, %p580
      %p582 = scmp.ne.s32.totalorder %s570, %s571
      %p583 = scmp.eq.s32.totalorder %s42, 1
      %p584 = por %p582, %p583
      %p586 = scmp.ne.s32.totalorder %s571, %s585
      %p587 = scmp.eq.s32.totalorder %s42, 0
      %p588 = por %p586, %p587
      %s590 = sadd.s32 %s589, 1
      %p593 = scmp.eq.s32.totalorder %s36, 1
      %p594 = scmp.ne.s32.totalorder %s589, %s591
      %p595 = scmp.eq.s32.totalorder %s36, 0
      %p596 = por %p594, %p595
      %p597 = scmp.ne.s32.totalorder %s589, %s591
      %p598 = scmp.eq.s32.totalorder %s41, 1
      %p599 = por %p597, %p598
      %p600 = scmp.ne.s32.totalorder %s591, %s592
      %p601 = scmp.eq.s32.totalorder %s41, 0
      %p602 = por %p600, %p601
      %p603 = scmp.ne.s32.totalorder %s591, %s592
      %p604 = scmp.eq.s32.totalorder %s42, 1
      %p605 = por %p603, %p604
      %p607 = scmp.ne.s32.totalorder %s592, %s606
      %p608 = scmp.eq.s32.totalorder %s42, 0
      %p609 = por %p607, %p608
      %s611 = sadd.s32 %s610, 1
      %p614 = scmp.eq.s32.totalorder %s36, 1
      %p615 = scmp.ne.s32.totalorder %s610, %s612
      %p616 = scmp.eq.s32.totalorder %s36, 0
      %p617 = por %p615, %p616
      %p618 = scmp.ne.s32.totalorder %s610, %s612
      %p619 = scmp.eq.s32.totalorder %s41, 1
      %p620 = por %p618, %p619
      %p621 = scmp.ne.s32.totalorder %s612, %s613
      %p622 = scmp.eq.s32.totalorder %s41, 0
      %p623 = por %p621, %p622
      %p624 = scmp.ne.s32.totalorder %s612, %s613
      %p625 = scmp.eq.s32.totalorder %s42, 1
      %p626 = por %p624, %p625
      %p628 = scmp.ne.s32.totalorder %s613, %s627
      %p629 = scmp.eq.s32.totalorder %s42, 0
      %p630 = por %p628, %p629
      %s631 = ssub.s32 %s36, %s43
      %p632 = scmp.eq.s32.totalorder %s631, 0
      %s634 = sadd.s32 %s633, 1
      %s635 = scalar_select %p632, %s633, %s634
      %p638 = pneg %p632
      %p639 = scmp.eq.s32.totalorder %s36, 1
      %p640 = por %p638, %p639
      %p641 = scmp.ne.s32.totalorder %s633, %s636
      %p642 = scmp.eq.s32.totalorder %s36, 0
      %p643 = por %p641, %p642
      %p644 = scmp.ne.s32.totalorder %s633, %s636
      %p645 = scmp.eq.s32.totalorder %s41, 1
      %p646 = por %p644, %p645
      %p647 = scmp.ne.s32.totalorder %s636, %s637
      %p648 = scmp.eq.s32.totalorder %s41, 0
      %p649 = por %p647, %p648
      %p650 = scmp.ne.s32.totalorder %s636, %s637
      %p651 = scmp.eq.s32.totalorder %s42, 1
      %p652 = por %p650, %p651
      %p654 = scmp.ne.s32.totalorder %s637, %s653
      %p655 = scmp.eq.s32.totalorder %s42, 0
      %p656 = por %p654, %p655
      %p657 = scmp.le.s32.totalorder 1, %s36
      %p658 = scmp.lt.s32.totalorder %s36, 3
      %p659 = pnand %p657, %p658
      %p660 = pneg %p659
      // Predicated region
      $region9: #{pointnet_forward.3} parent=5 // pred_check
        _
      $region10: #{pointnet_forward.3} parent=5 // pred_check_branch
        %662 = sbr.rel (%p659) target = $region12
      $region11: #{pointnet_forward.3} parent=5 // pred_region
        %s663 = ssub.s32 %s36, 1
        // Predicated region
        $region13: #{pointnet_forward.3} parent=11 // pred_check
          %p664 = pneg %p161
        $region14: #{pointnet_forward.3} parent=11 // pred_check_branch
          %666 = sbr.rel (%p664) target = $region16
        $region15: #{pointnet_forward.3} parent=11 // pred_region
          _
        $region16: #{pointnet_forward.3} parent=11 // pred_fallthru
          _
        // Predicated region
        $region17: #{pointnet_forward.3} parent=11 // pred_check
          %p667 = pneg %p182
        $region18: #{pointnet_forward.3} parent=11 // pred_check_branch
          %669 = sbr.rel (%p667) target = $region20
        $region19: #{pointnet_forward.3} parent=11 // pred_region
          _
        $region20: #{pointnet_forward.3} parent=11 // pred_fallthru
          _
        // Predicated region
        $region21: #{pointnet_forward.3} parent=11 // pred_check
          %p670 = pneg %p203
        $region22: #{pointnet_forward.3} parent=11 // pred_check_branch
          %672 = sbr.rel (%p670) target = $region24
        $region23: #{pointnet_forward.3} parent=11 // pred_region
          _
        $region24: #{pointnet_forward.3} parent=11 // pred_fallthru
          _
        // Predicated region
        $region25: #{pointnet_forward.3} parent=11 // pred_check
          %p673 = pneg %p224
        $region26: #{pointnet_forward.3} parent=11 // pred_check_branch
          %675 = sbr.rel (%p673) target = $region28
        $region27: #{pointnet_forward.3} parent=11 // pred_region
          _
        $region28: #{pointnet_forward.3} parent=11 // pred_fallthru
          _
        // Predicated region
        $region29: #{pointnet_forward.3} parent=11 // pred_check
          %p676 = pneg %p245
        $region30: #{pointnet_forward.3} parent=11 // pred_check_branch
          %678 = sbr.rel (%p676) target = $region32
        $region31: #{pointnet_forward.3} parent=11 // pred_region
          _
        $region32: #{pointnet_forward.3} parent=11 // pred_fallthru
          _
        // Predicated region
        $region33: #{pointnet_forward.3} parent=11 // pred_check
          %p679 = pneg %p266
        $region34: #{pointnet_forward.3} parent=11 // pred_check_branch
          %681 = sbr.rel (%p679) target = $region36
        $region35: #{pointnet_forward.3} parent=11 // pred_region
          _
        $region36: #{pointnet_forward.3} parent=11 // pred_fallthru
          _
        // Predicated region
        $region37: #{pointnet_forward.3} parent=11 // pred_check
          %p682 = pneg %p287
        $region38: #{pointnet_forward.3} parent=11 // pred_check_branch
          %684 = sbr.rel (%p682) target = $region40
        $region39: #{pointnet_forward.3} parent=11 // pred_region
          _
        $region40: #{pointnet_forward.3} parent=11 // pred_fallthru
          _
        // Predicated region
        $region41: #{pointnet_forward.3} parent=11 // pred_check
          %p685 = pneg %p308
        $region42: #{pointnet_forward.3} parent=11 // pred_check_branch
          %687 = sbr.rel (%p685) target = $region44
        $region43: #{pointnet_forward.3} parent=11 // pred_region
          _
        $region44: #{pointnet_forward.3} parent=11 // pred_fallthru
          _
        // Predicated region
        $region45: #{pointnet_forward.3} parent=11 // pred_check
          %p688 = pneg %p329
        $region46: #{pointnet_forward.3} parent=11 // pred_check_branch
          %690 = sbr.rel (%p688) target = $region48
        $region47: #{pointnet_forward.3} parent=11 // pred_region
          _
        $region48: #{pointnet_forward.3} parent=11 // pred_fallthru
          _
        // Predicated region
        $region49: #{pointnet_forward.3} parent=11 // pred_check
          %p691 = pneg %p350
        $region50: #{pointnet_forward.3} parent=11 // pred_check_branch
          %693 = sbr.rel (%p691) target = $region52
        $region51: #{pointnet_forward.3} parent=11 // pred_region
          _
        $region52: #{pointnet_forward.3} parent=11 // pred_fallthru
          _
        // Predicated region
        $region53: #{pointnet_forward.3} parent=11 // pred_check
          %p694 = pneg %p371
        $region54: #{pointnet_forward.3} parent=11 // pred_check_branch
          %696 = sbr.rel (%p694) target = $region56
        $region55: #{pointnet_forward.3} parent=11 // pred_region
          _
        $region56: #{pointnet_forward.3} parent=11 // pred_fallthru
          _
        // Predicated region
        $region57: #{pointnet_forward.3} parent=11 // pred_check
          %p697 = pneg %p392
        $region58: #{pointnet_forward.3} parent=11 // pred_check_branch
          %699 = sbr.rel (%p697) target = $region60
        $region59: #{pointnet_forward.3} parent=11 // pred_region
          _
        $region60: #{pointnet_forward.3} parent=11 // pred_fallthru
          _
        // Predicated region
        $region61: #{pointnet_forward.3} parent=11 // pred_check
          %p700 = pneg %p413
        $region62: #{pointnet_forward.3} parent=11 // pred_check_branch
          %702 = sbr.rel (%p700) target = $region64
        $region63: #{pointnet_forward.3} parent=11 // pred_region
          _
        $region64: #{pointnet_forward.3} parent=11 // pred_fallthru
          _
        // Predicated region
        $region65: #{pointnet_forward.3} parent=11 // pred_check
          %p703 = pneg %p434
        $region66: #{pointnet_forward.3} parent=11 // pred_check_branch
          %705 = sbr.rel (%p703) target = $region68
        $region67: #{pointnet_forward.3} parent=11 // pred_region
          _
        $region68: #{pointnet_forward.3} parent=11 // pred_fallthru
          _
        // Predicated region
        $region69: #{pointnet_forward.3} parent=11 // pred_check
          %p706 = pneg %p455
        $region70: #{pointnet_forward.3} parent=11 // pred_check_branch
          %708 = sbr.rel (%p706) target = $region72
        $region71: #{pointnet_forward.3} parent=11 // pred_region
          _
        $region72: #{pointnet_forward.3} parent=11 // pred_fallthru
          _
        // Predicated region
        $region73: #{pointnet_forward.3} parent=11 // pred_check
          %p709 = pneg %p476
        $region74: #{pointnet_forward.3} parent=11 // pred_check_branch
          %711 = sbr.rel (%p709) target = $region76
        $region75: #{pointnet_forward.3} parent=11 // pred_region
          _
        $region76: #{pointnet_forward.3} parent=11 // pred_fallthru
          _
        // Predicated region
        $region77: #{pointnet_forward.3} parent=11 // pred_check
          %p712 = pneg %p497
        $region78: #{pointnet_forward.3} parent=11 // pred_check_branch
          %714 = sbr.rel (%p712) target = $region80
        $region79: #{pointnet_forward.3} parent=11 // pred_region
          _
        $region80: #{pointnet_forward.3} parent=11 // pred_fallthru
          _
        // Predicated region
        $region81: #{pointnet_forward.3} parent=11 // pred_check
          %p715 = pneg %p518
        $region82: #{pointnet_forward.3} parent=11 // pred_check_branch
          %717 = sbr.rel (%p715) target = $region84
        $region83: #{pointnet_forward.3} parent=11 // pred_region
          _
        $region84: #{pointnet_forward.3} parent=11 // pred_fallthru
          _
        // Predicated region
        $region85: #{pointnet_forward.3} parent=11 // pred_check
          %p718 = pneg %p539
        $region86: #{pointnet_forward.3} parent=11 // pred_check_branch
          %720 = sbr.rel (%p718) target = $region88
        $region87: #{pointnet_forward.3} parent=11 // pred_region
          _
        $region88: #{pointnet_forward.3} parent=11 // pred_fallthru
          _
        // Predicated region
        $region89: #{pointnet_forward.3} parent=11 // pred_check
          %p721 = pneg %p560
        $region90: #{pointnet_forward.3} parent=11 // pred_check_branch
          %723 = sbr.rel (%p721) target = $region92
        $region91: #{pointnet_forward.3} parent=11 // pred_region
          _
        $region92: #{pointnet_forward.3} parent=11 // pred_fallthru
          _
        // Predicated region
        $region93: #{pointnet_forward.3} parent=11 // pred_check
          %p724 = pneg %p581
        $region94: #{pointnet_forward.3} parent=11 // pred_check_branch
          %726 = sbr.rel (%p724) target = $region96
        $region95: #{pointnet_forward.3} parent=11 // pred_region
          _
        $region96: #{pointnet_forward.3} parent=11 // pred_fallthru
          _
        // Predicated region
        $region97: #{pointnet_forward.3} parent=11 // pred_check
          %p727 = pneg %p602
        $region98: #{pointnet_forward.3} parent=11 // pred_check_branch
          %729 = sbr.rel (%p727) target = $region100
        $region99: #{pointnet_forward.3} parent=11 // pred_region
          _
        $region100: #{pointnet_forward.3} parent=11 // pred_fallthru
          _
        // Predicated region
        $region101: #{pointnet_forward.3} parent=11 // pred_check
          %p730 = pneg %p623
        $region102: #{pointnet_forward.3} parent=11 // pred_check_branch
          %732 = sbr.rel (%p730) target = $region104
        $region103: #{pointnet_forward.3} parent=11 // pred_region
          _
        $region104: #{pointnet_forward.3} parent=11 // pred_fallthru
          _
      $region12: #{pointnet_forward.3} parent=5 // pred_fallthru
        _
      %p733 = scmp.lt.s32.totalorder %s36, 2
      // Predicated region
      $region105: #{pointnet_forward.3} parent=5 // pred_check
        %p734 = pneg %p733
      $region106: #{pointnet_forward.3} parent=5 // pred_check_branch
        %736 = sbr.rel (%p734) target = $region108
      $region107: #{pointnet_forward.3} parent=5 // pred_region
        // Predicated region
        $region109: #{pointnet_forward.3} parent=107 // pred_check
          %p737 = pneg %p56
        $region110: #{pointnet_forward.3} parent=107 // pred_check_branch
          %739 = sbr.rel (%p737) target = $region112
        $region111: #{pointnet_forward.3} parent=107 // pred_region
          %p740 = scmp.lt.s32.totalorder %s36, 1
          %s741 = scalar_select %p740, %s36, 1
          %s742 = smul.addr %s741, 8
          %s743 = scalar_lea.vmem %s0, %s742
        $region112: #{pointnet_forward.3} parent=107 // pred_fallthru
          _
        // Predicated region
        $region113: #{pointnet_forward.3} parent=107 // pred_check
          %p744 = pneg %p82
        $region114: #{pointnet_forward.3} parent=107 // pred_check_branch
          %746 = sbr.rel (%p744) target = $region116
        $region115: #{pointnet_forward.3} parent=107 // pred_region
          %s747 = smul.u32 8, %s36
          %p748 = scmp.lt.s32.totalorder %s747, 15
          %s749 = scalar_select %p748, %s747, 15
          %s750 = smul.addr %s749, 8
          %s751 = scalar_lea.vmem %s1, %s750
          %s752 = smul.u32 8, %s36
        $region116: #{pointnet_forward.3} parent=107 // pred_fallthru
          _
        // Predicated region
        $region117: #{pointnet_forward.3} parent=107 // pred_check
          %p753 = pneg %p108
        $region118: #{pointnet_forward.3} parent=107 // pred_check_branch
          %755 = sbr.rel (%p753) target = $region120
        $region119: #{pointnet_forward.3} parent=107 // pred_region
          %s756 = smul.u32 8, %s36
          %p757 = scmp.lt.s32.totalorder %s756, 15
          %s758 = scalar_select %p757, %s756, 15
          %s759 = smul.addr %s758, 8
          %s760 = scalar_lea.vmem %s2, %s759
          %s761 = smul.u32 8, %s36
        $region120: #{pointnet_forward.3} parent=107 // pred_fallthru
          _
        // Predicated region
        $region121: #{pointnet_forward.3} parent=107 // pred_check
          %p762 = pneg %p134
        $region122: #{pointnet_forward.3} parent=107 // pred_check_branch
          %764 = sbr.rel (%p762) target = $region124
        $region123: #{pointnet_forward.3} parent=107 // pred_region
          %s765 = smul.u32 3, %s36
          %p766 = scmp.lt.s32.totalorder %s765, 5
          %s767 = scalar_select %p766, %s765, 5
          %s768 = smul.addr %s767, 4
          %s769 = scalar_lea.vmem %s3, %s768
          %s770 = smul.u32 3, %s36
        $region124: #{pointnet_forward.3} parent=107 // pred_fallthru
          _
      $region108: #{pointnet_forward.3} parent=5 // pred_fallthru
        _
      %p771 = scmp.le.s32.totalorder 1, %s36
      %p772 = scmp.lt.s32.totalorder %s36, 3
      %p773 = pnand %p771, %p772
      %p774 = pneg %p773
      // Predicated region
      $region125: #{pointnet_forward.3} parent=5 // pred_check
        _
      $region126: #{pointnet_forward.3} parent=5 // pred_check_branch
        %776 = sbr.rel (%p773) target = $region128
      $region127: #{pointnet_forward.3} parent=5 // pred_region
        %s777 = ssub.s32 %s36, 1
        %p778 = scmp.lt.s32.totalorder %s41, 1
        %s779 = scalar_select %p778, %s41, 1
        %s780 = smul.addr %s779, 8
        %s781 = scalar_lea.vmem %s0, %s780
        %p782 = pneg %p62
        %p783 = pneg %p59
        %s784 = smul.u32 8, %s41
        %p785 = scmp.lt.s32.totalorder %s784, 15
        %s786 = scalar_select %p785, %s784, 15
        %s787 = smul.addr %s786, 8
        %s788 = scalar_lea.vmem %s1, %s787
        %p789 = pneg %p88
        %p790 = pneg %p85
        %s791 = smul.u32 8, %s41
        %p792 = scmp.lt.s32.totalorder %s791, 15
        %s793 = scalar_select %p792, %s791, 15
        %s794 = smul.addr %s793, 8
        %s795 = scalar_lea.vmem %s2, %s794
        %p796 = pneg %p114
        %p797 = pneg %p111
        %s798 = smul.u32 3, %s41
        %p799 = scmp.lt.s32.totalorder %s798, 5
        %s800 = scalar_select %p799, %s798, 5
        %s801 = smul.addr %s800, 4
        %s802 = scalar_lea.vmem %s3, %s801
        %p803 = pneg %p140
        %p804 = pneg %p137
        %p805 = pneg %p161
        %p806 = pneg %p158
        %p807 = pneg %p182
        %p808 = pneg %p179
        %p809 = pneg %p203
        %p810 = pneg %p200
        %p811 = pneg %p224
        %p812 = pneg %p221
        %p813 = pneg %p245
        %p814 = pneg %p242
        %p815 = pneg %p266
        %p816 = pneg %p263
        %p817 = pneg %p287
        %p818 = pneg %p284
        %p819 = pneg %p308
        %p820 = pneg %p305
        %p821 = pneg %p329
        %p822 = pneg %p326
        %p823 = pneg %p350
        %p824 = pneg %p347
        %p825 = pneg %p371
        %p826 = pneg %p368
        %p827 = pneg %p392
        %p828 = pneg %p389
        %p829 = pneg %p413
        %p830 = pneg %p410
        %p831 = pneg %p434
        %p832 = pneg %p431
        %p833 = pneg %p455
        %p834 = pneg %p452
        %p835 = pneg %p476
        %p836 = pneg %p473
        %p837 = pneg %p497
        %p838 = pneg %p494
        %p839 = pneg %p518
        %p840 = pneg %p515
        %p841 = pneg %p539
        %p842 = pneg %p536
        %p843 = pneg %p560
        %p844 = pneg %p557
        %p845 = pneg %p581
        %p846 = pneg %p578
        %p847 = pneg %p602
        %p848 = pneg %p599
        %p849 = pneg %p623
        %p850 = pneg %p620
        %p851 = pneg %p649
        %p852 = pneg %p646
        %s853 = sand.u32 %s636, 1
        %s854 = scalar_lea.sflag [#allocation3], %s853
        %s855 = sand.u32 %s636, 1
        %s856 = scalar_lea.vmem [#allocation2], %s855
        %p857 = scmp.lt.s32.totalorder %s41, 1
        %s858 = scalar_select %p857, %s41, 1
        %s859 = smul.addr %s858, 8
        %s860 = scalar_lea.vmem %s0, %s859
        %s861 = smul.u32 8, %s41
        %p862 = scmp.lt.s32.totalorder %s861, 15
        %s863 = scalar_select %p862, %s861, 15
        %s864 = smul.addr %s863, 8
        %s865 = scalar_lea.vmem %s1, %s864
        %s866 = smul.u32 8, %s41
        %s867 = smul.u32 8, %s41
        %p868 = scmp.lt.s32.totalorder %s867, 15
        %s869 = scalar_select %p868, %s867, 15
        %s870 = smul.addr %s869, 8
        %s871 = scalar_lea.vmem %s2, %s870
        %s872 = smul.u32 8, %s41
        %s873 = smul.u32 3, %s41
        %p874 = scmp.lt.s32.totalorder %s873, 5
        %s875 = scalar_select %p874, %s873, 5
        %s876 = smul.addr %s875, 4
        %s877 = scalar_lea.vmem %s3, %s876
        %s878 = smul.u32 3, %s41
        %v880 = vld [vmem:[%s865] sm:$0xff]
        %v881 = vld [vmem:[%s865 + $0x8] sm:$0xff]
        %v882 = vld [vmem:[%s865 + $0x10] sm:$0xff]
        %v883 = vld [vmem:[%s865 + $0x18] sm:$0xff]
        %v884 = vld [vmem:[%s865 + $0x20] sm:$0xff]
        %v885 = vld [vmem:[%s865 + $0x28] sm:$0xff]
        %v886 = vld [vmem:[%s865 + $0x30] sm:$0xff]
        %v887 = vld [vmem:[%s865 + $0x38] sm:$0xff]
        %v888 = vpack.c.bf16 %v881, %v880
        %v889 = vpack.c.bf16 %v883, %v882
        %v890 = vpack.c.bf16 %v885, %v884
        %v891 = vpack.c.bf16 %v887, %v886
        %v892 = vld [vmem:[%s871] sm:$0xff]
        %v893 = vld [vmem:[%s871 + $0x8] sm:$0xff]
        %v894 = vld [vmem:[%s871 + $0x10] sm:$0xff]
        %v895 = vld [vmem:[%s871 + $0x18] sm:$0xff]
        %v896 = vld [vmem:[%s871 + $0x20] sm:$0xff]
        %v897 = vld [vmem:[%s871 + $0x28] sm:$0xff]
        %v898 = vld [vmem:[%s871 + $0x30] sm:$0xff]
        %v899 = vld [vmem:[%s871 + $0x38] sm:$0xff]
        %v900 = vpack.c.bf16 %v893, %v892
        %v901 = vpack.c.bf16 %v895, %v894
        %v902 = vpack.c.bf16 %v897, %v896
        %v903 = vpack.c.bf16 %v899, %v898
        %v904 = vld [vmem:[%s4] sm:$0x3]
        %v905 = vld [vmem:[%s5] sm:$0xf]
        %v906 = vld [vmem:[%s5 + $0x4] sm:$0xf]
        %v907 = vld [vmem:[%s5 + $0x8] sm:$0xf]
        %v908 = vld [vmem:[%s5 + $0xc] sm:$0xf]
        %v913 = vunpack.c.l.b16 %v905
        %v914 = vunpack.c.l.b16 %v906
        %v915 = vunpack.c.l.b16 %v907
        %v916 = vunpack.c.l.b16 %v908
        %v917 = vpack.c.b16 %v914, %v913
        %v918 = vpack.c.b16 %v916, %v915
        %vm921 = vcmask 261120
        %v923 = vsel %vm921, %v900, 0
        %v926 = vsel %vm921, %v901, 0
        %v929 = vsel %vm921, %v902, 0
        %v932 = vsel %vm921, %v903, 0
        %934 = vmatprep.subr.bf16.mxu0 0
        %935 = vmatpush1.bf16.msra.mxu0 %v917
        %936 = vmatprep.subr.bf16.mxu0 0
        %937 = vmatpush1.bf16.msra.mxu0 %v918
        %938 = vmatprep.subr.bf16.mxu0 0
        %939 = vmatpush1.bf16.msra.mxu0 0
        %940 = vmatprep.subr.bf16.mxu0 0
        %941 = vmatpush1.bf16.msra.mxu0 0
        %942 = vmatprep.subr.bf16.mxu0 0
        %943 = vmatpush1.bf16.msra.mxu0 0
        %944 = vmatprep.subr.bf16.mxu0 0
        %945 = vmatpush1.bf16.msra.mxu0 0
        %946 = vmatprep.subr.bf16.mxu0 0
        %947 = vmatpush1.bf16.msra.mxu0 0
        %948 = vmatprep.subr.bf16.mxu0 0
        %949 = vmatpush1.bf16.msra.mxu0 0
        %950 = vmatprep.subr.bf16.mxu0 0
        %951 = vmatpush1.bf16.msra.mxu0 0
        %952 = vmatprep.subr.bf16.mxu0 0
        %953 = vmatpush1.bf16.msra.mxu0 0
        %954 = vmatprep.subr.bf16.mxu0 0
        %955 = vmatpush1.bf16.msra.mxu0 0
        %956 = vmatprep.subr.bf16.mxu0 0
        %957 = vmatpush1.bf16.msra.mxu0 0
        %958 = vmatprep.subr.bf16.mxu0 0
        %959 = vmatpush1.bf16.msra.mxu0 0
        %960 = vmatprep.subr.bf16.mxu0 0
        %961 = vmatpush1.bf16.msra.mxu0 0
        %962 = vmatprep.subr.bf16.mxu0 0
        %963 = vmatpush1.bf16.msra.mxu0 0
        %964 = vmatprep.subr.bf16.mxu0 0
        %965 = vmatpush1.bf16.msra.mxu0 0
        %966 = vmatprep.mubr.bf16.mxu0 0
        %967 = vmatmul.mubr.bf16.gmra.mrb[0].mxu0 %v923
        %v968 = vpop.f32.mrb[0].mxu0
        %v969 = vadd.f32 0.0, %v968
        %v970 = vpop.f32.mrb[0].mxu0
        %v971 = vpop.f32.mrb[0].mxu0
        %v972 = vadd.f32 0.0, %v971
        %v973 = vpop.f32.mrb[0].mxu0
        %974 = vmatprep.mubr.bf16.mxu0 0
        %975 = vmatmul.mubr.bf16.gmra.mrb[0].mxu0 %v926
        %v976 = vpop.f32.mrb[0].mxu0
        %v977 = vadd.f32 0.0, %v976
        %v978 = vpop.f32.mrb[0].mxu0
        %v979 = vpop.f32.mrb[0].mxu0
        %v980 = vadd.f32 0.0, %v979
        %v981 = vpop.f32.mrb[0].mxu0
        %982 = vmatprep.mubr.bf16.mxu0 0
        %983 = vmatmul.mubr.bf16.gmra.mrb[0].mxu0 %v929
        %v984 = vpop.f32.mrb[0].mxu0
        %v985 = vadd.f32 0.0, %v984
        %v986 = vpop.f32.mrb[0].mxu0
        %v987 = vpop.f32.mrb[0].mxu0
        %v988 = vadd.f32 0.0, %v987
        %v989 = vpop.f32.mrb[0].mxu0
        %990 = vmatprep.mubr.bf16.mxu0 0
        %991 = vmatmul.mubr.bf16.gmra.mrb[0].mxu0 %v932
        %v992 = vpop.f32.mrb[0].mxu0
        %v993 = vadd.f32 0.0, %v992
        %v994 = vpop.f32.mrb[0].mxu0
        %v995 = vpop.f32.mrb[0].mxu0
        %v996 = vadd.f32 0.0, %v995
        %v997 = vpop.f32.mrb[0].mxu0
        %998 = vdwg.mxu0
        %vm999 = vcmask 23552
        %v1001 = vsel %vm999, %v888, 0
        %v1004 = vsel %vm999, %v889, 0
        %v1007 = vsel %vm999, %v890, 0
        %v1010 = vsel %vm999, %v891, 0
        %vm1012 = vcmask 1040384
        %vm1013 = vcmask 1041408
        %v1014 = vsel %vm1012, 4294967295, 65535
        %v1015 = vsel %vm1013, %v1014, 0
        %v1017 = vand.u32 %v904, %v1015
        %1019 = vmatprep.subr.bf16.mxu0 0
        %1020 = vmatpush1.bf16.msra.mxu0 %v1017
        %1021 = vmatprep.subr.bf16.mxu0 0
        %1022 = vmatpush1.bf16.msra.mxu0 0
        %1023 = vmatprep.subr.bf16.mxu0 0
        %1024 = vmatpush1.bf16.msra.mxu0 0
        %1025 = vmatprep.subr.bf16.mxu0 0
        %1026 = vmatpush1.bf16.msra.mxu0 0
        %1027 = vmatprep.subr.bf16.mxu0 0
        %1028 = vmatpush1.bf16.msra.mxu0 0
        %1029 = vmatprep.subr.bf16.mxu0 0
        %1030 = vmatpush1.bf16.msra.mxu0 0
        %1031 = vmatprep.subr.bf16.mxu0 0
        %1032 = vmatpush1.bf16.msra.mxu0 0
        %1033 = vmatprep.subr.bf16.mxu0 0
        %1034 = vmatpush1.bf16.msra.mxu0 0
        %1035 = vmatprep.subr.bf16.mxu0 0
        %1036 = vmatpush1.bf16.msra.mxu0 0
        %1037 = vmatprep.subr.bf16.mxu0 0
        %1038 = vmatpush1.bf16.msra.mxu0 0
        %1039 = vmatprep.subr.bf16.mxu0 0
        %1040 = vmatpush1.bf16.msra.mxu0 0
        %1041 = vmatprep.subr.bf16.mxu0 0
        %1042 = vmatpush1.bf16.msra.mxu0 0
        %1043 = vmatprep.subr.bf16.mxu0 0
        %1044 = vmatpush1.bf16.msra.mxu0 0
        %1045 = vmatprep.subr.bf16.mxu0 0
        %1046 = vmatpush1.bf16.msra.mxu0 0
        %1047 = vmatprep.subr.bf16.mxu0 0
        %1048 = vmatpush1.bf16.msra.mxu0 0
        %1049 = vmatprep.subr.bf16.mxu0 0
        %1050 = vmatpush1.bf16.msra.mxu0 0
        %1051 = vmatprep.mubr.bf16.mxu0 0
        %1052 = vmatmul.mubr.bf16.gmra.mrb[0].mxu0 %v1001
        %v1053 = vpop.f32.mrb[0].mxu0
        %v1054 = vadd.f32 %v969, %v1053
        %v1055 = vpop.f32.mrb[0].mxu0
        %v1056 = vpop.f32.mrb[0].mxu0
        %v1057 = vadd.f32 %v972, %v1056
        %v1058 = vpop.f32.mrb[0].mxu0
        %1059 = vmatprep.mubr.bf16.mxu0 0
        %1060 = vmatmul.mubr.bf16.gmra.mrb[0].mxu0 %v1004
        %v1061 = vpop.f32.mrb[0].mxu0
        %v1062 = vadd.f32 %v977, %v1061
        %v1063 = vpop.f32.mrb[0].mxu0
        %v1064 = vpop.f32.mrb[0].mxu0
        %v1065 = vadd.f32 %v980, %v1064
        %v1066 = vpop.f32.mrb[0].mxu0
        %1067 = vmatprep.mubr.bf16.mxu0 0
        %1068 = vmatmul.mubr.bf16.gmra.mrb[0].mxu0 %v1007
        %v1069 = vpop.f32.mrb[0].mxu0
        %v1070 = vadd.f32 %v985, %v1069
        %v1071 = vpop.f32.mrb[0].mxu0
        %v1072 = vpop.f32.mrb[0].mxu0
        %v1073 = vadd.f32 %v988, %v1072
        %v1074 = vpop.f32.mrb[0].mxu0
        %1075 = vmatprep.mubr.bf16.mxu0 0
        %1076 = vmatmul.mubr.bf16.gmra.mrb[0].mxu0 %v1010
        %v1077 = vpop.f32.mrb[0].mxu0
        %v1078 = vadd.f32 %v993, %v1077
        %v1079 = vpop.f32.mrb[0].mxu0
        %v1080 = vpop.f32.mrb[0].mxu0
        %v1081 = vadd.f32 %v996, %v1080
        %v1082 = vpop.f32.mrb[0].mxu0
        %1083 = vdwg.mxu0
        %v1084 = vld [vmem:[%s6] sm:$0x1]
        %v1086 = vlaneseq
        %v1087 = vshrl.u32 %v1086, 7
        %v1088 = vsub.s32 0, %v1087
        %v1089 = vrot.slane %v1084, %v1088
        %v1091 = vadd.f32 %v1054, %v1089
        %v1092 = vadd.f32 %v1057, %v1089
        %v1093 = vadd.f32 %v1062, %v1089
        %v1094 = vadd.f32 %v1065, %v1089
        %v1095 = vadd.f32 %v1070, %v1089
        %v1096 = vadd.f32 %v1073, %v1089
        %v1097 = vadd.f32 %v1078, %v1089
        %v1098 = vadd.f32 %v1081, %v1089
        %v1099 = vmax.f32 %v1091, 0.0
        %v1100 = vmax.f32 %v1092, 0.0
        %v1101 = vmax.f32 %v1093, 0.0
        %v1102 = vmax.f32 %v1094, 0.0
        %v1103 = vmax.f32 %v1095, 0.0
        %v1104 = vmax.f32 %v1096, 0.0
        %v1105 = vmax.f32 %v1097, 0.0
        %v1106 = vmax.f32 %v1098, 0.0
        %v1107 = vpack.c.bf16 %v1100, %v1099
        %v1108 = vpack.c.bf16 %v1102, %v1101
        %v1109 = vpack.c.bf16 %v1104, %v1103
        %v1110 = vpack.c.bf16 %v1106, %v1105
        %v1111 = vld [vmem:[%s7] sm:$0xf]
        %v1112 = vld [vmem:[%s7 + $0x4] sm:$0xf]
        %v1113 = vld [vmem:[%s7 + $0x8] sm:$0xf]
        %v1114 = vld [vmem:[%s7 + $0xc] sm:$0xf]
        %v1115 = vld [vmem:[%s8] sm:$0x1]
        %v1117 = vlaneseq
        %v1118 = vshrl.u32 %v1117, 7
        %v1119 = vsub.s32 0, %v1118
        %v1120 = vrot.slane %v1115, %v1119
        %v1126 = vunpack.c.l.b16 %v1111
        %v1127 = vunpack.c.l.b16 %v1112
        %v1128 = vunpack.c.l.b16 %v1113
        %v1129 = vunpack.c.l.b16 %v1114
        %v1130 = vpack.c.b16 %v1127, %v1126
        %v1131 = vpack.c.b16 %v1129, %v1128
        %v1135 = vsel %vm921, %v1107, 0
        %v1138 = vsel %vm921, %v1108, 0
        %v1141 = vsel %vm921, %v1109, 0
        %v1144 = vsel %vm921, %v1110, 0
        %1146 = vmatprep.subr.bf16.mxu0 0
        %1147 = vmatpush1.bf16.msra.mxu0 %v1130
        %1148 = vmatprep.subr.bf16.mxu0 0
        %1149 = vmatpush1.bf16.msra.mxu0 %v1131
        %1150 = vmatprep.subr.bf16.mxu0 0
        %1151 = vmatpush1.bf16.msra.mxu0 0
        %1152 = vmatprep.subr.bf16.mxu0 0
        %1153 = vmatpush1.bf16.msra.mxu0 0
        %1154 = vmatprep.subr.bf16.mxu0 0
        %1155 = vmatpush1.bf16.msra.mxu0 0
        %1156 = vmatprep.subr.bf16.mxu0 0
        %1157 = vmatpush1.bf16.msra.mxu0 0
        %1158 = vmatprep.subr.bf16.mxu0 0
        %1159 = vmatpush1.bf16.msra.mxu0 0
        %1160 = vmatprep.subr.bf16.mxu0 0
        %1161 = vmatpush1.bf16.msra.mxu0 0
        %1162 = vmatprep.subr.bf16.mxu0 0
        %1163 = vmatpush1.bf16.msra.mxu0 0
        %1164 = vmatprep.subr.bf16.mxu0 0
        %1165 = vmatpush1.bf16.msra.mxu0 0
        %1166 = vmatprep.subr.bf16.mxu0 0
        %1167 = vmatpush1.bf16.msra.mxu0 0
        %1168 = vmatprep.subr.bf16.mxu0 0
        %1169 = vmatpush1.bf16.msra.mxu0 0
        %1170 = vmatprep.subr.bf16.mxu0 0
        %1171 = vmatpush1.bf16.msra.mxu0 0
        %1172 = vmatprep.subr.bf16.mxu0 0
        %1173 = vmatpush1.bf16.msra.mxu0 0
        %1174 = vmatprep.subr.bf16.mxu0 0
        %1175 = vmatpush1.bf16.msra.mxu0 0
        %1176 = vmatprep.subr.bf16.mxu0 0
        %1177 = vmatpush1.bf16.msra.mxu0 0
        %1178 = vmatprep.mubr.bf16.mxu0 0
        %1179 = vmatmul.mubr.bf16.gmra.mrb[0].mxu0 %v1135
        %v1180 = vpop.f32.mrb[0].mxu0
        %v1181 = vadd.f32 %v1120, %v1180
        %v1182 = vpop.f32.mrb[0].mxu0
        %v1183 = vpop.f32.mrb[0].mxu0
        %v1184 = vadd.f32 %v1120, %v1183
        %v1185 = vpop.f32.mrb[0].mxu0
        %1186 = vmatprep.mubr.bf16.mxu0 0
        %1187 = vmatmul.mubr.bf16.gmra.mrb[0].mxu0 %v1138
        %v1188 = vpop.f32.mrb[0].mxu0
        %v1189 = vadd.f32 %v1120, %v1188
        %v1190 = vpop.f32.mrb[0].mxu0
        %v1191 = vpop.f32.mrb[0].mxu0
        %v1192 = vadd.f32 %v1120, %v1191
        %v1193 = vpop.f32.mrb[0].mxu0
        %1194 = vmatprep.mubr.bf16.mxu0 0
        %1195 = vmatmul.mubr.bf16.gmra.mrb[0].mxu0 %v1141
        %v1196 = vpop.f32.mrb[0].mxu0
        %v1197 = vadd.f32 %v1120, %v1196
        %v1198 = vpop.f32.mrb[0].mxu0
        %v1199 = vpop.f32.mrb[0].mxu0
        %v1200 = vadd.f32 %v1120, %v1199
        %v1201 = vpop.f32.mrb[0].mxu0
        %1202 = vmatprep.mubr.bf16.mxu0 0
        %1203 = vmatmul.mubr.bf16.gmra.mrb[0].mxu0 %v1144
        %v1204 = vpop.f32.mrb[0].mxu0
        %v1205 = vadd.f32 %v1120, %v1204
        %v1206 = vpop.f32.mrb[0].mxu0
        %v1207 = vpop.f32.mrb[0].mxu0
        %v1208 = vadd.f32 %v1120, %v1207
        %v1209 = vpop.f32.mrb[0].mxu0
        %1210 = vdwg.mxu0
        %v1211 = vmax.f32 %v1181, 0.0
        %v1212 = vmax.f32 %v1184, 0.0
        %v1213 = vmax.f32 %v1189, 0.0
        %v1214 = vmax.f32 %v1192, 0.0
        %v1215 = vmax.f32 %v1197, 0.0
        %v1216 = vmax.f32 %v1200, 0.0
        %v1217 = vmax.f32 %v1205, 0.0
        %v1218 = vmax.f32 %v1208, 0.0
        %v1219 = vpack.c.bf16 %v1212, %v1211
        %v1220 = vpack.c.bf16 %v1214, %v1213
        %v1221 = vpack.c.bf16 %v1216, %v1215
        %v1222 = vpack.c.bf16 %v1218, %v1217
        %v1223 = vld [vmem:[%s9] sm:$0xf]
        %v1224 = vld [vmem:[%s9 + $0x4] sm:$0xf]
        %v1225 = vld [vmem:[%s9 + $0x8] sm:$0xf]
        %v1226 = vld [vmem:[%s9 + $0xc] sm:$0xf]
        %v1227 = vld [vmem:[%s9 + $0x10] sm:$0xf]
        %v1228 = vld [vmem:[%s9 + $0x14] sm:$0xf]
        %v1229 = vld [vmem:[%s9 + $0x18] sm:$0xf]
        %v1230 = vld [vmem:[%s9 + $0x1c] sm:$0xf]
        %v1231 = vld [vmem:[%s10] sm:$0x1]
        %v1233 = vlaneseq
        %v1234 = vshrl.u32 %v1233, 7
        %v1235 = vsub.s32 0, %v1234
        %v1236 = vrot.slane %v1231, %v1235
        %v1246 = vunpack.c.l.b16 %v1223
        %v1247 = vunpack.c.l.b16 %v1224
        %v1248 = vunpack.c.l.b16 %v1225
        %v1249 = vunpack.c.l.b16 %v1226
        %v1250 = vunpack.c.l.b16 %v1227
        %v1251 = vunpack.c.l.b16 %v1228
        %v1252 = vunpack.c.l.b16 %v1229
        %v1253 = vunpack.c.l.b16 %v1230
        %v1254 = vpack.c.b16 %v1247, %v1246
        %v1255 = vpack.c.b16 %v1249, %v1248
        %v1256 = vpack.c.b16 %v1251, %v1250
        %v1257 = vpack.c.b16 %v1253, %v1252
        %vm1262 = vcmask 523264
        %v1264 = vsel %vm1262, %v1219, 0
        %v1267 = vsel %vm1262, %v1220, 0
        %v1270 = vsel %vm1262, %v1221, 0
        %v1273 = vsel %vm1262, %v1222, 0
        %1275 = vmatprep.subr.bf16.mxu0 0
        %1276 = vmatpush1.bf16.msra.mxu0 %v1254
        %1277 = vmatprep.subr.bf16.mxu0 0
        %1278 = vmatpush1.bf16.msra.mxu0 %v1255
        %1279 = vmatprep.subr.bf16.mxu0 0
        %1280 = vmatpush1.bf16.msra.mxu0 %v1256
        %1281 = vmatprep.subr.bf16.mxu0 0
        %1282 = vmatpush1.bf16.msra.mxu0 %v1257
        %1283 = vmatprep.subr.bf16.mxu0 0
        %1284 = vmatpush1.bf16.msra.mxu0 0
        %1285 = vmatprep.subr.bf16.mxu0 0
        %1286 = vmatpush1.bf16.msra.mxu0 0
        %1287 = vmatprep.subr.bf16.mxu0 0
        %1288 = vmatpush1.bf16.msra.mxu0 0
        %1289 = vmatprep.subr.bf16.mxu0 0
        %1290 = vmatpush1.bf16.msra.mxu0 0
        %1291 = vmatprep.subr.bf16.mxu0 0
        %1292 = vmatpush1.bf16.msra.mxu0 0
        %1293 = vmatprep.subr.bf16.mxu0 0
        %1294 = vmatpush1.bf16.msra.mxu0 0
        %1295 = vmatprep.subr.bf16.mxu0 0
        %1296 = vmatpush1.bf16.msra.mxu0 0
        %1297 = vmatprep.subr.bf16.mxu0 0
        %1298 = vmatpush1.bf16.msra.mxu0 0
        %1299 = vmatprep.subr.bf16.mxu0 0
        %1300 = vmatpush1.bf16.msra.mxu0 0
        %1301 = vmatprep.subr.bf16.mxu0 0
        %1302 = vmatpush1.bf16.msra.mxu0 0
        %1303 = vmatprep.subr.bf16.mxu0 0
        %1304 = vmatpush1.bf16.msra.mxu0 0
        %1305 = vmatprep.subr.bf16.mxu0 0
        %1306 = vmatpush1.bf16.msra.mxu0 0
        %1307 = vmatprep.mubr.bf16.mxu0 0
        %1308 = vmatmul.mubr.bf16.gmra.mrb[0].mxu0 %v1264
        %v1309 = vpop.f32.mrb[0].mxu0
        %v1310 = vadd.f32 %v1236, %v1309
        %v1311 = vpop.f32.mrb[0].mxu0
        %v1312 = vpop.f32.mrb[0].mxu0
        %v1313 = vadd.f32 %v1236, %v1312
        %v1314 = vpop.f32.mrb[0].mxu0
        %1315 = vmatprep.mubr.bf16.mxu0 0
        %1316 = vmatmul.mubr.bf16.gmra.mrb[0].mxu0 %v1267
        %v1317 = vpop.f32.mrb[0].mxu0
        %v1318 = vadd.f32 %v1236, %v1317
        %v1319 = vpop.f32.mrb[0].mxu0
        %v1320 = vpop.f32.mrb[0].mxu0
        %v1321 = vadd.f32 %v1236, %v1320
        %v1322 = vpop.f32.mrb[0].mxu0
        %1323 = vmatprep.mubr.bf16.mxu0 0
        %1324 = vmatmul.mubr.bf16.gmra.mrb[0].mxu0 %v1270
        %v1325 = vpop.f32.mrb[0].mxu0
        %v1326 = vadd.f32 %v1236, %v1325
        %v1327 = vpop.f32.mrb[0].mxu0
        %v1328 = vpop.f32.mrb[0].mxu0
        %v1329 = vadd.f32 %v1236, %v1328
        %v1330 = vpop.f32.mrb[0].mxu0
        %1331 = vmatprep.mubr.bf16.mxu0 0
        %1332 = vmatmul.mubr.bf16.gmra.mrb[0].mxu0 %v1273
        %v1333 = vpop.f32.mrb[0].mxu0
        %v1334 = vadd.f32 %v1236, %v1333
        %v1335 = vpop.f32.mrb[0].mxu0
        %v1336 = vpop.f32.mrb[0].mxu0
        %v1337 = vadd.f32 %v1236, %v1336
        %v1338 = vpop.f32.mrb[0].mxu0
        %1339 = vdwg.mxu0
        %v1340 = vmax.f32 %v1310, 0.0
        %v1341 = vmax.f32 %v1313, 0.0
        %v1342 = vmax.f32 %v1318, 0.0
        %v1343 = vmax.f32 %v1321, 0.0
        %v1344 = vmax.f32 %v1326, 0.0
        %v1345 = vmax.f32 %v1329, 0.0
        %v1346 = vmax.f32 %v1334, 0.0
        %v1347 = vmax.f32 %v1337, 0.0
        %v1348 = vsel %vm921, %v1340, -inf
        %v1349 = vrot.slane %v1348, 4
        %v1350 = vmax.f32 %v1348, %v1349
        %v1351 = vrot.slane %v1350, 2
        %v1352 = vmax.f32 %v1350, %v1351
        %v1353 = vrot.slane %v1352, 1
        %v1354 = vmax.f32 %v1352, %v1353
        %v1355 = vsel %vm921, %v1341, -inf
        %v1356 = vrot.slane %v1355, 4
        %v1357 = vmax.f32 %v1355, %v1356
        %v1358 = vrot.slane %v1357, 2
        %v1359 = vmax.f32 %v1357, %v1358
        %v1360 = vrot.slane %v1359, 1
        %v1361 = vmax.f32 %v1359, %v1360
        %v1362 = vsel %vm921, %v1342, -inf
        %v1363 = vrot.slane %v1362, 4
        %v1364 = vmax.f32 %v1362, %v1363
        %v1365 = vrot.slane %v1364, 2
        %v1366 = vmax.f32 %v1364, %v1365
        %v1367 = vrot.slane %v1366, 1
        %v1368 = vmax.f32 %v1366, %v1367
        %v1369 = vsel %vm921, %v1343, -inf
        %v1370 = vrot.slane %v1369, 4
        %v1371 = vmax.f32 %v1369, %v1370
        %v1372 = vrot.slane %v1371, 2
        %v1373 = vmax.f32 %v1371, %v1372
        %v1374 = vrot.slane %v1373, 1
        %v1375 = vmax.f32 %v1373, %v1374
        %v1376 = vsel %vm921, %v1344, -inf
        %v1377 = vrot.slane %v1376, 4
        %v1378 = vmax.f32 %v1376, %v1377
        %v1379 = vrot.slane %v1378, 2
        %v1380 = vmax.f32 %v1378, %v1379
        %v1381 = vrot.slane %v1380, 1
        %v1382 = vmax.f32 %v1380, %v1381
        %v1383 = vsel %vm921, %v1345, -inf
        %v1384 = vrot.slane %v1383, 4
        %v1385 = vmax.f32 %v1383, %v1384
        %v1386 = vrot.slane %v1385, 2
        %v1387 = vmax.f32 %v1385, %v1386
        %v1388 = vrot.slane %v1387, 1
        %v1389 = vmax.f32 %v1387, %v1388
        %v1390 = vsel %vm921, %v1346, -inf
        %v1391 = vrot.slane %v1390, 4
        %v1392 = vmax.f32 %v1390, %v1391
        %v1393 = vrot.slane %v1392, 2
        %v1394 = vmax.f32 %v1392, %v1393
        %v1395 = vrot.slane %v1394, 1
        %v1396 = vmax.f32 %v1394, %v1395
        %v1397 = vsel %vm921, %v1347, -inf
        %v1398 = vrot.slane %v1397, 4
        %v1399 = vmax.f32 %v1397, %v1398
        %v1400 = vrot.slane %v1399, 2
        %v1401 = vmax.f32 %v1399, %v1400
        %v1402 = vrot.slane %v1401, 1
        %v1403 = vmax.f32 %v1401, %v1402
        %v1404 = vld [vmem:[%s11] sm:$0xf]
        %v1405 = vpack.c.bf16 %v1354, %v1354
        %v1406 = vpack.c.bf16 %v1361, %v1361
        %v1407 = vpack.c.bf16 %v1368, %v1368
        %v1408 = vpack.c.bf16 %v1375, %v1375
        %v1409 = vpack.c.bf16 %v1382, %v1382
        %v1410 = vpack.c.bf16 %v1389, %v1389
        %v1411 = vpack.c.bf16 %v1396, %v1396
        %v1412 = vpack.c.bf16 %v1403, %v1403
        %v1413 = vld [vmem:[%s12] sm:$0xf]
        %v1414 = vld [vmem:[%s877] sm:$0xf]
        %v1415 = vld [vmem:[%s877 + $0x4] sm:$0xf]
        %v1416 = vld [vmem:[%s877 + $0x8] sm:$0xf]
        %v1420 = vunpack.c.l.b16 %v1414
        %v1421 = vunpack.c.l.b16 %v1415
        %v1422 = vunpack.c.l.b16 %v1416
        %v1423 = vpack.c.b16 %v1421, %v1420
        %v1424 = vpack.c.b16 %v1422, %v1422
        %vm1426 = vcmask 195584
        %v1428 = vsel %vm1426, %v1413, 0
        %vm1430 = vcmask 1043456
        %v1432 = vsel %vm1430, %v1424, 0
        %1434 = vmatprep.subr.bf16.mxu0 0
        %1435 = vmatpush1.bf16.msra.mxu0 %v1423
        %1436 = vmatprep.subr.bf16.mxu0 0
        %1437 = vmatpush1.bf16.msra.mxu0 %v1432
        %1438 = vmatprep.subr.bf16.mxu0 0
        %1439 = vmatpush1.bf16.msra.mxu0 0
        %1440 = vmatprep.subr.bf16.mxu0 0
        %1441 = vmatpush1.bf16.msra.mxu0 0
        %1442 = vmatprep.subr.bf16.mxu0 0
        %1443 = vmatpush1.bf16.msra.mxu0 0
        %1444 = vmatprep.subr.bf16.mxu0 0
        %1445 = vmatpush1.bf16.msra.mxu0 0
        %1446 = vmatprep.subr.bf16.mxu0 0
        %1447 = vmatpush1.bf16.msra.mxu0 0
        %1448 = vmatprep.subr.bf16.mxu0 0
        %1449 = vmatpush1.bf16.msra.mxu0 0
        %1450 = vmatprep.subr.bf16.mxu0 0
        %1451 = vmatpush1.bf16.msra.mxu0 0
        %1452 = vmatprep.subr.bf16.mxu0 0
        %1453 = vmatpush1.bf16.msra.mxu0 0
        %1454 = vmatprep.subr.bf16.mxu0 0
        %1455 = vmatpush1.bf16.msra.mxu0 0
        %1456 = vmatprep.subr.bf16.mxu0 0
        %1457 = vmatpush1.bf16.msra.mxu0 0
        %1458 = vmatprep.subr.bf16.mxu0 0
        %1459 = vmatpush1.bf16.msra.mxu0 0
        %1460 = vmatprep.subr.bf16.mxu0 0
        %1461 = vmatpush1.bf16.msra.mxu0 0
        %1462 = vmatprep.subr.bf16.mxu0 0
        %1463 = vmatpush1.bf16.msra.mxu0 0
        %1464 = vmatprep.subr.bf16.mxu0 0
        %1465 = vmatpush1.bf16.msra.mxu0 0
        %1466 = vmatprep.mubr.bf16.mxu0 0
        %1467 = vmatmul.mubr.bf16.gmra.mrb[0].mxu0 %v1428
        %v1468 = vpop.f32.mrb[0].mxu0
        %v1469 = vadd.f32 0.0, %v1468
        %v1470 = vpop.f32.mrb[0].mxu0
        %v1471 = vpop.f32.mrb[0].mxu0
        %v1472 = vpop.f32.mrb[0].mxu0
        %1473 = vdwg.mxu0
        %v1482 = vunpack.c.l.b16 %v1405
        %v1483 = vunpack.c.l.b16 %v1406
        %v1484 = vunpack.c.l.b16 %v1407
        %v1485 = vunpack.c.l.b16 %v1408
        %v1486 = vunpack.c.l.b16 %v1409
        %v1487 = vunpack.c.l.b16 %v1410
        %v1488 = vunpack.c.l.b16 %v1411
        %v1489 = vunpack.c.l.b16 %v1412
        %vm1490 = vcmask 1041409
        %v1491 = vsel %vm1490, %v1483, %v1482
        %vm1492 = vcmask 1042434
        %v1493 = vsel %vm1492, %v1484, %v1491
        %vm1494 = vcmask 1043459
        %v1495 = vsel %vm1494, %v1485, %v1493
        %vm1496 = vcmask 1044484
        %v1497 = vsel %vm1496, %v1486, %v1495
        %vm1498 = vcmask 1045509
        %v1499 = vsel %vm1498, %v1487, %v1497
        %vm1500 = vcmask 1046534
        %v1501 = vsel %vm1500, %v1488, %v1499
        %vm1502 = vcmask 1047559
        %v1503 = vsel %vm1502, %v1489, %v1501
        %v1504 = vpack.c.b16 %v1503, %v1503
        %vm1505 = vcmask 64512
        %v1507 = vsel %vm1505, %v1404, 0
        %v1510 = vsel %vm1430, %v1504, 0
        %1512 = vmatprep.subr.bf16.mxu0 0
        %1513 = vmatpush1.bf16.msra.mxu0 %v1510
        %1514 = vmatprep.subr.bf16.mxu0 0
        %1515 = vmatpush1.bf16.msra.mxu0 0
        %1516 = vmatprep.subr.bf16.mxu0 0
        %1517 = vmatpush1.bf16.msra.mxu0 0
        %1518 = vmatprep.subr.bf16.mxu0 0
        %1519 = vmatpush1.bf16.msra.mxu0 0
        %1520 = vmatprep.subr.bf16.mxu0 0
        %1521 = vmatpush1.bf16.msra.mxu0 0
        %1522 = vmatprep.subr.bf16.mxu0 0
        %1523 = vmatpush1.bf16.msra.mxu0 0
        %1524 = vmatprep.subr.bf16.mxu0 0
        %1525 = vmatpush1.bf16.msra.mxu0 0
        %1526 = vmatprep.subr.bf16.mxu0 0
        %1527 = vmatpush1.bf16.msra.mxu0 0
        %1528 = vmatprep.subr.bf16.mxu0 0
        %1529 = vmatpush1.bf16.msra.mxu0 0
        %1530 = vmatprep.subr.bf16.mxu0 0
        %1531 = vmatpush1.bf16.msra.mxu0 0
        %1532 = vmatprep.subr.bf16.mxu0 0
        %1533 = vmatpush1.bf16.msra.mxu0 0
        %1534 = vmatprep.subr.bf16.mxu0 0
        %1535 = vmatpush1.bf16.msra.mxu0 0
        %1536 = vmatprep.subr.bf16.mxu0 0
        %1537 = vmatpush1.bf16.msra.mxu0 0
        %1538 = vmatprep.subr.bf16.mxu0 0
        %1539 = vmatpush1.bf16.msra.mxu0 0
        %1540 = vmatprep.subr.bf16.mxu0 0
        %1541 = vmatpush1.bf16.msra.mxu0 0
        %1542 = vmatprep.subr.bf16.mxu0 0
        %1543 = vmatpush1.bf16.msra.mxu0 0
        %1544 = vmatprep.mubr.bf16.mxu0 0
        %1545 = vmatmul.mubr.bf16.gmra.mrb[0].mxu0 %v1507
        %v1546 = vpop.f32.mrb[0].mxu0
        %v1547 = vadd.f32 %v1469, %v1546
        %v1548 = vpop.f32.mrb[0].mxu0
        %v1549 = vpop.f32.mrb[0].mxu0
        %v1550 = vpop.f32.mrb[0].mxu0
        %1551 = vdwg.mxu0
        %v1552 = vld [vmem:[%s13] sm:$0xff]
        %1554 = vset.pattern.permute.xlu0 0
        %1555 = vperm.xlu0 %1554, %v1552
        %v1556 = vpop.permute.xlu0 %1555
        %v1558 = vadd.f32 %v1547, %v1556
        %v1559 = vld [vmem:[%s860] sm:$0xff]
        %v1560 = vpack.c.bf16 %v1559, %v1559
        %v1561 = vld [vmem:[%s14] sm:$0x3]
        %v1562 = vpack.c.bf16 %v1558, %v1558
        %v1563 = vld [vmem:[%s15] sm:$0xf]
        %v1564 = vld [vmem:[%s15 + $0x4] sm:$0xf]
        %v1565 = vld [vmem:[%s15 + $0x8] sm:$0xf]
        %v1566 = vld [vmem:[%s15 + $0xc] sm:$0xf]
        %v1571 = vunpack.c.l.b16 %v1563
        %v1572 = vunpack.c.l.b16 %v1564
        %v1573 = vunpack.c.l.b16 %v1565
        %v1574 = vunpack.c.l.b16 %v1566
        %v1575 = vpack.c.b16 %v1572, %v1571
        %v1576 = vpack.c.b16 %v1574, %v1573
        %v1580 = vsel %vm921, %v1562, 0
        %1582 = vmatprep.subr.bf16.mxu0 0
        %1583 = vmatpush1.bf16.msra.mxu0 %v1575
        %1584 = vmatprep.subr.bf16.mxu0 0
        %1585 = vmatpush1.bf16.msra.mxu0 %v1576
        %1586 = vmatprep.subr.bf16.mxu0 0
        %1587 = vmatpush1.bf16.msra.mxu0 0
        %1588 = vmatprep.subr.bf16.mxu0 0
        %1589 = vmatpush1.bf16.msra.mxu0 0
        %1590 = vmatprep.subr.bf16.mxu0 0
        %1591 = vmatpush1.bf16.msra.mxu0 0
        %1592 = vmatprep.subr.bf16.mxu0 0
        %1593 = vmatpush1.bf16.msra.mxu0 0
        %1594 = vmatprep.subr.bf16.mxu0 0
        %1595 = vmatpush1.bf16.msra.mxu0 0
        %1596 = vmatprep.subr.bf16.mxu0 0
        %1597 = vmatpush1.bf16.msra.mxu0 0
        %1598 = vmatprep.subr.bf16.mxu0 0
        %1599 = vmatpush1.bf16.msra.mxu0 0
        %1600 = vmatprep.subr.bf16.mxu0 0
        %1601 = vmatpush1.bf16.msra.mxu0 0
        %1602 = vmatprep.subr.bf16.mxu0 0
        %1603 = vmatpush1.bf16.msra.mxu0 0
        %1604 = vmatprep.subr.bf16.mxu0 0
        %1605 = vmatpush1.bf16.msra.mxu0 0
        %1606 = vmatprep.subr.bf16.mxu0 0
        %1607 = vmatpush1.bf16.msra.mxu0 0
        %1608 = vmatprep.subr.bf16.mxu0 0
        %1609 = vmatpush1.bf16.msra.mxu0 0
        %1610 = vmatprep.subr.bf16.mxu0 0
        %1611 = vmatpush1.bf16.msra.mxu0 0
        %1612 = vmatprep.subr.bf16.mxu0 0
        %1613 = vmatpush1.bf16.msra.mxu0 0
        %1614 = vmatprep.mubr.bf16.mxu0 0
        %1615 = vmatmul.mubr.bf16.gmra.mrb[0].mxu0 %v1580
        %v1616 = vpop.f32.mrb[0].mxu0
        %v1617 = vadd.f32 0.0, %v1616
        %v1618 = vpop.f32.mrb[0].mxu0
        %v1619 = vpop.f32.mrb[0].mxu0
        %v1620 = vpop.f32.mrb[0].mxu0
        %1621 = vdwg.mxu0
        %v1623 = vsel %vm999, %v1560, 0
        %v1626 = vand.u32 %v1561, %v1015
        %1628 = vmatprep.subr.bf16.mxu0 0
        %1629 = vmatpush1.bf16.msra.mxu0 %v1626
        %1630 = vmatprep.subr.bf16.mxu0 0
        %1631 = vmatpush1.bf16.msra.mxu0 0
        %1632 = vmatprep.subr.bf16.mxu0 0
        %1633 = vmatpush1.bf16.msra.mxu0 0
        %1634 = vmatprep.subr.bf16.mxu0 0
        %1635 = vmatpush1.bf16.msra.mxu0 0
        %1636 = vmatprep.subr.bf16.mxu0 0
        %1637 = vmatpush1.bf16.msra.mxu0 0
        %1638 = vmatprep.subr.bf16.mxu0 0
        %1639 = vmatpush1.bf16.msra.mxu0 0
        %1640 = vmatprep.subr.bf16.mxu0 0
        %1641 = vmatpush1.bf16.msra.mxu0 0
        %1642 = vmatprep.subr.bf16.mxu0 0
        %1643 = vmatpush1.bf16.msra.mxu0 0
        %1644 = vmatprep.subr.bf16.mxu0 0
        %1645 = vmatpush1.bf16.msra.mxu0 0
        %1646 = vmatprep.subr.bf16.mxu0 0
        %1647 = vmatpush1.bf16.msra.mxu0 0
        %1648 = vmatprep.subr.bf16.mxu0 0
        %1649 = vmatpush1.bf16.msra.mxu0 0
        %1650 = vmatprep.subr.bf16.mxu0 0
        %1651 = vmatpush1.bf16.msra.mxu0 0
        %1652 = vmatprep.subr.bf16.mxu0 0
        %1653 = vmatpush1.bf16.msra.mxu0 0
        %1654 = vmatprep.subr.bf16.mxu0 0
        %1655 = vmatpush1.bf16.msra.mxu0 0
        %1656 = vmatprep.subr.bf16.mxu0 0
        %1657 = vmatpush1.bf16.msra.mxu0 0
        %1658 = vmatprep.subr.bf16.mxu0 0
        %1659 = vmatpush1.bf16.msra.mxu0 0
        %1660 = vmatprep.mubr.bf16.mxu0 0
        %1661 = vmatmul.mubr.bf16.gmra.mrb[0].mxu0 %v1623
        %v1662 = vpop.f32.mrb[0].mxu0
        %v1663 = vadd.f32 %v1617, %v1662
        %v1664 = vpop.f32.mrb[0].mxu0
        %v1665 = vpop.f32.mrb[0].mxu0
        %v1666 = vpop.f32.mrb[0].mxu0
        %1667 = vdwg.mxu0
        %v1668 = vld [vmem:[%s16] sm:$0x1]
        %v1670 = vlaneseq
        %v1671 = vshrl.u32 %v1670, 7
        %v1672 = vsub.s32 0, %v1671
        %v1673 = vrot.slane %v1668, %v1672
        %v1675 = vadd.f32 %v1663, %v1673
        %v1676 = vmax.f32 %v1675, 0.0
        %v1677 = vpack.c.bf16 %v1676, %v1676
        %v1678 = vld [vmem:[%s17] sm:$0xf]
        %v1679 = vld [vmem:[%s17 + $0x4] sm:$0xf]
        %v1680 = vld [vmem:[%s17 + $0x8] sm:$0xf]
        %v1681 = vld [vmem:[%s17 + $0xc] sm:$0xf]
        %v1682 = vld [vmem:[%s18] sm:$0x1]
        %v1684 = vlaneseq
        %v1685 = vshrl.u32 %v1684, 7
        %v1686 = vsub.s32 0, %v1685
        %v1687 = vrot.slane %v1682, %v1686
        %v1693 = vunpack.c.l.b16 %v1678
        %v1694 = vunpack.c.l.b16 %v1679
        %v1695 = vunpack.c.l.b16 %v1680
        %v1696 = vunpack.c.l.b16 %v1681
        %v1697 = vpack.c.b16 %v1694, %v1693
        %v1698 = vpack.c.b16 %v1696, %v1695
        %v1702 = vsel %vm921, %v1677, 0
        %1704 = vmatprep.subr.bf16.mxu0 0
        %1705 = vmatpush1.bf16.msra.mxu0 %v1697
        %1706 = vmatprep.subr.bf16.mxu0 0
        %1707 = vmatpush1.bf16.msra.mxu0 %v1698
        %1708 = vmatprep.subr.bf16.mxu0 0
        %1709 = vmatpush1.bf16.msra.mxu0 0
        %1710 = vmatprep.subr.bf16.mxu0 0
        %1711 = vmatpush1.bf16.msra.mxu0 0
        %1712 = vmatprep.subr.bf16.mxu0 0
        %1713 = vmatpush1.bf16.msra.mxu0 0
        %1714 = vmatprep.subr.bf16.mxu0 0
        %1715 = vmatpush1.bf16.msra.mxu0 0
        %1716 = vmatprep.subr.bf16.mxu0 0
        %1717 = vmatpush1.bf16.msra.mxu0 0
        %1718 = vmatprep.subr.bf16.mxu0 0
        %1719 = vmatpush1.bf16.msra.mxu0 0
        %1720 = vmatprep.subr.bf16.mxu0 0
        %1721 = vmatpush1.bf16.msra.mxu0 0
        %1722 = vmatprep.subr.bf16.mxu0 0
        %1723 = vmatpush1.bf16.msra.mxu0 0
        %1724 = vmatprep.subr.bf16.mxu0 0
        %1725 = vmatpush1.bf16.msra.mxu0 0
        %1726 = vmatprep.subr.bf16.mxu0 0
        %1727 = vmatpush1.bf16.msra.mxu0 0
        %1728 = vmatprep.subr.bf16.mxu0 0
        %1729 = vmatpush1.bf16.msra.mxu0 0
        %1730 = vmatprep.subr.bf16.mxu0 0
        %1731 = vmatpush1.bf16.msra.mxu0 0
        %1732 = vmatprep.subr.bf16.mxu0 0
        %1733 = vmatpush1.bf16.msra.mxu0 0
        %1734 = vmatprep.subr.bf16.mxu0 0
        %1735 = vmatpush1.bf16.msra.mxu0 0
        %1736 = vmatprep.mubr.bf16.mxu0 0
        %1737 = vmatmul.mubr.bf16.gmra.mrb[0].mxu0 %v1702
        %v1738 = vpop.f32.mrb[0].mxu0
        %v1739 = vadd.f32 %v1687, %v1738
        %v1740 = vpop.f32.mrb[0].mxu0
        %v1741 = vpop.f32.mrb[0].mxu0
        %v1742 = vpop.f32.mrb[0].mxu0
        %1743 = vdwg.mxu0
        %v1744 = vmax.f32 %v1739, 0.0
        %v1745 = vpack.c.bf16 %v1744, %v1744
        %v1746 = vld [vmem:[%s19] sm:$0xf]
        %v1747 = vld [vmem:[%s19 + $0x4] sm:$0xf]
        %v1748 = vld [vmem:[%s19 + $0x8] sm:$0xf]
        %v1749 = vld [vmem:[%s19 + $0xc] sm:$0xf]
        %v1750 = vld [vmem:[%s19 + $0x10] sm:$0xf]
        %v1751 = vld [vmem:[%s19 + $0x14] sm:$0xf]
        %v1752 = vld [vmem:[%s19 + $0x18] sm:$0xf]
        %v1753 = vld [vmem:[%s19 + $0x1c] sm:$0xf]
        %v1754 = vld [vmem:[%s20] sm:$0x1]
        %v1756 = vlaneseq
        %v1757 = vshrl.u32 %v1756, 7
        %v1758 = vsub.s32 0, %v1757
        %v1759 = vrot.slane %v1754, %v1758
        %v1769 = vunpack.c.l.b16 %v1746
        %v1770 = vunpack.c.l.b16 %v1747
        %v1771 = vunpack.c.l.b16 %v1748
        %v1772 = vunpack.c.l.b16 %v1749
        %v1773 = vunpack.c.l.b16 %v1750
        %v1774 = vunpack.c.l.b16 %v1751
        %v1775 = vunpack.c.l.b16 %v1752
        %v1776 = vunpack.c.l.b16 %v1753
        %v1777 = vpack.c.b16 %v1770, %v1769
        %v1778 = vpack.c.b16 %v1772, %v1771
        %v1779 = vpack.c.b16 %v1774, %v1773
        %v1780 = vpack.c.b16 %v1776, %v1775
        %v1786 = vsel %vm1262, %v1745, 0
        %1788 = vmatprep.subr.bf16.mxu0 0
        %1789 = vmatpush1.bf16.msra.mxu0 %v1777
        %1790 = vmatprep.subr.bf16.mxu0 0
        %1791 = vmatpush1.bf16.msra.mxu0 %v1778
        %1792 = vmatprep.subr.bf16.mxu0 0
        %1793 = vmatpush1.bf16.msra.mxu0 %v1779
        %1794 = vmatprep.subr.bf16.mxu0 0
        %1795 = vmatpush1.bf16.msra.mxu0 %v1780
        %1796 = vmatprep.subr.bf16.mxu0 0
        %1797 = vmatpush1.bf16.msra.mxu0 0
        %1798 = vmatprep.subr.bf16.mxu0 0
        %1799 = vmatpush1.bf16.msra.mxu0 0
        %1800 = vmatprep.subr.bf16.mxu0 0
        %1801 = vmatpush1.bf16.msra.mxu0 0
        %1802 = vmatprep.subr.bf16.mxu0 0
        %1803 = vmatpush1.bf16.msra.mxu0 0
        %1804 = vmatprep.subr.bf16.mxu0 0
        %1805 = vmatpush1.bf16.msra.mxu0 0
        %1806 = vmatprep.subr.bf16.mxu0 0
        %1807 = vmatpush1.bf16.msra.mxu0 0
        %1808 = vmatprep.subr.bf16.mxu0 0
        %1809 = vmatpush1.bf16.msra.mxu0 0
        %1810 = vmatprep.subr.bf16.mxu0 0
        %1811 = vmatpush1.bf16.msra.mxu0 0
        %1812 = vmatprep.subr.bf16.mxu0 0
        %1813 = vmatpush1.bf16.msra.mxu0 0
        %1814 = vmatprep.subr.bf16.mxu0 0
        %1815 = vmatpush1.bf16.msra.mxu0 0
        %1816 = vmatprep.subr.bf16.mxu0 0
        %1817 = vmatpush1.bf16.msra.mxu0 0
        %1818 = vmatprep.subr.bf16.mxu0 0
        %1819 = vmatpush1.bf16.msra.mxu0 0
        %1820 = vmatprep.mubr.bf16.mxu0 0
        %1821 = vmatmul.mubr.bf16.gmra.mrb[0].mxu0 %v1786
        %v1822 = vpop.f32.mrb[0].mxu0
        %v1823 = vadd.f32 %v1759, %v1822
        %v1824 = vpop.f32.mrb[0].mxu0
        %v1825 = vpop.f32.mrb[0].mxu0
        %v1826 = vpop.f32.mrb[0].mxu0
        %1827 = vdwg.mxu0
        %v1828 = vmax.f32 %v1823, 0.0
        %v1829 = vsel %vm921, %v1828, -inf
        %v1830 = vrot.slane %v1829, 4
        %v1831 = vmax.f32 %v1829, %v1830
        %v1832 = vrot.slane %v1831, 2
        %v1833 = vmax.f32 %v1831, %v1832
        %v1834 = vrot.slane %v1833, 1
        %v1835 = vmax.f32 %v1833, %v1834
        %v1836 = vpack.c.bf16 %v1835, %v1835
        %v1837 = vld [vmem:[%s21] sm:$0xf]
        %v1838 = vld [vmem:[%s21 + $0x4] sm:$0xf]
        %v1839 = vld [vmem:[%s21 + $0x8] sm:$0xf]
        %v1840 = vld [vmem:[%s21 + $0xc] sm:$0xf]
        %v1841 = vld [vmem:[%s22] sm:$0x1]
        %v1846 = vunpack.c.l.b16 %v1837
        %v1847 = vunpack.c.l.b16 %v1838
        %v1848 = vunpack.c.l.b16 %v1839
        %v1849 = vunpack.c.l.b16 %v1840
        %v1850 = vpack.c.b16 %v1847, %v1846
        %v1851 = vpack.c.b16 %v1849, %v1848
        %v1855 = vsel %vm921, %v1836, 0
        %1857 = vmatprep.subr.bf16.mxu0 0
        %1858 = vmatpush1.bf16.msra.mxu0 %v1850
        %1859 = vmatprep.subr.bf16.mxu0 0
        %1860 = vmatpush1.bf16.msra.mxu0 %v1851
        %1861 = vmatprep.subr.bf16.mxu0 0
        %1862 = vmatpush1.bf16.msra.mxu0 0
        %1863 = vmatprep.subr.bf16.mxu0 0
        %1864 = vmatpush1.bf16.msra.mxu0 0
        %1865 = vmatprep.subr.bf16.mxu0 0
        %1866 = vmatpush1.bf16.msra.mxu0 0
        %1867 = vmatprep.subr.bf16.mxu0 0
        %1868 = vmatpush1.bf16.msra.mxu0 0
        %1869 = vmatprep.subr.bf16.mxu0 0
        %1870 = vmatpush1.bf16.msra.mxu0 0
        %1871 = vmatprep.subr.bf16.mxu0 0
        %1872 = vmatpush1.bf16.msra.mxu0 0
        %1873 = vmatprep.subr.bf16.mxu0 0
        %1874 = vmatpush1.bf16.msra.mxu0 0
        %1875 = vmatprep.subr.bf16.mxu0 0
        %1876 = vmatpush1.bf16.msra.mxu0 0
        %1877 = vmatprep.subr.bf16.mxu0 0
        %1878 = vmatpush1.bf16.msra.mxu0 0
        %1879 = vmatprep.subr.bf16.mxu0 0
        %1880 = vmatpush1.bf16.msra.mxu0 0
        %1881 = vmatprep.subr.bf16.mxu0 0
        %1882 = vmatpush1.bf16.msra.mxu0 0
        %1883 = vmatprep.subr.bf16.mxu0 0
        %1884 = vmatpush1.bf16.msra.mxu0 0
        %1885 = vmatprep.subr.bf16.mxu0 0
        %1886 = vmatpush1.bf16.msra.mxu0 0
        %1887 = vmatprep.subr.bf16.mxu0 0
        %1888 = vmatpush1.bf16.msra.mxu0 0
        %1889 = vmatprep.mubr.bf16.mxu0 0
        %1890 = vmatmul.mubr.bf16.gmra.mrb[0].mxu0 %v1855
        %v1891 = vpop.f32.mrb[0].mxu0
        %v1892 = vadd.f32 %v1841, %v1891
        %v1893 = vpop.f32.mrb[0].mxu0
        %v1894 = vpop.f32.mrb[0].mxu0
        %v1895 = vpop.f32.mrb[0].mxu0
        %1896 = vdwg.mxu0
        %v1897 = vmax.f32 %v1892, 0.0
        %v1898 = vpack.c.bf16 %v1897, %v1897
        %v1899 = vld [vmem:[%s23] sm:$0xf]
        %v1900 = vld [vmem:[%s23 + $0x4] sm:$0xf]
        %v1901 = vld [vmem:[%s24] sm:$0x1]
        %v1904 = vunpack.c.l.b16 %v1899
        %v1905 = vunpack.c.l.b16 %v1900
        %v1906 = vpack.c.b16 %v1905, %v1904
        %vm1908 = vcmask 130048
        %v1910 = vsel %vm1908, %v1898, 0
        %1912 = vmatprep.subr.bf16.mxu0 0
        %1913 = vmatpush1.bf16.msra.mxu0 %v1906
        %1914 = vmatprep.subr.bf16.mxu0 0
        %1915 = vmatpush1.bf16.msra.mxu0 0
        %1916 = vmatprep.subr.bf16.mxu0 0
        %1917 = vmatpush1.bf16.msra.mxu0 0
        %1918 = vmatprep.subr.bf16.mxu0 0
        %1919 = vmatpush1.bf16.msra.mxu0 0
        %1920 = vmatprep.subr.bf16.mxu0 0
        %1921 = vmatpush1.bf16.msra.mxu0 0
        %1922 = vmatprep.subr.bf16.mxu0 0
        %1923 = vmatpush1.bf16.msra.mxu0 0
        %1924 = vmatprep.subr.bf16.mxu0 0
        %1925 = vmatpush1.bf16.msra.mxu0 0
        %1926 = vmatprep.subr.bf16.mxu0 0
        %1927 = vmatpush1.bf16.msra.mxu0 0
        %1928 = vmatprep.subr.bf16.mxu0 0
        %1929 = vmatpush1.bf16.msra.mxu0 0
        %1930 = vmatprep.subr.bf16.mxu0 0
        %1931 = vmatpush1.bf16.msra.mxu0 0
        %1932 = vmatprep.subr.bf16.mxu0 0
        %1933 = vmatpush1.bf16.msra.mxu0 0
        %1934 = vmatprep.subr.bf16.mxu0 0
        %1935 = vmatpush1.bf16.msra.mxu0 0
        %1936 = vmatprep.subr.bf16.mxu0 0
        %1937 = vmatpush1.bf16.msra.mxu0 0
        %1938 = vmatprep.subr.bf16.mxu0 0
        %1939 = vmatpush1.bf16.msra.mxu0 0
        %1940 = vmatprep.subr.bf16.mxu0 0
        %1941 = vmatpush1.bf16.msra.mxu0 0
        %1942 = vmatprep.subr.bf16.mxu0 0
        %1943 = vmatpush1.bf16.msra.mxu0 0
        %1944 = vmatprep.mubr.bf16.mxu0 0
        %1945 = vmatmul.mubr.bf16.gmra.mrb[0].mxu0 %v1910
        %v1946 = vpop.f32.mrb[0].mxu0
        %v1947 = vadd.f32 %v1901, %v1946
        %v1948 = vpop.f32.mrb[0].mxu0
        %v1949 = vpop.f32.mrb[0].mxu0
        %v1950 = vpop.f32.mrb[0].mxu0
        %1951 = vdwg.mxu0
        %v1952 = vmax.f32 %v1947, 0.0
        %v1953 = vpack.c.bf16 %v1952, %v1952
        %v1954 = vld [vmem:[%s25] sm:$0xf]
        %v1955 = vld [vmem:[%s26] sm:$0x1]
        %v1957 = vsel %vm1505, %v1953, 0
        %v1960 = vsel %vm1430, %v1954, 0
        %1962 = vmatprep.subr.bf16.mxu0 0
        %1963 = vmatpush1.bf16.msra.mxu0 %v1960
        %1964 = vmatprep.subr.bf16.mxu0 0
        %1965 = vmatpush1.bf16.msra.mxu0 0
        %1966 = vmatprep.subr.bf16.mxu0 0
        %1967 = vmatpush1.bf16.msra.mxu0 0
        %1968 = vmatprep.subr.bf16.mxu0 0
        %1969 = vmatpush1.bf16.msra.mxu0 0
        %1970 = vmatprep.subr.bf16.mxu0 0
        %1971 = vmatpush1.bf16.msra.mxu0 0
        %1972 = vmatprep.subr.bf16.mxu0 0
        %1973 = vmatpush1.bf16.msra.mxu0 0
        %1974 = vmatprep.subr.bf16.mxu0 0
        %1975 = vmatpush1.bf16.msra.mxu0 0
        %1976 = vmatprep.subr.bf16.mxu0 0
        %1977 = vmatpush1.bf16.msra.mxu0 0
        %1978 = vmatprep.subr.bf16.mxu0 0
        %1979 = vmatpush1.bf16.msra.mxu0 0
        %1980 = vmatprep.subr.bf16.mxu0 0
        %1981 = vmatpush1.bf16.msra.mxu0 0
        %1982 = vmatprep.subr.bf16.mxu0 0
        %1983 = vmatpush1.bf16.msra.mxu0 0
        %1984 = vmatprep.subr.bf16.mxu0 0
        %1985 = vmatpush1.bf16.msra.mxu0 0
        %1986 = vmatprep.subr.bf16.mxu0 0
        %1987 = vmatpush1.bf16.msra.mxu0 0
        %1988 = vmatprep.subr.bf16.mxu0 0
        %1989 = vmatpush1.bf16.msra.mxu0 0
        %1990 = vmatprep.subr.bf16.mxu0 0
        %1991 = vmatpush1.bf16.msra.mxu0 0
        %1992 = vmatprep.subr.bf16.mxu0 0
        %1993 = vmatpush1.bf16.msra.mxu0 0
        %1994 = vmatprep.mubr.bf16.mxu0 0
        %1995 = vmatmul.mubr.bf16.gmra.mrb[0].mxu0 %v1957
        %v1996 = vpop.f32.mrb[0].mxu0
        %v1997 = vadd.f32 %v1955, %v1996
        %v1998 = vpop.f32.mrb[0].mxu0
        %v1999 = vpop.f32.mrb[0].mxu0
        %v2000 = vpop.f32.mrb[0].mxu0
        %2001 = vdwg.mxu0
        %vm2002 = vcmask 32768
        %2003 = vst.msk [vmem:[%s856] sm:$0x1] %vm2002, %v1997
        %s2004 = sand.u32 %s636, 1
        %s2005 = scalar_lea.sflag [#allocation3], %s2004
        %s2006 = sand.u32 %s636, 1
        %s2007 = scalar_lea.vmem [#allocation2], %s2006
        // Predicated region
        $region129: #{pointnet_forward.3} parent=127 // pred_check
          %p2008 = pneg %p646
        $region130: #{pointnet_forward.3} parent=127 // pred_check_branch
          %2010 = sbr.rel (%p2008) target = $region132
        $region131: #{pointnet_forward.3} parent=127 // pred_region
          %s2012 = ssub.s32 16, 16
          %2013 = vsyncadd %s2005, %s2012
          %s2014 = smul.addr %s41, 16
          %s2015 = scalar_lea.hbm %s27, %s2014
          %s2017 = sshll.u32 %s2007, 4
          %s2018 = int_to_ptr.vmem [resolvable:$true] %s2017
          %2020 = dma.vmem_to_hbm [thread:$0]  %s2018, 16, %s2015, %s2005
        $region132: #{pointnet_forward.3} parent=127 // pred_fallthru
          _
      $region128: #{pointnet_forward.3} parent=5 // pred_fallthru
        _
      %p2021 = scmp.le.s32.totalorder 2, %s36
      // Predicated region
      $region133: #{pointnet_forward.3} parent=5 // pred_check
        %p2022 = pneg %p2021
      $region134: #{pointnet_forward.3} parent=5 // pred_check_branch
        %2024 = sbr.rel (%p2022) target = $region136
      $region135: #{pointnet_forward.3} parent=5 // pred_region
        %s2025 = ssub.s32 %s36, 2
        // Predicated region
        $region137: #{pointnet_forward.3} parent=135 // pred_check
          %p2026 = pneg %p652
        $region138: #{pointnet_forward.3} parent=135 // pred_check_branch
          %2028 = sbr.rel (%p2026) target = $region140
        $region139: #{pointnet_forward.3} parent=135 // pred_region
          %s2029 = sand.u32 %s637, 1
          %s2030 = scalar_lea.sflag [#allocation3], %s2029
          %s2031 = sand.u32 %s637, 1
          %s2032 = scalar_lea.vmem [#allocation2], %s2031
          %2033 = dma.done %s2030, 16
        $region140: #{pointnet_forward.3} parent=135 // pred_fallthru
          _
      $region136: #{pointnet_forward.3} parent=5 // pred_fallthru
        _
    $region6: #{pointnet_forward.3} parent=1 // loop_footer
      %s40 = sadd.s32 1, %s36
    $region7: #{pointnet_forward.3} parent=1 // loop_footer_branch
      %35 = sbr.rel target = $region3
    $region8: #{pointnet_forward.3} parent=1 // loop_exit
      _
    %2034 = vsyncpa [#allocation3], 1
    %s2035 = scalar_lea.sflag [#allocation3], 1
    %2036 = vsyncpa %s2035, 1

</llo_original>
